<compile_context>
chip_gen: v7x
topology: tpu7x:2x2x1
jax: 0.10.0
libtpu: 0.0.40
codegen_flags: <defaults>
</compile_context>

<pallas_src>
import jax
import jax.numpy as jnp
from jax.experimental import pallas as pl
from jax.experimental.pallas import tpu as pltpu

# ----------------------- small BERT config -----------------------
VOCAB = 64
HIDDEN = 32
N_HEADS = 4
HEAD_DIM = HIDDEN // N_HEADS
N_LAYERS = 2
INTERMEDIATE = 64
MAX_POS = 16
TYPE_VOCAB = 2
NUM_LABELS = 17            # len(ids_to_labels)
CLS_PAD = 128              # lane-padded classifier width (>= NUM_LABELS)
QKV_PAD = 128              # lane-padded fused QKV width (>= 3*HIDDEN)
LN_EPS = 1e-12


def _gelu_tanh(x):
    # TODO(synk): HF BERT uses exact (erf) GELU; tanh approximation used in-kernel.
    return 0.5 * x * (1.0 + jnp.tanh(0.7978845608028654 * (x + 0.044715 * x * x * x)))


PARAM_ORDER = ("word_emb", "pos_emb", "type_emb",
               "emb_ln_g", "emb_ln_b",
               "wqkv", "bqkv", "wo", "bo", "ln1_g", "ln1_b",
               "wi", "bi", "wo2", "bo2", "ln2_g", "ln2_b",
               "cls_w", "cls_b")


# ----------------------- fused encoder kernel -----------------------
def make_encoder_kernel(B, S):
    BS = B * S
    scale = 1.0 / (HEAD_DIM ** 0.5)

    def kernel(ids_ref, amask_ref,
               word_emb, pos_emb, type_emb,
               emb_ln_g, emb_ln_b,
               wqkv, bqkv, wo, bo, ln1_g, ln1_b,
               wi, bi, wo2, bo2, ln2_g, ln2_b,
               cls_w, cls_b,
               o_ref):

        def ln(v, g, b):                     # LayerNorm (residual already added by caller)
            mean = jnp.mean(v, axis=-1, keepdims=True)
            c = v - mean
            var = jnp.mean(c * c, axis=-1, keepdims=True)
            return c * jax.lax.rsqrt(var + LN_EPS) * g + b

        def mm(a, w, bias):                  # bf16 MXU inputs, f32 accumulation, f32 bias add
            return jnp.dot(a.astype(jnp.bfloat16), w,
                           preferred_element_type=jnp.float32) + bias

        # ---- embeddings, fused in-kernel: gather = one-hot matmul (exact, f32) ----
        ids = ids_ref[...]                                            # (BS, 1) int32
        vocab_iota = jax.lax.broadcasted_iota(jnp.int32, (BS, VOCAB), 1)
        onehot = (vocab_iota == ids).astype(jnp.float32)              # (BS, VOCAB)
        we = jnp.dot(onehot, word_emb[...],
                     preferred_element_type=jnp.float32)              # (BS, H)
        pte = pos_emb[0:S, :] + type_emb[0:1, :]                      # token_type_ids == 0
        pte_full = jnp.concatenate([pte] * B, axis=0)                 # (BS, H)
        x = ln(we + pte_full, emb_ln_g[...], emb_ln_b[...])           # embedding LayerNorm

        # ---- additive attention-mask bias, broadcast hoisted out of all loops ----
        bias = (1.0 - amask_ref[...].astype(jnp.float32)) * -1e9      # (B, S)
        mask_bcast = [jnp.broadcast_to(bias[b:b + 1, :], (S, S)) for b in range(B)]

        for l in range(N_LAYERS):                                     # static unroll: layers
            h = x
            wqkv_l = wqkv[l]                                          # hoist per-layer weights
            wo_l = wo[l]
            qkv = mm(h, wqkv_l, bqkv[l])                              # (BS, QKV_PAD) flattened rows

            # attention per sequence; Wo folded into the head loop (no lane-axis concat)
            attn_rows = []
            for b in range(B):                                        # static unroll: batch
                r0 = b * S
                att_b = jnp.zeros((S, HIDDEN), jnp.float32)
                for hd in range(N_HEADS):                             # static unroll: heads
                    lo = hd * HEAD_DIM
                    q_h = qkv[r0:r0 + S, lo:lo + HEAD_DIM].astype(jnp.bfloat16)
                    k_h = qkv[r0:r0 + S,
                              HIDDEN + lo:HIDDEN + lo + HEAD_DIM].astype(jnp.bfloat16)
                    v_h = qkv[r0:r0 + S,
                              2 * HIDDEN + lo:2 * HIDDEN + lo + HEAD_DIM].astype(jnp.bfloat16)
                    s = jax.lax.dot_general(q_h, k_h, (((1,), (1,)), ((), ())),
                                            preferred_element_type=jnp.float32) * scale
                    s = s + mask_bcast[b]
                    s = s - jnp.max(s, axis=-1, keepdims=True)
                    p = jnp.exp(s)
                    p = p * pl.reciprocal(jnp.sum(p, axis=-1, keepdims=True), approx=True)
                    ctx_h = jnp.dot(p.astype(jnp.bfloat16), v_h,
                                    preferred_element_type=jnp.float32)       # (S, Dh)
                    # fold Wo: sublane-slice of wo_l rows [lo:lo+Dh], accumulate in f32
                    att_b = att_b + jnp.dot(ctx_h.astype(jnp.bfloat16),
                                            wo_l[lo:lo + HEAD_DIM, :],
                                            preferred_element_type=jnp.float32)
                attn_rows.append(att_b)
            attn = jnp.concatenate(attn_rows, axis=0) + bo[l]         # (BS, H)

            x1 = ln(attn + h, ln1_g[l], ln1_b[l])                     # add & norm
            inter = _gelu_tanh(mm(x1, wi[l], bi[l]))                  # FFN stays in VMEM
            x = ln(mm(inter, wo2[l], bo2[l]) + x1, ln2_g[l], ln2_b[l])  # add & norm

        o_ref[...] = mm(x, cls_w[...], cls_b[...])                    # (BS, CLS_PAD) lane-dense

    return kernel


def encoder_forward(params, input_ids, attention_mask):
    B, S = input_ids.shape
    BS = B * S
    weights = [params[name] for name in PARAM_ORDER]
    kernel = make_encoder_kernel(B, S)

    ids2d = input_ids.reshape(BS, 1).astype(jnp.int32)     # tiny glue reshape
    amask = attention_mask.astype(jnp.int32)               # (B, S)

    def full_spec(arr):                                    # whole array resident in VMEM
        nd = arr.ndim
        return pl.BlockSpec(arr.shape, lambda i, _nd=nd: (0,) * _nd)

    in_specs = [full_spec(ids2d), full_spec(amask)] + [full_spec(w) for w in weights]

    return pl.pallas_call(
        kernel,
        grid=(1,),                                         # single grid step: no per-step overhead
        in_specs=in_specs,
        out_specs=pl.BlockSpec((BS, CLS_PAD), lambda i: (0, 0)),
        out_shape=jax.ShapeDtypeStruct((BS, CLS_PAD), jnp.float32),
        compiler_params=pltpu.CompilerParams(dimension_semantics=("arbitrary",)),
    )(ids2d, amask, *weights)


# ----------------------- parameters -----------------------
def init_params(key):
    def nrm(k, shape):
        return jax.random.normal(k, shape, dtype=jnp.float32) * 0.02

    ks = jax.random.split(key, 8)
    L = N_LAYERS
    wqkv = jnp.pad(nrm(ks[3], (L, HIDDEN, 3 * HIDDEN)),
                   ((0, 0), (0, 0), (0, QKV_PAD - 3 * HIDDEN)))           # lane-pad to 128
    cls_w = jnp.pad(nrm(ks[7], (HIDDEN, NUM_LABELS)),
                    ((0, 0), (0, CLS_PAD - NUM_LABELS)))                  # lane-pad to 128
    return {
        "word_emb": nrm(ks[0], (VOCAB, HIDDEN)),
        "pos_emb": nrm(ks[1], (MAX_POS, HIDDEN)),
        "type_emb": nrm(ks[2], (TYPE_VOCAB, HIDDEN)),
        "emb_ln_g": jnp.ones((1, HIDDEN), jnp.float32),
        "emb_ln_b": jnp.zeros((1, HIDDEN), jnp.float32),
        # per-layer weights stacked on a leading L axis; matmul weights stored in bf16
        "wqkv": wqkv.astype(jnp.bfloat16),
        "bqkv": jnp.zeros((L, 1, QKV_PAD), jnp.float32),
        "wo": nrm(ks[4], (L, HIDDEN, HIDDEN)).astype(jnp.bfloat16),
        "bo": jnp.zeros((L, 1, HIDDEN), jnp.float32),
        "ln1_g": jnp.ones((L, 1, HIDDEN), jnp.float32),
        "ln1_b": jnp.zeros((L, 1, HIDDEN), jnp.float32),
        "wi": nrm(ks[5], (L, HIDDEN, INTERMEDIATE)).astype(jnp.bfloat16),
        "bi": jnp.zeros((L, 1, INTERMEDIATE), jnp.float32),
        "wo2": nrm(ks[6], (L, INTERMEDIATE, HIDDEN)).astype(jnp.bfloat16),
        "bo2": jnp.zeros((L, 1, HIDDEN), jnp.float32),
        "ln2_g": jnp.ones((L, 1, HIDDEN), jnp.float32),
        "ln2_b": jnp.zeros((L, 1, HIDDEN), jnp.float32),
        "cls_w": cls_w.astype(jnp.bfloat16),                 # (H, CLS_PAD), zero-padded
        "cls_b": jnp.zeros((1, CLS_PAD), jnp.float32),
    }


# ----------------------- forward (mirrors BertModel.forward) -----------------------
def bert_model_forward(params, input_ids, attention_mask, labels=None):
    B, S = input_ids.shape
    logits_padded = encoder_forward(params, input_ids, attention_mask)    # (B*S, CLS_PAD)
    logits = logits_padded.reshape(B, S, CLS_PAD)[..., :NUM_LABELS]       # (B, S, 17)

    if labels is not None:
        # HF CrossEntropyLoss with ignore_index=-100, computed in plain JAX (glue).
        flat_logits = logits.reshape(-1, NUM_LABELS)
        flat_labels = labels.reshape(-1)
        logz = jax.nn.logsumexp(flat_logits, axis=-1)
        valid = flat_labels != -100
        safe = jnp.where(valid, flat_labels, 0)
        nll = logz - jnp.take_along_axis(flat_logits, safe[:, None], axis=-1)[:, 0]
        loss = jnp.sum(jnp.where(valid, nll, 0.0)) / jnp.maximum(jnp.sum(valid), 1)
        return (loss, logits)
    return (logits,)


# ----------------------- demo -----------------------
if __name__ == "__main__":
    key = jax.random.PRNGKey(0)
    pkey, ikey = jax.random.split(key)
    params = init_params(pkey)

    B, S = 2, 8
    input_ids = jax.random.randint(ikey, (B, S), 0, VOCAB, dtype=jnp.int32)
    attention_mask = jnp.array([[1] * 8, [1] * 6 + [0] * 2], dtype=jnp.int32)

    outputs = bert_model_forward(params, input_ids, attention_mask)   # labels=None -> (logits,)
    logits = jax.block_until_ready(outputs[0])
    assert logits.shape == (B, S, NUM_LABELS)
    assert logits.dtype == jnp.float32
    print("KERNEL_OK")
</pallas_src>

<mosaic_0001>
module attributes {stable_mosaic.version = 11 : i64} {
  func.func @kernel(%arg0: i32, %arg1: memref<16x1xi32, #tpu.memory_space<vmem>>, %arg2: memref<2x8xi32, #tpu.memory_space<vmem>>, %arg3: memref<64x32xf32, #tpu.memory_space<vmem>>, %arg4: memref<16x32xf32, #tpu.memory_space<vmem>>, %arg5: memref<2x32xf32, #tpu.memory_space<vmem>>, %arg6: memref<1x32xf32, #tpu.memory_space<vmem>>, %arg7: memref<1x32xf32, #tpu.memory_space<vmem>>, %arg8: memref<2x32x128xbf16, #tpu.memory_space<vmem>>, %arg9: memref<2x1x128xf32, #tpu.memory_space<vmem>>, %arg10: memref<2x32x32xbf16, #tpu.memory_space<vmem>>, %arg11: memref<2x1x32xf32, #tpu.memory_space<vmem>>, %arg12: memref<2x1x32xf32, #tpu.memory_space<vmem>>, %arg13: memref<2x1x32xf32, #tpu.memory_space<vmem>>, %arg14: memref<2x32x64xbf16, #tpu.memory_space<vmem>>, %arg15: memref<2x1x64xf32, #tpu.memory_space<vmem>>, %arg16: memref<2x64x32xbf16, #tpu.memory_space<vmem>>, %arg17: memref<2x1x32xf32, #tpu.memory_space<vmem>>, %arg18: memref<2x1x32xf32, #tpu.memory_space<vmem>>, %arg19: memref<2x1x32xf32, #tpu.memory_space<vmem>>, %arg20: memref<32x128xbf16, #tpu.memory_space<vmem>>, %arg21: memref<1x128xf32, #tpu.memory_space<vmem>>, %arg22: memref<16x128xf32, #tpu.memory_space<vmem>>) attributes {dimension_semantics = [#tpu.dimension_semantics<arbitrary>], iteration_bounds = array<i64: 1>, scalar_prefetch = 0 : i64, scratch_operands = 0 : i64, tpu.core_type = #tpu.core_type<tc>, window_params = [{pipeline_mode = #tpu.pipeline_mode<synchronous>, transform_indices = @transform_0, window_bounds = array<i64: 16, 1>}, {pipeline_mode = #tpu.pipeline_mode<synchronous>, transform_indices = @transform_1, window_bounds = array<i64: 2, 8>}, {pipeline_mode = #tpu.pipeline_mode<synchronous>, transform_indices = @transform_2, window_bounds = array<i64: 64, 32>}, {pipeline_mode = #tpu.pipeline_mode<synchronous>, transform_indices = @transform_3, window_bounds = array<i64: 16, 32>}, {pipeline_mode = #tpu.pipeline_mode<synchronous>, transform_indices = @transform_4, window_bounds = array<i64: 2, 32>}, {pipeline_mode = #tpu.pipeline_mode<synchronous>, transform_indices = @transform_5, window_bounds = array<i64: 1, 32>}, {pipeline_mode = #tpu.pipeline_mode<synchronous>, transform_indices = @transform_6, window_bounds = array<i64: 1, 32>}, {pipeline_mode = #tpu.pipeline_mode<synchronous>, transform_indices = @transform_7, window_bounds = array<i64: 2, 32, 128>}, {pipeline_mode = #tpu.pipeline_mode<synchronous>, transform_indices = @transform_8, window_bounds = array<i64: 2, 1, 128>}, {pipeline_mode = #tpu.pipeline_mode<synchronous>, transform_indices = @transform_9, window_bounds = array<i64: 2, 32, 32>}, {pipeline_mode = #tpu.pipeline_mode<synchronous>, transform_indices = @transform_10, window_bounds = array<i64: 2, 1, 32>}, {pipeline_mode = #tpu.pipeline_mode<synchronous>, transform_indices = @transform_11, window_bounds = array<i64: 2, 1, 32>}, {pipeline_mode = #tpu.pipeline_mode<synchronous>, transform_indices = @transform_12, window_bounds = array<i64: 2, 1, 32>}, {pipeline_mode = #tpu.pipeline_mode<synchronous>, transform_indices = @transform_13, window_bounds = array<i64: 2, 32, 64>}, {pipeline_mode = #tpu.pipeline_mode<synchronous>, transform_indices = @transform_14, window_bounds = array<i64: 2, 1, 64>}, {pipeline_mode = #tpu.pipeline_mode<synchronous>, transform_indices = @transform_15, window_bounds = array<i64: 2, 64, 32>}, {pipeline_mode = #tpu.pipeline_mode<synchronous>, transform_indices = @transform_16, window_bounds = array<i64: 2, 1, 32>}, {pipeline_mode = #tpu.pipeline_mode<synchronous>, transform_indices = @transform_17, window_bounds = array<i64: 2, 1, 32>}, {pipeline_mode = #tpu.pipeline_mode<synchronous>, transform_indices = @transform_18, window_bounds = array<i64: 2, 1, 32>}, {pipeline_mode = #tpu.pipeline_mode<synchronous>, transform_indices = @transform_19, window_bounds = array<i64: 32, 128>}, {pipeline_mode = #tpu.pipeline_mode<synchronous>, transform_indices = @transform_20, window_bounds = array<i64: 1, 128>}, {pipeline_mode = #tpu.pipeline_mode<synchronous>, transform_indices = @transform_21, window_bounds = array<i64: 16, 128>}]} {
    %c0 = arith.constant 0 : index
    %c0_0 = arith.constant 0 : index
    %0 = vector.load %arg1[%c0, %c0_0] : memref<16x1xi32, #tpu.memory_space<vmem>>, vector<16x1xi32>
    %1 = tpu.iota {dimensions = array<i32: 1>} : vector<16x64xi32>
    %2 = vector.broadcast %0 : vector<16x1xi32> to vector<16x64xi32>
    %3 = arith.cmpi eq, %1, %2 : vector<16x64xi32>
    %4 = arith.extui %3 : vector<16x64xi1> to vector<16x64xi32>
    %5 = arith.sitofp %4 : vector<16x64xi32> to vector<16x64xf32>
    %c0_1 = arith.constant 0 : index
    %c0_2 = arith.constant 0 : index
    %6 = vector.load %arg3[%c0_1, %c0_2] : memref<64x32xf32, #tpu.memory_space<vmem>>, vector<64x32xf32>
    %cst = arith.constant dense<0.000000e+00> : vector<16x32xf32>
    %7 = tpu.matmul %5, %6, %cst {dimension_numbers = #tpu.dot_dimension_numbers<[1], [0], [0], [1], [0, 0, 1, 1], [], []>} : vector<16x64xf32>, vector<64x32xf32>, vector<16x32xf32> -> vector<16x32xf32>
    %c0_3 = arith.constant 0 : index
    %c0_4 = arith.constant 0 : index
    %8 = vector.load %arg4[%c0_3, %c0_4] : memref<16x32xf32, #tpu.memory_space<vmem>>, vector<8x32xf32>
    %c0_5 = arith.constant 0 : index
    %c0_6 = arith.constant 0 : index
    %9 = vector.load %arg5[%c0_5, %c0_6] : memref<2x32xf32, #tpu.memory_space<vmem>>, vector<1x32xf32>
    %10 = vector.broadcast %9 : vector<1x32xf32> to vector<8x32xf32>
    %11 = arith.addf %8, %10 : vector<8x32xf32>
    %12 = tpu.concatenate %11, %11 in 0 : vector<8x32xf32>, vector<8x32xf32> -> vector<16x32xf32>
    %13 = arith.addf %7, %12 : vector<16x32xf32>
    %c0_7 = arith.constant 0 : index
    %c0_8 = arith.constant 0 : index
    %14 = vector.load %arg6[%c0_7, %c0_8] : memref<1x32xf32, #tpu.memory_space<vmem>>, vector<1x32xf32>
    %c0_9 = arith.constant 0 : index
    %c0_10 = arith.constant 0 : index
    %15 = vector.load %arg7[%c0_9, %c0_10] : memref<1x32xf32, #tpu.memory_space<vmem>>, vector<1x32xf32>
    %cst_11 = arith.constant dense<0.000000e+00> : vector<16xf32>
    %16 = vector.multi_reduction <add>, %13, %cst_11 [1] : vector<16x32xf32> to vector<16xf32>
    %17 = vector.shape_cast %16 : vector<16xf32> to vector<16x1xf32>
    %cst_12 = arith.constant 3.200000e+01 : f32
    %18 = vector.broadcast %cst_12 : f32 to vector<16x1xf32>
    %19 = arith.divf %17, %18 : vector<16x1xf32>
    %20 = vector.broadcast %19 : vector<16x1xf32> to vector<16x32xf32>
    %21 = arith.subf %13, %20 : vector<16x32xf32>
    %22 = arith.mulf %21, %21 : vector<16x32xf32>
    %cst_13 = arith.constant dense<0.000000e+00> : vector<16xf32>
    %23 = vector.multi_reduction <add>, %22, %cst_13 [1] : vector<16x32xf32> to vector<16xf32>
    %24 = vector.shape_cast %23 : vector<16xf32> to vector<16x1xf32>
    %cst_14 = arith.constant 3.200000e+01 : f32
    %25 = vector.broadcast %cst_14 : f32 to vector<16x1xf32>
    %26 = arith.divf %24, %25 : vector<16x1xf32>
    %cst_15 = arith.constant 9.99999996E-13 : f32
    %27 = vector.broadcast %cst_15 : f32 to vector<16x1xf32>
    %28 = arith.addf %26, %27 : vector<16x1xf32>
    %29 = math.rsqrt %28 : vector<16x1xf32>
    %30 = vector.broadcast %29 : vector<16x1xf32> to vector<16x32xf32>
    %31 = arith.mulf %21, %30 : vector<16x32xf32>
    %32 = vector.broadcast %14 : vector<1x32xf32> to vector<16x32xf32>
    %33 = arith.mulf %31, %32 : vector<16x32xf32>
    %34 = vector.broadcast %15 : vector<1x32xf32> to vector<16x32xf32>
    %35 = arith.addf %33, %34 : vector<16x32xf32>
    %c0_16 = arith.constant 0 : index
    %c0_17 = arith.constant 0 : index
    %36 = vector.load %arg2[%c0_16, %c0_17] : memref<2x8xi32, #tpu.memory_space<vmem>>, vector<2x8xi32>
    %37 = arith.sitofp %36 : vector<2x8xi32> to vector<2x8xf32>
    %cst_18 = arith.constant 1.000000e+00 : f32
    %38 = vector.broadcast %cst_18 : f32 to vector<2x8xf32>
    %39 = arith.subf %38, %37 : vector<2x8xf32>
    %cst_19 = arith.constant -1.000000e+09 : f32
    %40 = vector.broadcast %cst_19 : f32 to vector<2x8xf32>
    %41 = arith.mulf %39, %40 : vector<2x8xf32>
    %42 = vector.extract_strided_slice %41 {offsets = [0, 0], sizes = [1, 8], strides = [1, 1]} : vector<2x8xf32> to vector<1x8xf32>
    %43 = vector.shape_cast %42 : vector<1x8xf32> to vector<1x8xf32>
    %44 = vector.broadcast %43 : vector<1x8xf32> to vector<8x8xf32>
    %45 = vector.extract_strided_slice %41 {offsets = [1, 0], sizes = [1, 8], strides = [1, 1]} : vector<2x8xf32> to vector<1x8xf32>
    %46 = vector.shape_cast %45 : vector<1x8xf32> to vector<1x8xf32>
    %47 = vector.broadcast %46 : vector<1x8xf32> to vector<8x8xf32>
    %c0_20 = arith.constant 0 : index
    %c0_21 = arith.constant 0 : index
    %c0_22 = arith.constant 0 : index
    %48 = vector.load %arg8[%c0_20, %c0_21, %c0_22] : memref<2x32x128xbf16, #tpu.memory_space<vmem>>, vector<1x32x128xbf16>
    %49 = vector.shape_cast %48 : vector<1x32x128xbf16> to vector<32x128xbf16>
    %c0_23 = arith.constant 0 : index
    %c0_24 = arith.constant 0 : index
    %c0_25 = arith.constant 0 : index
    %50 = vector.load %arg10[%c0_23, %c0_24, %c0_25] : memref<2x32x32xbf16, #tpu.memory_space<vmem>>, vector<1x32x32xbf16>
    %51 = vector.shape_cast %50 : vector<1x32x32xbf16> to vector<32x32xbf16>
    %c0_26 = arith.constant 0 : index
    %c0_27 = arith.constant 0 : index
    %c0_28 = arith.constant 0 : index
    %52 = vector.load %arg9[%c0_26, %c0_27, %c0_28] : memref<2x1x128xf32, #tpu.memory_space<vmem>>, vector<1x1x128xf32>
    %53 = vector.shape_cast %52 : vector<1x1x128xf32> to vector<1x128xf32>
    %54 = arith.truncf %35 : vector<16x32xf32> to vector<16x32xbf16>
    %cst_29 = arith.constant dense<0.000000e+00> : vector<16x128xf32>
    %55 = tpu.matmul %54, %49, %cst_29 {dimension_numbers = #tpu.dot_dimension_numbers<[1], [0], [0], [1], [0, 0, 1, 1], [], []>} : vector<16x32xbf16>, vector<32x128xbf16>, vector<16x128xf32> -> vector<16x128xf32>
    %56 = vector.broadcast %53 : vector<1x128xf32> to vector<16x128xf32>
    %57 = arith.addf %55, %56 : vector<16x128xf32>
    %cst_30 = arith.constant 0.000000e+00 : f32
    %58 = vector.broadcast %cst_30 : f32 to vector<8x32xf32>
    %59 = vector.extract_strided_slice %57 {offsets = [0, 0], sizes = [8, 8], strides = [1, 1]} : vector<16x128xf32> to vector<8x8xf32>
    %60 = arith.truncf %59 : vector<8x8xf32> to vector<8x8xbf16>
    %61 = vector.extract_strided_slice %57 {offsets = [0, 32], sizes = [8, 8], strides = [1, 1]} : vector<16x128xf32> to vector<8x8xf32>
    %62 = arith.truncf %61 : vector<8x8xf32> to vector<8x8xbf16>
    %63 = vector.extract_strided_slice %57 {offsets = [0, 64], sizes = [8, 8], strides = [1, 1]} : vector<16x128xf32> to vector<8x8xf32>
    %64 = arith.truncf %63 : vector<8x8xf32> to vector<8x8xbf16>
    %cst_31 = arith.constant dense<0.000000e+00> : vector<8x8xf32>
    %65 = tpu.matmul %60, %62, %cst_31 {dimension_numbers = #tpu.dot_dimension_numbers<[1], [1], [0], [0], [0, 0, 1, 0], [], []>} : vector<8x8xbf16>, vector<8x8xbf16>, vector<8x8xf32> -> vector<8x8xf32>
    %cst_32 = arith.constant 0.353553385 : f32
    %66 = vector.broadcast %cst_32 : f32 to vector<8x8xf32>
    %67 = arith.mulf %65, %66 : vector<8x8xf32>
    %68 = arith.addf %67, %44 : vector<8x8xf32>
    %cst_33 = arith.constant dense<0xFF800000> : vector<8xf32>
    %69 = vector.multi_reduction <maximumf>, %68, %cst_33 [1] : vector<8x8xf32> to vector<8xf32>
    %70 = vector.shape_cast %69 : vector<8xf32> to vector<8x1xf32>
    %71 = vector.broadcast %70 : vector<8x1xf32> to vector<8x8xf32>
    %72 = arith.subf %68, %71 : vector<8x8xf32>
    %73 = math.exp %72 : vector<8x8xf32>
    %cst_34 = arith.constant dense<0.000000e+00> : vector<8xf32>
    %74 = vector.multi_reduction <add>, %73, %cst_34 [1] : vector<8x8xf32> to vector<8xf32>
    %75 = vector.shape_cast %74 : vector<8xf32> to vector<8x1xf32>
    %76 = tpu.reciprocal %75 {approx = true} : vector<8x1xf32> -> vector<8x1xf32>
    %77 = vector.broadcast %76 : vector<8x1xf32> to vector<8x8xf32>
    %78 = arith.mulf %73, %77 : vector<8x8xf32>
    %79 = arith.truncf %78 : vector<8x8xf32> to vector<8x8xbf16>
    %cst_35 = arith.constant dense<0.000000e+00> : vector<8x8xf32>
    %80 = tpu.matmul %79, %64, %cst_35 {dimension_numbers = #tpu.dot_dimension_numbers<[1], [0], [0], [1], [0, 0, 1, 1], [], []>} : vector<8x8xbf16>, vector<8x8xbf16>, vector<8x8xf32> -> vector<8x8xf32>
    %81 = arith.truncf %80 : vector<8x8xf32> to vector<8x8xbf16>
    %82 = vector.extract_strided_slice %51 {offsets = [0, 0], sizes = [8, 32], strides = [1, 1]} : vector<32x32xbf16> to vector<8x32xbf16>
    %cst_36 = arith.constant dense<0.000000e+00> : vector<8x32xf32>
    %83 = tpu.matmul %81, %82, %cst_36 {dimension_numbers = #tpu.dot_dimension_numbers<[1], [0], [0], [1], [0, 0, 1, 1], [], []>} : vector<8x8xbf16>, vector<8x32xbf16>, vector<8x32xf32> -> vector<8x32xf32>
    %84 = arith.addf %58, %83 : vector<8x32xf32>
    %85 = vector.extract_strided_slice %57 {offsets = [0, 8], sizes = [8, 8], strides = [1, 1]} : vector<16x128xf32> to vector<8x8xf32>
    %86 = arith.truncf %85 : vector<8x8xf32> to vector<8x8xbf16>
    %87 = vector.extract_strided_slice %57 {offsets = [0, 40], sizes = [8, 8], strides = [1, 1]} : vector<16x128xf32> to vector<8x8xf32>
    %88 = arith.truncf %87 : vector<8x8xf32> to vector<8x8xbf16>
    %89 = vector.extract_strided_slice %57 {offsets = [0, 72], sizes = [8, 8], strides = [1, 1]} : vector<16x128xf32> to vector<8x8xf32>
    %90 = arith.truncf %89 : vector<8x8xf32> to vector<8x8xbf16>
    %cst_37 = arith.constant dense<0.000000e+00> : vector<8x8xf32>
    %91 = tpu.matmul %86, %88, %cst_37 {dimension_numbers = #tpu.dot_dimension_numbers<[1], [1], [0], [0], [0, 0, 1, 0], [], []>} : vector<8x8xbf16>, vector<8x8xbf16>, vector<8x8xf32> -> vector<8x8xf32>
    %cst_38 = arith.constant 0.353553385 : f32
    %92 = vector.broadcast %cst_38 : f32 to vector<8x8xf32>
    %93 = arith.mulf %91, %92 : vector<8x8xf32>
    %94 = arith.addf %93, %44 : vector<8x8xf32>
    %cst_39 = arith.constant dense<0xFF800000> : vector<8xf32>
    %95 = vector.multi_reduction <maximumf>, %94, %cst_39 [1] : vector<8x8xf32> to vector<8xf32>
    %96 = vector.shape_cast %95 : vector<8xf32> to vector<8x1xf32>
    %97 = vector.broadcast %96 : vector<8x1xf32> to vector<8x8xf32>
    %98 = arith.subf %94, %97 : vector<8x8xf32>
    %99 = math.exp %98 : vector<8x8xf32>
    %cst_40 = arith.constant dense<0.000000e+00> : vector<8xf32>
    %100 = vector.multi_reduction <add>, %99, %cst_40 [1] : vector<8x8xf32> to vector<8xf32>
    %101 = vector.shape_cast %100 : vector<8xf32> to vector<8x1xf32>
    %102 = tpu.reciprocal %101 {approx = true} : vector<8x1xf32> -> vector<8x1xf32>
    %103 = vector.broadcast %102 : vector<8x1xf32> to vector<8x8xf32>
    %104 = arith.mulf %99, %103 : vector<8x8xf32>
    %105 = arith.truncf %104 : vector<8x8xf32> to vector<8x8xbf16>
    %cst_41 = arith.constant dense<0.000000e+00> : vector<8x8xf32>
    %106 = tpu.matmul %105, %90, %cst_41 {dimension_numbers = #tpu.dot_dimension_numbers<[1], [0], [0], [1], [0, 0, 1, 1], [], []>} : vector<8x8xbf16>, vector<8x8xbf16>, vector<8x8xf32> -> vector<8x8xf32>
    %107 = arith.truncf %106 : vector<8x8xf32> to vector<8x8xbf16>
    %108 = vector.extract_strided_slice %51 {offsets = [8, 0], sizes = [8, 32], strides = [1, 1]} : vector<32x32xbf16> to vector<8x32xbf16>
    %cst_42 = arith.constant dense<0.000000e+00> : vector<8x32xf32>
    %109 = tpu.matmul %107, %108, %cst_42 {dimension_numbers = #tpu.dot_dimension_numbers<[1], [0], [0], [1], [0, 0, 1, 1], [], []>} : vector<8x8xbf16>, vector<8x32xbf16>, vector<8x32xf32> -> vector<8x32xf32>
    %110 = arith.addf %84, %109 : vector<8x32xf32>
    %111 = vector.extract_strided_slice %57 {offsets = [0, 16], sizes = [8, 8], strides = [1, 1]} : vector<16x128xf32> to vector<8x8xf32>
    %112 = arith.truncf %111 : vector<8x8xf32> to vector<8x8xbf16>
    %113 = vector.extract_strided_slice %57 {offsets = [0, 48], sizes = [8, 8], strides = [1, 1]} : vector<16x128xf32> to vector<8x8xf32>
    %114 = arith.truncf %113 : vector<8x8xf32> to vector<8x8xbf16>
    %115 = vector.extract_strided_slice %57 {offsets = [0, 80], sizes = [8, 8], strides = [1, 1]} : vector<16x128xf32> to vector<8x8xf32>
    %116 = arith.truncf %115 : vector<8x8xf32> to vector<8x8xbf16>
    %cst_43 = arith.constant dense<0.000000e+00> : vector<8x8xf32>
    %117 = tpu.matmul %112, %114, %cst_43 {dimension_numbers = #tpu.dot_dimension_numbers<[1], [1], [0], [0], [0, 0, 1, 0], [], []>} : vector<8x8xbf16>, vector<8x8xbf16>, vector<8x8xf32> -> vector<8x8xf32>
    %cst_44 = arith.constant 0.353553385 : f32
    %118 = vector.broadcast %cst_44 : f32 to vector<8x8xf32>
    %119 = arith.mulf %117, %118 : vector<8x8xf32>
    %120 = arith.addf %119, %44 : vector<8x8xf32>
    %cst_45 = arith.constant dense<0xFF800000> : vector<8xf32>
    %121 = vector.multi_reduction <maximumf>, %120, %cst_45 [1] : vector<8x8xf32> to vector<8xf32>
    %122 = vector.shape_cast %121 : vector<8xf32> to vector<8x1xf32>
    %123 = vector.broadcast %122 : vector<8x1xf32> to vector<8x8xf32>
    %124 = arith.subf %120, %123 : vector<8x8xf32>
    %125 = math.exp %124 : vector<8x8xf32>
    %cst_46 = arith.constant dense<0.000000e+00> : vector<8xf32>
    %126 = vector.multi_reduction <add>, %125, %cst_46 [1] : vector<8x8xf32> to vector<8xf32>
    %127 = vector.shape_cast %126 : vector<8xf32> to vector<8x1xf32>
    %128 = tpu.reciprocal %127 {approx = true} : vector<8x1xf32> -> vector<8x1xf32>
    %129 = vector.broadcast %128 : vector<8x1xf32> to vector<8x8xf32>
    %130 = arith.mulf %125, %129 : vector<8x8xf32>
    %131 = arith.truncf %130 : vector<8x8xf32> to vector<8x8xbf16>
    %cst_47 = arith.constant dense<0.000000e+00> : vector<8x8xf32>
    %132 = tpu.matmul %131, %116, %cst_47 {dimension_numbers = #tpu.dot_dimension_numbers<[1], [0], [0], [1], [0, 0, 1, 1], [], []>} : vector<8x8xbf16>, vector<8x8xbf16>, vector<8x8xf32> -> vector<8x8xf32>
    %133 = arith.truncf %132 : vector<8x8xf32> to vector<8x8xbf16>
    %134 = vector.extract_strided_slice %51 {offsets = [16, 0], sizes = [8, 32], strides = [1, 1]} : vector<32x32xbf16> to vector<8x32xbf16>
    %cst_48 = arith.constant dense<0.000000e+00> : vector<8x32xf32>
    %135 = tpu.matmul %133, %134, %cst_48 {dimension_numbers = #tpu.dot_dimension_numbers<[1], [0], [0], [1], [0, 0, 1, 1], [], []>} : vector<8x8xbf16>, vector<8x32xbf16>, vector<8x32xf32> -> vector<8x32xf32>
    %136 = arith.addf %110, %135 : vector<8x32xf32>
    %137 = vector.extract_strided_slice %57 {offsets = [0, 24], sizes = [8, 8], strides = [1, 1]} : vector<16x128xf32> to vector<8x8xf32>
    %138 = arith.truncf %137 : vector<8x8xf32> to vector<8x8xbf16>
    %139 = vector.extract_strided_slice %57 {offsets = [0, 56], sizes = [8, 8], strides = [1, 1]} : vector<16x128xf32> to vector<8x8xf32>
    %140 = arith.truncf %139 : vector<8x8xf32> to vector<8x8xbf16>
    %141 = vector.extract_strided_slice %57 {offsets = [0, 88], sizes = [8, 8], strides = [1, 1]} : vector<16x128xf32> to vector<8x8xf32>
    %142 = arith.truncf %141 : vector<8x8xf32> to vector<8x8xbf16>
    %cst_49 = arith.constant dense<0.000000e+00> : vector<8x8xf32>
    %143 = tpu.matmul %138, %140, %cst_49 {dimension_numbers = #tpu.dot_dimension_numbers<[1], [1], [0], [0], [0, 0, 1, 0], [], []>} : vector<8x8xbf16>, vector<8x8xbf16>, vector<8x8xf32> -> vector<8x8xf32>
    %cst_50 = arith.constant 0.353553385 : f32
    %144 = vector.broadcast %cst_50 : f32 to vector<8x8xf32>
    %145 = arith.mulf %143, %144 : vector<8x8xf32>
    %146 = arith.addf %145, %44 : vector<8x8xf32>
    %cst_51 = arith.constant dense<0xFF800000> : vector<8xf32>
    %147 = vector.multi_reduction <maximumf>, %146, %cst_51 [1] : vector<8x8xf32> to vector<8xf32>
    %148 = vector.shape_cast %147 : vector<8xf32> to vector<8x1xf32>
    %149 = vector.broadcast %148 : vector<8x1xf32> to vector<8x8xf32>
    %150 = arith.subf %146, %149 : vector<8x8xf32>
    %151 = math.exp %150 : vector<8x8xf32>
    %cst_52 = arith.constant dense<0.000000e+00> : vector<8xf32>
    %152 = vector.multi_reduction <add>, %151, %cst_52 [1] : vector<8x8xf32> to vector<8xf32>
    %153 = vector.shape_cast %152 : vector<8xf32> to vector<8x1xf32>
    %154 = tpu.reciprocal %153 {approx = true} : vector<8x1xf32> -> vector<8x1xf32>
    %155 = vector.broadcast %154 : vector<8x1xf32> to vector<8x8xf32>
    %156 = arith.mulf %151, %155 : vector<8x8xf32>
    %157 = arith.truncf %156 : vector<8x8xf32> to vector<8x8xbf16>
    %cst_53 = arith.constant dense<0.000000e+00> : vector<8x8xf32>
    %158 = tpu.matmul %157, %142, %cst_53 {dimension_numbers = #tpu.dot_dimension_numbers<[1], [0], [0], [1], [0, 0, 1, 1], [], []>} : vector<8x8xbf16>, vector<8x8xbf16>, vector<8x8xf32> -> vector<8x8xf32>
    %159 = arith.truncf %158 : vector<8x8xf32> to vector<8x8xbf16>
    %160 = vector.extract_strided_slice %51 {offsets = [24, 0], sizes = [8, 32], strides = [1, 1]} : vector<32x32xbf16> to vector<8x32xbf16>
    %cst_54 = arith.constant dense<0.000000e+00> : vector<8x32xf32>
    %161 = tpu.matmul %159, %160, %cst_54 {dimension_numbers = #tpu.dot_dimension_numbers<[1], [0], [0], [1], [0, 0, 1, 1], [], []>} : vector<8x8xbf16>, vector<8x32xbf16>, vector<8x32xf32> -> vector<8x32xf32>
    %162 = arith.addf %136, %161 : vector<8x32xf32>
    %cst_55 = arith.constant 0.000000e+00 : f32
    %163 = vector.broadcast %cst_55 : f32 to vector<8x32xf32>
    %164 = vector.extract_strided_slice %57 {offsets = [8, 0], sizes = [8, 8], strides = [1, 1]} : vector<16x128xf32> to vector<8x8xf32>
    %165 = arith.truncf %164 : vector<8x8xf32> to vector<8x8xbf16>
    %166 = vector.extract_strided_slice %57 {offsets = [8, 32], sizes = [8, 8], strides = [1, 1]} : vector<16x128xf32> to vector<8x8xf32>
    %167 = arith.truncf %166 : vector<8x8xf32> to vector<8x8xbf16>
    %168 = vector.extract_strided_slice %57 {offsets = [8, 64], sizes = [8, 8], strides = [1, 1]} : vector<16x128xf32> to vector<8x8xf32>
    %169 = arith.truncf %168 : vector<8x8xf32> to vector<8x8xbf16>
    %cst_56 = arith.constant dense<0.000000e+00> : vector<8x8xf32>
    %170 = tpu.matmul %165, %167, %cst_56 {dimension_numbers = #tpu.dot_dimension_numbers<[1], [1], [0], [0], [0, 0, 1, 0], [], []>} : vector<8x8xbf16>, vector<8x8xbf16>, vector<8x8xf32> -> vector<8x8xf32>
    %cst_57 = arith.constant 0.353553385 : f32
    %171 = vector.broadcast %cst_57 : f32 to vector<8x8xf32>
    %172 = arith.mulf %170, %171 : vector<8x8xf32>
    %173 = arith.addf %172, %47 : vector<8x8xf32>
    %cst_58 = arith.constant dense<0xFF800000> : vector<8xf32>
    %174 = vector.multi_reduction <maximumf>, %173, %cst_58 [1] : vector<8x8xf32> to vector<8xf32>
    %175 = vector.shape_cast %174 : vector<8xf32> to vector<8x1xf32>
    %176 = vector.broadcast %175 : vector<8x1xf32> to vector<8x8xf32>
    %177 = arith.subf %173, %176 : vector<8x8xf32>
    %178 = math.exp %177 : vector<8x8xf32>
    %cst_59 = arith.constant dense<0.000000e+00> : vector<8xf32>
    %179 = vector.multi_reduction <add>, %178, %cst_59 [1] : vector<8x8xf32> to vector<8xf32>
    %180 = vector.shape_cast %179 : vector<8xf32> to vector<8x1xf32>
    %181 = tpu.reciprocal %180 {approx = true} : vector<8x1xf32> -> vector<8x1xf32>
    %182 = vector.broadcast %181 : vector<8x1xf32> to vector<8x8xf32>
    %183 = arith.mulf %178, %182 : vector<8x8xf32>
    %184 = arith.truncf %183 : vector<8x8xf32> to vector<8x8xbf16>
    %cst_60 = arith.constant dense<0.000000e+00> : vector<8x8xf32>
    %185 = tpu.matmul %184, %169, %cst_60 {dimension_numbers = #tpu.dot_dimension_numbers<[1], [0], [0], [1], [0, 0, 1, 1], [], []>} : vector<8x8xbf16>, vector<8x8xbf16>, vector<8x8xf32> -> vector<8x8xf32>
    %186 = arith.truncf %185 : vector<8x8xf32> to vector<8x8xbf16>
    %187 = vector.extract_strided_slice %51 {offsets = [0, 0], sizes = [8, 32], strides = [1, 1]} : vector<32x32xbf16> to vector<8x32xbf16>
    %cst_61 = arith.constant dense<0.000000e+00> : vector<8x32xf32>
    %188 = tpu.matmul %186, %187, %cst_61 {dimension_numbers = #tpu.dot_dimension_numbers<[1], [0], [0], [1], [0, 0, 1, 1], [], []>} : vector<8x8xbf16>, vector<8x32xbf16>, vector<8x32xf32> -> vector<8x32xf32>
    %189 = arith.addf %163, %188 : vector<8x32xf32>
    %190 = vector.extract_strided_slice %57 {offsets = [8, 8], sizes = [8, 8], strides = [1, 1]} : vector<16x128xf32> to vector<8x8xf32>
    %191 = arith.truncf %190 : vector<8x8xf32> to vector<8x8xbf16>
    %192 = vector.extract_strided_slice %57 {offsets = [8, 40], sizes = [8, 8], strides = [1, 1]} : vector<16x128xf32> to vector<8x8xf32>
    %193 = arith.truncf %192 : vector<8x8xf32> to vector<8x8xbf16>
    %194 = vector.extract_strided_slice %57 {offsets = [8, 72], sizes = [8, 8], strides = [1, 1]} : vector<16x128xf32> to vector<8x8xf32>
    %195 = arith.truncf %194 : vector<8x8xf32> to vector<8x8xbf16>
    %cst_62 = arith.constant dense<0.000000e+00> : vector<8x8xf32>
    %196 = tpu.matmul %191, %193, %cst_62 {dimension_numbers = #tpu.dot_dimension_numbers<[1], [1], [0], [0], [0, 0, 1, 0], [], []>} : vector<8x8xbf16>, vector<8x8xbf16>, vector<8x8xf32> -> vector<8x8xf32>
    %cst_63 = arith.constant 0.353553385 : f32
    %197 = vector.broadcast %cst_63 : f32 to vector<8x8xf32>
    %198 = arith.mulf %196, %197 : vector<8x8xf32>
    %199 = arith.addf %198, %47 : vector<8x8xf32>
    %cst_64 = arith.constant dense<0xFF800000> : vector<8xf32>
    %200 = vector.multi_reduction <maximumf>, %199, %cst_64 [1] : vector<8x8xf32> to vector<8xf32>
    %201 = vector.shape_cast %200 : vector<8xf32> to vector<8x1xf32>
    %202 = vector.broadcast %201 : vector<8x1xf32> to vector<8x8xf32>
    %203 = arith.subf %199, %202 : vector<8x8xf32>
    %204 = math.exp %203 : vector<8x8xf32>
    %cst_65 = arith.constant dense<0.000000e+00> : vector<8xf32>
    %205 = vector.multi_reduction <add>, %204, %cst_65 [1] : vector<8x8xf32> to vector<8xf32>
    %206 = vector.shape_cast %205 : vector<8xf32> to vector<8x1xf32>
    %207 = tpu.reciprocal %206 {approx = true} : vector<8x1xf32> -> vector<8x1xf32>
    %208 = vector.broadcast %207 : vector<8x1xf32> to vector<8x8xf32>
    %209 = arith.mulf %204, %208 : vector<8x8xf32>
    %210 = arith.truncf %209 : vector<8x8xf32> to vector<8x8xbf16>
    %cst_66 = arith.constant dense<0.000000e+00> : vector<8x8xf32>
    %211 = tpu.matmul %210, %195, %cst_66 {dimension_numbers = #tpu.dot_dimension_numbers<[1], [0], [0], [1], [0, 0, 1, 1], [], []>} : vector<8x8xbf16>, vector<8x8xbf16>, vector<8x8xf32> -> vector<8x8xf32>
    %212 = arith.truncf %211 : vector<8x8xf32> to vector<8x8xbf16>
    %213 = vector.extract_strided_slice %51 {offsets = [8, 0], sizes = [8, 32], strides = [1, 1]} : vector<32x32xbf16> to vector<8x32xbf16>
    %cst_67 = arith.constant dense<0.000000e+00> : vector<8x32xf32>
    %214 = tpu.matmul %212, %213, %cst_67 {dimension_numbers = #tpu.dot_dimension_numbers<[1], [0], [0], [1], [0, 0, 1, 1], [], []>} : vector<8x8xbf16>, vector<8x32xbf16>, vector<8x32xf32> -> vector<8x32xf32>
    %215 = arith.addf %189, %214 : vector<8x32xf32>
    %216 = vector.extract_strided_slice %57 {offsets = [8, 16], sizes = [8, 8], strides = [1, 1]} : vector<16x128xf32> to vector<8x8xf32>
    %217 = arith.truncf %216 : vector<8x8xf32> to vector<8x8xbf16>
    %218 = vector.extract_strided_slice %57 {offsets = [8, 48], sizes = [8, 8], strides = [1, 1]} : vector<16x128xf32> to vector<8x8xf32>
    %219 = arith.truncf %218 : vector<8x8xf32> to vector<8x8xbf16>
    %220 = vector.extract_strided_slice %57 {offsets = [8, 80], sizes = [8, 8], strides = [1, 1]} : vector<16x128xf32> to vector<8x8xf32>
    %221 = arith.truncf %220 : vector<8x8xf32> to vector<8x8xbf16>
    %cst_68 = arith.constant dense<0.000000e+00> : vector<8x8xf32>
    %222 = tpu.matmul %217, %219, %cst_68 {dimension_numbers = #tpu.dot_dimension_numbers<[1], [1], [0], [0], [0, 0, 1, 0], [], []>} : vector<8x8xbf16>, vector<8x8xbf16>, vector<8x8xf32> -> vector<8x8xf32>
    %cst_69 = arith.constant 0.353553385 : f32
    %223 = vector.broadcast %cst_69 : f32 to vector<8x8xf32>
    %224 = arith.mulf %222, %223 : vector<8x8xf32>
    %225 = arith.addf %224, %47 : vector<8x8xf32>
    %cst_70 = arith.constant dense<0xFF800000> : vector<8xf32>
    %226 = vector.multi_reduction <maximumf>, %225, %cst_70 [1] : vector<8x8xf32> to vector<8xf32>
    %227 = vector.shape_cast %226 : vector<8xf32> to vector<8x1xf32>
    %228 = vector.broadcast %227 : vector<8x1xf32> to vector<8x8xf32>
    %229 = arith.subf %225, %228 : vector<8x8xf32>
    %230 = math.exp %229 : vector<8x8xf32>
    %cst_71 = arith.constant dense<0.000000e+00> : vector<8xf32>
    %231 = vector.multi_reduction <add>, %230, %cst_71 [1] : vector<8x8xf32> to vector<8xf32>
    %232 = vector.shape_cast %231 : vector<8xf32> to vector<8x1xf32>
    %233 = tpu.reciprocal %232 {approx = true} : vector<8x1xf32> -> vector<8x1xf32>
    %234 = vector.broadcast %233 : vector<8x1xf32> to vector<8x8xf32>
    %235 = arith.mulf %230, %234 : vector<8x8xf32>
    %236 = arith.truncf %235 : vector<8x8xf32> to vector<8x8xbf16>
    %cst_72 = arith.constant dense<0.000000e+00> : vector<8x8xf32>
    %237 = tpu.matmul %236, %221, %cst_72 {dimension_numbers = #tpu.dot_dimension_numbers<[1], [0], [0], [1], [0, 0, 1, 1], [], []>} : vector<8x8xbf16>, vector<8x8xbf16>, vector<8x8xf32> -> vector<8x8xf32>
    %238 = arith.truncf %237 : vector<8x8xf32> to vector<8x8xbf16>
    %239 = vector.extract_strided_slice %51 {offsets = [16, 0], sizes = [8, 32], strides = [1, 1]} : vector<32x32xbf16> to vector<8x32xbf16>
    %cst_73 = arith.constant dense<0.000000e+00> : vector<8x32xf32>
    %240 = tpu.matmul %238, %239, %cst_73 {dimension_numbers = #tpu.dot_dimension_numbers<[1], [0], [0], [1], [0, 0, 1, 1], [], []>} : vector<8x8xbf16>, vector<8x32xbf16>, vector<8x32xf32> -> vector<8x32xf32>
    %241 = arith.addf %215, %240 : vector<8x32xf32>
    %242 = vector.extract_strided_slice %57 {offsets = [8, 24], sizes = [8, 8], strides = [1, 1]} : vector<16x128xf32> to vector<8x8xf32>
    %243 = arith.truncf %242 : vector<8x8xf32> to vector<8x8xbf16>
    %244 = vector.extract_strided_slice %57 {offsets = [8, 56], sizes = [8, 8], strides = [1, 1]} : vector<16x128xf32> to vector<8x8xf32>
    %245 = arith.truncf %244 : vector<8x8xf32> to vector<8x8xbf16>
    %246 = vector.extract_strided_slice %57 {offsets = [8, 88], sizes = [8, 8], strides = [1, 1]} : vector<16x128xf32> to vector<8x8xf32>
    %247 = arith.truncf %246 : vector<8x8xf32> to vector<8x8xbf16>
    %cst_74 = arith.constant dense<0.000000e+00> : vector<8x8xf32>
    %248 = tpu.matmul %243, %245, %cst_74 {dimension_numbers = #tpu.dot_dimension_numbers<[1], [1], [0], [0], [0, 0, 1, 0], [], []>} : vector<8x8xbf16>, vector<8x8xbf16>, vector<8x8xf32> -> vector<8x8xf32>
    %cst_75 = arith.constant 0.353553385 : f32
    %249 = vector.broadcast %cst_75 : f32 to vector<8x8xf32>
    %250 = arith.mulf %248, %249 : vector<8x8xf32>
    %251 = arith.addf %250, %47 : vector<8x8xf32>
    %cst_76 = arith.constant dense<0xFF800000> : vector<8xf32>
    %252 = vector.multi_reduction <maximumf>, %251, %cst_76 [1] : vector<8x8xf32> to vector<8xf32>
    %253 = vector.shape_cast %252 : vector<8xf32> to vector<8x1xf32>
    %254 = vector.broadcast %253 : vector<8x1xf32> to vector<8x8xf32>
    %255 = arith.subf %251, %254 : vector<8x8xf32>
    %256 = math.exp %255 : vector<8x8xf32>
    %cst_77 = arith.constant dense<0.000000e+00> : vector<8xf32>
    %257 = vector.multi_reduction <add>, %256, %cst_77 [1] : vector<8x8xf32> to vector<8xf32>
    %258 = vector.shape_cast %257 : vector<8xf32> to vector<8x1xf32>
    %259 = tpu.reciprocal %258 {approx = true} : vector<8x1xf32> -> vector<8x1xf32>
    %260 = vector.broadcast %259 : vector<8x1xf32> to vector<8x8xf32>
    %261 = arith.mulf %256, %260 : vector<8x8xf32>
    %262 = arith.truncf %261 : vector<8x8xf32> to vector<8x8xbf16>
    %cst_78 = arith.constant dense<0.000000e+00> : vector<8x8xf32>
    %263 = tpu.matmul %262, %247, %cst_78 {dimension_numbers = #tpu.dot_dimension_numbers<[1], [0], [0], [1], [0, 0, 1, 1], [], []>} : vector<8x8xbf16>, vector<8x8xbf16>, vector<8x8xf32> -> vector<8x8xf32>
    %264 = arith.truncf %263 : vector<8x8xf32> to vector<8x8xbf16>
    %265 = vector.extract_strided_slice %51 {offsets = [24, 0], sizes = [8, 32], strides = [1, 1]} : vector<32x32xbf16> to vector<8x32xbf16>
    %cst_79 = arith.constant dense<0.000000e+00> : vector<8x32xf32>
    %266 = tpu.matmul %264, %265, %cst_79 {dimension_numbers = #tpu.dot_dimension_numbers<[1], [0], [0], [1], [0, 0, 1, 1], [], []>} : vector<8x8xbf16>, vector<8x32xbf16>, vector<8x32xf32> -> vector<8x32xf32>
    %267 = arith.addf %241, %266 : vector<8x32xf32>
    %268 = tpu.concatenate %162, %267 in 0 : vector<8x32xf32>, vector<8x32xf32> -> vector<16x32xf32>
    %c0_80 = arith.constant 0 : index
    %c0_81 = arith.constant 0 : index
    %c0_82 = arith.constant 0 : index
    %269 = vector.load %arg11[%c0_80, %c0_81, %c0_82] : memref<2x1x32xf32, #tpu.memory_space<vmem>>, vector<1x1x32xf32>
    %270 = vector.shape_cast %269 : vector<1x1x32xf32> to vector<1x32xf32>
    %271 = vector.broadcast %270 : vector<1x32xf32> to vector<16x32xf32>
    %272 = arith.addf %268, %271 : vector<16x32xf32>
    %273 = arith.addf %272, %35 : vector<16x32xf32>
    %c0_83 = arith.constant 0 : index
    %c0_84 = arith.constant 0 : index
    %c0_85 = arith.constant 0 : index
    %274 = vector.load %arg12[%c0_83, %c0_84, %c0_85] : memref<2x1x32xf32, #tpu.memory_space<vmem>>, vector<1x1x32xf32>
    %275 = vector.shape_cast %274 : vector<1x1x32xf32> to vector<1x32xf32>
    %c0_86 = arith.constant 0 : index
    %c0_87 = arith.constant 0 : index
    %c0_88 = arith.constant 0 : index
    %276 = vector.load %arg13[%c0_86, %c0_87, %c0_88] : memref<2x1x32xf32, #tpu.memory_space<vmem>>, vector<1x1x32xf32>
    %277 = vector.shape_cast %276 : vector<1x1x32xf32> to vector<1x32xf32>
    %cst_89 = arith.constant dense<0.000000e+00> : vector<16xf32>
    %278 = vector.multi_reduction <add>, %273, %cst_89 [1] : vector<16x32xf32> to vector<16xf32>
    %279 = vector.shape_cast %278 : vector<16xf32> to vector<16x1xf32>
    %cst_90 = arith.constant 3.200000e+01 : f32
    %280 = vector.broadcast %cst_90 : f32 to vector<16x1xf32>
    %281 = arith.divf %279, %280 : vector<16x1xf32>
    %282 = vector.broadcast %281 : vector<16x1xf32> to vector<16x32xf32>
    %283 = arith.subf %273, %282 : vector<16x32xf32>
    %284 = arith.mulf %283, %283 : vector<16x32xf32>
    %cst_91 = arith.constant dense<0.000000e+00> : vector<16xf32>
    %285 = vector.multi_reduction <add>, %284, %cst_91 [1] : vector<16x32xf32> to vector<16xf32>
    %286 = vector.shape_cast %285 : vector<16xf32> to vector<16x1xf32>
    %cst_92 = arith.constant 3.200000e+01 : f32
    %287 = vector.broadcast %cst_92 : f32 to vector<16x1xf32>
    %288 = arith.divf %286, %287 : vector<16x1xf32>
    %cst_93 = arith.constant 9.99999996E-13 : f32
    %289 = vector.broadcast %cst_93 : f32 to vector<16x1xf32>
    %290 = arith.addf %288, %289 : vector<16x1xf32>
    %291 = math.rsqrt %290 : vector<16x1xf32>
    %292 = vector.broadcast %291 : vector<16x1xf32> to vector<16x32xf32>
    %293 = arith.mulf %283, %292 : vector<16x32xf32>
    %294 = vector.broadcast %275 : vector<1x32xf32> to vector<16x32xf32>
    %295 = arith.mulf %293, %294 : vector<16x32xf32>
    %296 = vector.broadcast %277 : vector<1x32xf32> to vector<16x32xf32>
    %297 = arith.addf %295, %296 : vector<16x32xf32>
    %c0_94 = arith.constant 0 : index
    %c0_95 = arith.constant 0 : index
    %c0_96 = arith.constant 0 : index
    %298 = vector.load %arg14[%c0_94, %c0_95, %c0_96] : memref<2x32x64xbf16, #tpu.memory_space<vmem>>, vector<1x32x64xbf16>
    %299 = vector.shape_cast %298 : vector<1x32x64xbf16> to vector<32x64xbf16>
    %c0_97 = arith.constant 0 : index
    %c0_98 = arith.constant 0 : index
    %c0_99 = arith.constant 0 : index
    %300 = vector.load %arg15[%c0_97, %c0_98, %c0_99] : memref<2x1x64xf32, #tpu.memory_space<vmem>>, vector<1x1x64xf32>
    %301 = vector.shape_cast %300 : vector<1x1x64xf32> to vector<1x64xf32>
    %302 = arith.truncf %297 : vector<16x32xf32> to vector<16x32xbf16>
    %cst_100 = arith.constant dense<0.000000e+00> : vector<16x64xf32>
    %303 = tpu.matmul %302, %299, %cst_100 {dimension_numbers = #tpu.dot_dimension_numbers<[1], [0], [0], [1], [0, 0, 1, 1], [], []>} : vector<16x32xbf16>, vector<32x64xbf16>, vector<16x64xf32> -> vector<16x64xf32>
    %304 = vector.broadcast %301 : vector<1x64xf32> to vector<16x64xf32>
    %305 = arith.addf %303, %304 : vector<16x64xf32>
    %cst_101 = arith.constant 5.000000e-01 : f32
    %306 = vector.broadcast %cst_101 : f32 to vector<16x64xf32>
    %307 = arith.mulf %306, %305 : vector<16x64xf32>
    %cst_102 = arith.constant 4.471500e-02 : f32
    %308 = vector.broadcast %cst_102 : f32 to vector<16x64xf32>
    %309 = arith.mulf %308, %305 : vector<16x64xf32>
    %310 = arith.mulf %309, %305 : vector<16x64xf32>
    %311 = arith.mulf %310, %305 : vector<16x64xf32>
    %312 = arith.addf %305, %311 : vector<16x64xf32>
    %cst_103 = arith.constant 0.797884583 : f32
    %313 = vector.broadcast %cst_103 : f32 to vector<16x64xf32>
    %314 = arith.mulf %313, %312 : vector<16x64xf32>
    %315 = math.tanh %314 : vector<16x64xf32>
    %cst_104 = arith.constant 1.000000e+00 : f32
    %316 = vector.broadcast %cst_104 : f32 to vector<16x64xf32>
    %317 = arith.addf %316, %315 : vector<16x64xf32>
    %318 = arith.mulf %307, %317 : vector<16x64xf32>
    %c0_105 = arith.constant 0 : index
    %c0_106 = arith.constant 0 : index
    %c0_107 = arith.constant 0 : index
    %319 = vector.load %arg16[%c0_105, %c0_106, %c0_107] : memref<2x64x32xbf16, #tpu.memory_space<vmem>>, vector<1x64x32xbf16>
    %320 = vector.shape_cast %319 : vector<1x64x32xbf16> to vector<64x32xbf16>
    %c0_108 = arith.constant 0 : index
    %c0_109 = arith.constant 0 : index
    %c0_110 = arith.constant 0 : index
    %321 = vector.load %arg17[%c0_108, %c0_109, %c0_110] : memref<2x1x32xf32, #tpu.memory_space<vmem>>, vector<1x1x32xf32>
    %322 = vector.shape_cast %321 : vector<1x1x32xf32> to vector<1x32xf32>
    %323 = arith.truncf %318 : vector<16x64xf32> to vector<16x64xbf16>
    %cst_111 = arith.constant dense<0.000000e+00> : vector<16x32xf32>
    %324 = tpu.matmul %323, %320, %cst_111 {dimension_numbers = #tpu.dot_dimension_numbers<[1], [0], [0], [1], [0, 0, 1, 1], [], []>} : vector<16x64xbf16>, vector<64x32xbf16>, vector<16x32xf32> -> vector<16x32xf32>
    %325 = vector.broadcast %322 : vector<1x32xf32> to vector<16x32xf32>
    %326 = arith.addf %324, %325 : vector<16x32xf32>
    %327 = arith.addf %326, %297 : vector<16x32xf32>
    %c0_112 = arith.constant 0 : index
    %c0_113 = arith.constant 0 : index
    %c0_114 = arith.constant 0 : index
    %328 = vector.load %arg18[%c0_112, %c0_113, %c0_114] : memref<2x1x32xf32, #tpu.memory_space<vmem>>, vector<1x1x32xf32>
    %329 = vector.shape_cast %328 : vector<1x1x32xf32> to vector<1x32xf32>
    %c0_115 = arith.constant 0 : index
    %c0_116 = arith.constant 0 : index
    %c0_117 = arith.constant 0 : index
    %330 = vector.load %arg19[%c0_115, %c0_116, %c0_117] : memref<2x1x32xf32, #tpu.memory_space<vmem>>, vector<1x1x32xf32>
    %331 = vector.shape_cast %330 : vector<1x1x32xf32> to vector<1x32xf32>
    %cst_118 = arith.constant dense<0.000000e+00> : vector<16xf32>
    %332 = vector.multi_reduction <add>, %327, %cst_118 [1] : vector<16x32xf32> to vector<16xf32>
    %333 = vector.shape_cast %332 : vector<16xf32> to vector<16x1xf32>
    %cst_119 = arith.constant 3.200000e+01 : f32
    %334 = vector.broadcast %cst_119 : f32 to vector<16x1xf32>
    %335 = arith.divf %333, %334 : vector<16x1xf32>
    %336 = vector.broadcast %335 : vector<16x1xf32> to vector<16x32xf32>
    %337 = arith.subf %327, %336 : vector<16x32xf32>
    %338 = arith.mulf %337, %337 : vector<16x32xf32>
    %cst_120 = arith.constant dense<0.000000e+00> : vector<16xf32>
    %339 = vector.multi_reduction <add>, %338, %cst_120 [1] : vector<16x32xf32> to vector<16xf32>
    %340 = vector.shape_cast %339 : vector<16xf32> to vector<16x1xf32>
    %cst_121 = arith.constant 3.200000e+01 : f32
    %341 = vector.broadcast %cst_121 : f32 to vector<16x1xf32>
    %342 = arith.divf %340, %341 : vector<16x1xf32>
    %cst_122 = arith.constant 9.99999996E-13 : f32
    %343 = vector.broadcast %cst_122 : f32 to vector<16x1xf32>
    %344 = arith.addf %342, %343 : vector<16x1xf32>
    %345 = math.rsqrt %344 : vector<16x1xf32>
    %346 = vector.broadcast %345 : vector<16x1xf32> to vector<16x32xf32>
    %347 = arith.mulf %337, %346 : vector<16x32xf32>
    %348 = vector.broadcast %329 : vector<1x32xf32> to vector<16x32xf32>
    %349 = arith.mulf %347, %348 : vector<16x32xf32>
    %350 = vector.broadcast %331 : vector<1x32xf32> to vector<16x32xf32>
    %351 = arith.addf %349, %350 : vector<16x32xf32>
    %c1 = arith.constant 1 : index
    %c0_123 = arith.constant 0 : index
    %c0_124 = arith.constant 0 : index
    %352 = vector.load %arg8[%c1, %c0_123, %c0_124] : memref<2x32x128xbf16, #tpu.memory_space<vmem>>, vector<1x32x128xbf16>
    %353 = vector.shape_cast %352 : vector<1x32x128xbf16> to vector<32x128xbf16>
    %c1_125 = arith.constant 1 : index
    %c0_126 = arith.constant 0 : index
    %c0_127 = arith.constant 0 : index
    %354 = vector.load %arg10[%c1_125, %c0_126, %c0_127] : memref<2x32x32xbf16, #tpu.memory_space<vmem>>, vector<1x32x32xbf16>
    %355 = vector.shape_cast %354 : vector<1x32x32xbf16> to vector<32x32xbf16>
    %c1_128 = arith.constant 1 : index
    %c0_129 = arith.constant 0 : index
    %c0_130 = arith.constant 0 : index
    %356 = vector.load %arg9[%c1_128, %c0_129, %c0_130] : memref<2x1x128xf32, #tpu.memory_space<vmem>>, vector<1x1x128xf32>
    %357 = vector.shape_cast %356 : vector<1x1x128xf32> to vector<1x128xf32>
    %358 = arith.truncf %351 : vector<16x32xf32> to vector<16x32xbf16>
    %cst_131 = arith.constant dense<0.000000e+00> : vector<16x128xf32>
    %359 = tpu.matmul %358, %353, %cst_131 {dimension_numbers = #tpu.dot_dimension_numbers<[1], [0], [0], [1], [0, 0, 1, 1], [], []>} : vector<16x32xbf16>, vector<32x128xbf16>, vector<16x128xf32> -> vector<16x128xf32>
    %360 = vector.broadcast %357 : vector<1x128xf32> to vector<16x128xf32>
    %361 = arith.addf %359, %360 : vector<16x128xf32>
    %cst_132 = arith.constant 0.000000e+00 : f32
    %362 = vector.broadcast %cst_132 : f32 to vector<8x32xf32>
    %363 = vector.extract_strided_slice %361 {offsets = [0, 0], sizes = [8, 8], strides = [1, 1]} : vector<16x128xf32> to vector<8x8xf32>
    %364 = arith.truncf %363 : vector<8x8xf32> to vector<8x8xbf16>
    %365 = vector.extract_strided_slice %361 {offsets = [0, 32], sizes = [8, 8], strides = [1, 1]} : vector<16x128xf32> to vector<8x8xf32>
    %366 = arith.truncf %365 : vector<8x8xf32> to vector<8x8xbf16>
    %367 = vector.extract_strided_slice %361 {offsets = [0, 64], sizes = [8, 8], strides = [1, 1]} : vector<16x128xf32> to vector<8x8xf32>
    %368 = arith.truncf %367 : vector<8x8xf32> to vector<8x8xbf16>
    %cst_133 = arith.constant dense<0.000000e+00> : vector<8x8xf32>
    %369 = tpu.matmul %364, %366, %cst_133 {dimension_numbers = #tpu.dot_dimension_numbers<[1], [1], [0], [0], [0, 0, 1, 0], [], []>} : vector<8x8xbf16>, vector<8x8xbf16>, vector<8x8xf32> -> vector<8x8xf32>
    %cst_134 = arith.constant 0.353553385 : f32
    %370 = vector.broadcast %cst_134 : f32 to vector<8x8xf32>
    %371 = arith.mulf %369, %370 : vector<8x8xf32>
    %372 = arith.addf %371, %44 : vector<8x8xf32>
    %cst_135 = arith.constant dense<0xFF800000> : vector<8xf32>
    %373 = vector.multi_reduction <maximumf>, %372, %cst_135 [1] : vector<8x8xf32> to vector<8xf32>
    %374 = vector.shape_cast %373 : vector<8xf32> to vector<8x1xf32>
    %375 = vector.broadcast %374 : vector<8x1xf32> to vector<8x8xf32>
    %376 = arith.subf %372, %375 : vector<8x8xf32>
    %377 = math.exp %376 : vector<8x8xf32>
    %cst_136 = arith.constant dense<0.000000e+00> : vector<8xf32>
    %378 = vector.multi_reduction <add>, %377, %cst_136 [1] : vector<8x8xf32> to vector<8xf32>
    %379 = vector.shape_cast %378 : vector<8xf32> to vector<8x1xf32>
    %380 = tpu.reciprocal %379 {approx = true} : vector<8x1xf32> -> vector<8x1xf32>
    %381 = vector.broadcast %380 : vector<8x1xf32> to vector<8x8xf32>
    %382 = arith.mulf %377, %381 : vector<8x8xf32>
    %383 = arith.truncf %382 : vector<8x8xf32> to vector<8x8xbf16>
    %cst_137 = arith.constant dense<0.000000e+00> : vector<8x8xf32>
    %384 = tpu.matmul %383, %368, %cst_137 {dimension_numbers = #tpu.dot_dimension_numbers<[1], [0], [0], [1], [0, 0, 1, 1], [], []>} : vector<8x8xbf16>, vector<8x8xbf16>, vector<8x8xf32> -> vector<8x8xf32>
    %385 = arith.truncf %384 : vector<8x8xf32> to vector<8x8xbf16>
    %386 = vector.extract_strided_slice %355 {offsets = [0, 0], sizes = [8, 32], strides = [1, 1]} : vector<32x32xbf16> to vector<8x32xbf16>
    %cst_138 = arith.constant dense<0.000000e+00> : vector<8x32xf32>
    %387 = tpu.matmul %385, %386, %cst_138 {dimension_numbers = #tpu.dot_dimension_numbers<[1], [0], [0], [1], [0, 0, 1, 1], [], []>} : vector<8x8xbf16>, vector<8x32xbf16>, vector<8x32xf32> -> vector<8x32xf32>
    %388 = arith.addf %362, %387 : vector<8x32xf32>
    %389 = vector.extract_strided_slice %361 {offsets = [0, 8], sizes = [8, 8], strides = [1, 1]} : vector<16x128xf32> to vector<8x8xf32>
    %390 = arith.truncf %389 : vector<8x8xf32> to vector<8x8xbf16>
    %391 = vector.extract_strided_slice %361 {offsets = [0, 40], sizes = [8, 8], strides = [1, 1]} : vector<16x128xf32> to vector<8x8xf32>
    %392 = arith.truncf %391 : vector<8x8xf32> to vector<8x8xbf16>
    %393 = vector.extract_strided_slice %361 {offsets = [0, 72], sizes = [8, 8], strides = [1, 1]} : vector<16x128xf32> to vector<8x8xf32>
    %394 = arith.truncf %393 : vector<8x8xf32> to vector<8x8xbf16>
    %cst_139 = arith.constant dense<0.000000e+00> : vector<8x8xf32>
    %395 = tpu.matmul %390, %392, %cst_139 {dimension_numbers = #tpu.dot_dimension_numbers<[1], [1], [0], [0], [0, 0, 1, 0], [], []>} : vector<8x8xbf16>, vector<8x8xbf16>, vector<8x8xf32> -> vector<8x8xf32>
    %cst_140 = arith.constant 0.353553385 : f32
    %396 = vector.broadcast %cst_140 : f32 to vector<8x8xf32>
    %397 = arith.mulf %395, %396 : vector<8x8xf32>
    %398 = arith.addf %397, %44 : vector<8x8xf32>
    %cst_141 = arith.constant dense<0xFF800000> : vector<8xf32>
    %399 = vector.multi_reduction <maximumf>, %398, %cst_141 [1] : vector<8x8xf32> to vector<8xf32>
    %400 = vector.shape_cast %399 : vector<8xf32> to vector<8x1xf32>
    %401 = vector.broadcast %400 : vector<8x1xf32> to vector<8x8xf32>
    %402 = arith.subf %398, %401 : vector<8x8xf32>
    %403 = math.exp %402 : vector<8x8xf32>
    %cst_142 = arith.constant dense<0.000000e+00> : vector<8xf32>
    %404 = vector.multi_reduction <add>, %403, %cst_142 [1] : vector<8x8xf32> to vector<8xf32>
    %405 = vector.shape_cast %404 : vector<8xf32> to vector<8x1xf32>
    %406 = tpu.reciprocal %405 {approx = true} : vector<8x1xf32> -> vector<8x1xf32>
    %407 = vector.broadcast %406 : vector<8x1xf32> to vector<8x8xf32>
    %408 = arith.mulf %403, %407 : vector<8x8xf32>
    %409 = arith.truncf %408 : vector<8x8xf32> to vector<8x8xbf16>
    %cst_143 = arith.constant dense<0.000000e+00> : vector<8x8xf32>
    %410 = tpu.matmul %409, %394, %cst_143 {dimension_numbers = #tpu.dot_dimension_numbers<[1], [0], [0], [1], [0, 0, 1, 1], [], []>} : vector<8x8xbf16>, vector<8x8xbf16>, vector<8x8xf32> -> vector<8x8xf32>
    %411 = arith.truncf %410 : vector<8x8xf32> to vector<8x8xbf16>
    %412 = vector.extract_strided_slice %355 {offsets = [8, 0], sizes = [8, 32], strides = [1, 1]} : vector<32x32xbf16> to vector<8x32xbf16>
    %cst_144 = arith.constant dense<0.000000e+00> : vector<8x32xf32>
    %413 = tpu.matmul %411, %412, %cst_144 {dimension_numbers = #tpu.dot_dimension_numbers<[1], [0], [0], [1], [0, 0, 1, 1], [], []>} : vector<8x8xbf16>, vector<8x32xbf16>, vector<8x32xf32> -> vector<8x32xf32>
    %414 = arith.addf %388, %413 : vector<8x32xf32>
    %415 = vector.extract_strided_slice %361 {offsets = [0, 16], sizes = [8, 8], strides = [1, 1]} : vector<16x128xf32> to vector<8x8xf32>
    %416 = arith.truncf %415 : vector<8x8xf32> to vector<8x8xbf16>
    %417 = vector.extract_strided_slice %361 {offsets = [0, 48], sizes = [8, 8], strides = [1, 1]} : vector<16x128xf32> to vector<8x8xf32>
    %418 = arith.truncf %417 : vector<8x8xf32> to vector<8x8xbf16>
    %419 = vector.extract_strided_slice %361 {offsets = [0, 80], sizes = [8, 8], strides = [1, 1]} : vector<16x128xf32> to vector<8x8xf32>
    %420 = arith.truncf %419 : vector<8x8xf32> to vector<8x8xbf16>
    %cst_145 = arith.constant dense<0.000000e+00> : vector<8x8xf32>
    %421 = tpu.matmul %416, %418, %cst_145 {dimension_numbers = #tpu.dot_dimension_numbers<[1], [1], [0], [0], [0, 0, 1, 0], [], []>} : vector<8x8xbf16>, vector<8x8xbf16>, vector<8x8xf32> -> vector<8x8xf32>
    %cst_146 = arith.constant 0.353553385 : f32
    %422 = vector.broadcast %cst_146 : f32 to vector<8x8xf32>
    %423 = arith.mulf %421, %422 : vector<8x8xf32>
    %424 = arith.addf %423, %44 : vector<8x8xf32>
    %cst_147 = arith.constant dense<0xFF800000> : vector<8xf32>
    %425 = vector.multi_reduction <maximumf>, %424, %cst_147 [1] : vector<8x8xf32> to vector<8xf32>
    %426 = vector.shape_cast %425 : vector<8xf32> to vector<8x1xf32>
    %427 = vector.broadcast %426 : vector<8x1xf32> to vector<8x8xf32>
    %428 = arith.subf %424, %427 : vector<8x8xf32>
    %429 = math.exp %428 : vector<8x8xf32>
    %cst_148 = arith.constant dense<0.000000e+00> : vector<8xf32>
    %430 = vector.multi_reduction <add>, %429, %cst_148 [1] : vector<8x8xf32> to vector<8xf32>
    %431 = vector.shape_cast %430 : vector<8xf32> to vector<8x1xf32>
    %432 = tpu.reciprocal %431 {approx = true} : vector<8x1xf32> -> vector<8x1xf32>
    %433 = vector.broadcast %432 : vector<8x1xf32> to vector<8x8xf32>
    %434 = arith.mulf %429, %433 : vector<8x8xf32>
    %435 = arith.truncf %434 : vector<8x8xf32> to vector<8x8xbf16>
    %cst_149 = arith.constant dense<0.000000e+00> : vector<8x8xf32>
    %436 = tpu.matmul %435, %420, %cst_149 {dimension_numbers = #tpu.dot_dimension_numbers<[1], [0], [0], [1], [0, 0, 1, 1], [], []>} : vector<8x8xbf16>, vector<8x8xbf16>, vector<8x8xf32> -> vector<8x8xf32>
    %437 = arith.truncf %436 : vector<8x8xf32> to vector<8x8xbf16>
    %438 = vector.extract_strided_slice %355 {offsets = [16, 0], sizes = [8, 32], strides = [1, 1]} : vector<32x32xbf16> to vector<8x32xbf16>
    %cst_150 = arith.constant dense<0.000000e+00> : vector<8x32xf32>
    %439 = tpu.matmul %437, %438, %cst_150 {dimension_numbers = #tpu.dot_dimension_numbers<[1], [0], [0], [1], [0, 0, 1, 1], [], []>} : vector<8x8xbf16>, vector<8x32xbf16>, vector<8x32xf32> -> vector<8x32xf32>
    %440 = arith.addf %414, %439 : vector<8x32xf32>
    %441 = vector.extract_strided_slice %361 {offsets = [0, 24], sizes = [8, 8], strides = [1, 1]} : vector<16x128xf32> to vector<8x8xf32>
    %442 = arith.truncf %441 : vector<8x8xf32> to vector<8x8xbf16>
    %443 = vector.extract_strided_slice %361 {offsets = [0, 56], sizes = [8, 8], strides = [1, 1]} : vector<16x128xf32> to vector<8x8xf32>
    %444 = arith.truncf %443 : vector<8x8xf32> to vector<8x8xbf16>
    %445 = vector.extract_strided_slice %361 {offsets = [0, 88], sizes = [8, 8], strides = [1, 1]} : vector<16x128xf32> to vector<8x8xf32>
    %446 = arith.truncf %445 : vector<8x8xf32> to vector<8x8xbf16>
    %cst_151 = arith.constant dense<0.000000e+00> : vector<8x8xf32>
    %447 = tpu.matmul %442, %444, %cst_151 {dimension_numbers = #tpu.dot_dimension_numbers<[1], [1], [0], [0], [0, 0, 1, 0], [], []>} : vector<8x8xbf16>, vector<8x8xbf16>, vector<8x8xf32> -> vector<8x8xf32>
    %cst_152 = arith.constant 0.353553385 : f32
    %448 = vector.broadcast %cst_152 : f32 to vector<8x8xf32>
    %449 = arith.mulf %447, %448 : vector<8x8xf32>
    %450 = arith.addf %449, %44 : vector<8x8xf32>
    %cst_153 = arith.constant dense<0xFF800000> : vector<8xf32>
    %451 = vector.multi_reduction <maximumf>, %450, %cst_153 [1] : vector<8x8xf32> to vector<8xf32>
    %452 = vector.shape_cast %451 : vector<8xf32> to vector<8x1xf32>
    %453 = vector.broadcast %452 : vector<8x1xf32> to vector<8x8xf32>
    %454 = arith.subf %450, %453 : vector<8x8xf32>
    %455 = math.exp %454 : vector<8x8xf32>
    %cst_154 = arith.constant dense<0.000000e+00> : vector<8xf32>
    %456 = vector.multi_reduction <add>, %455, %cst_154 [1] : vector<8x8xf32> to vector<8xf32>
    %457 = vector.shape_cast %456 : vector<8xf32> to vector<8x1xf32>
    %458 = tpu.reciprocal %457 {approx = true} : vector<8x1xf32> -> vector<8x1xf32>
    %459 = vector.broadcast %458 : vector<8x1xf32> to vector<8x8xf32>
    %460 = arith.mulf %455, %459 : vector<8x8xf32>
    %461 = arith.truncf %460 : vector<8x8xf32> to vector<8x8xbf16>
    %cst_155 = arith.constant dense<0.000000e+00> : vector<8x8xf32>
    %462 = tpu.matmul %461, %446, %cst_155 {dimension_numbers = #tpu.dot_dimension_numbers<[1], [0], [0], [1], [0, 0, 1, 1], [], []>} : vector<8x8xbf16>, vector<8x8xbf16>, vector<8x8xf32> -> vector<8x8xf32>
    %463 = arith.truncf %462 : vector<8x8xf32> to vector<8x8xbf16>
    %464 = vector.extract_strided_slice %355 {offsets = [24, 0], sizes = [8, 32], strides = [1, 1]} : vector<32x32xbf16> to vector<8x32xbf16>
    %cst_156 = arith.constant dense<0.000000e+00> : vector<8x32xf32>
    %465 = tpu.matmul %463, %464, %cst_156 {dimension_numbers = #tpu.dot_dimension_numbers<[1], [0], [0], [1], [0, 0, 1, 1], [], []>} : vector<8x8xbf16>, vector<8x32xbf16>, vector<8x32xf32> -> vector<8x32xf32>
    %466 = arith.addf %440, %465 : vector<8x32xf32>
    %cst_157 = arith.constant 0.000000e+00 : f32
    %467 = vector.broadcast %cst_157 : f32 to vector<8x32xf32>
    %468 = vector.extract_strided_slice %361 {offsets = [8, 0], sizes = [8, 8], strides = [1, 1]} : vector<16x128xf32> to vector<8x8xf32>
    %469 = arith.truncf %468 : vector<8x8xf32> to vector<8x8xbf16>
    %470 = vector.extract_strided_slice %361 {offsets = [8, 32], sizes = [8, 8], strides = [1, 1]} : vector<16x128xf32> to vector<8x8xf32>
    %471 = arith.truncf %470 : vector<8x8xf32> to vector<8x8xbf16>
    %472 = vector.extract_strided_slice %361 {offsets = [8, 64], sizes = [8, 8], strides = [1, 1]} : vector<16x128xf32> to vector<8x8xf32>
    %473 = arith.truncf %472 : vector<8x8xf32> to vector<8x8xbf16>
    %cst_158 = arith.constant dense<0.000000e+00> : vector<8x8xf32>
    %474 = tpu.matmul %469, %471, %cst_158 {dimension_numbers = #tpu.dot_dimension_numbers<[1], [1], [0], [0], [0, 0, 1, 0], [], []>} : vector<8x8xbf16>, vector<8x8xbf16>, vector<8x8xf32> -> vector<8x8xf32>
    %cst_159 = arith.constant 0.353553385 : f32
    %475 = vector.broadcast %cst_159 : f32 to vector<8x8xf32>
    %476 = arith.mulf %474, %475 : vector<8x8xf32>
    %477 = arith.addf %476, %47 : vector<8x8xf32>
    %cst_160 = arith.constant dense<0xFF800000> : vector<8xf32>
    %478 = vector.multi_reduction <maximumf>, %477, %cst_160 [1] : vector<8x8xf32> to vector<8xf32>
    %479 = vector.shape_cast %478 : vector<8xf32> to vector<8x1xf32>
    %480 = vector.broadcast %479 : vector<8x1xf32> to vector<8x8xf32>
    %481 = arith.subf %477, %480 : vector<8x8xf32>
    %482 = math.exp %481 : vector<8x8xf32>
    %cst_161 = arith.constant dense<0.000000e+00> : vector<8xf32>
    %483 = vector.multi_reduction <add>, %482, %cst_161 [1] : vector<8x8xf32> to vector<8xf32>
    %484 = vector.shape_cast %483 : vector<8xf32> to vector<8x1xf32>
    %485 = tpu.reciprocal %484 {approx = true} : vector<8x1xf32> -> vector<8x1xf32>
    %486 = vector.broadcast %485 : vector<8x1xf32> to vector<8x8xf32>
    %487 = arith.mulf %482, %486 : vector<8x8xf32>
    %488 = arith.truncf %487 : vector<8x8xf32> to vector<8x8xbf16>
    %cst_162 = arith.constant dense<0.000000e+00> : vector<8x8xf32>
    %489 = tpu.matmul %488, %473, %cst_162 {dimension_numbers = #tpu.dot_dimension_numbers<[1], [0], [0], [1], [0, 0, 1, 1], [], []>} : vector<8x8xbf16>, vector<8x8xbf16>, vector<8x8xf32> -> vector<8x8xf32>
    %490 = arith.truncf %489 : vector<8x8xf32> to vector<8x8xbf16>
    %491 = vector.extract_strided_slice %355 {offsets = [0, 0], sizes = [8, 32], strides = [1, 1]} : vector<32x32xbf16> to vector<8x32xbf16>
    %cst_163 = arith.constant dense<0.000000e+00> : vector<8x32xf32>
    %492 = tpu.matmul %490, %491, %cst_163 {dimension_numbers = #tpu.dot_dimension_numbers<[1], [0], [0], [1], [0, 0, 1, 1], [], []>} : vector<8x8xbf16>, vector<8x32xbf16>, vector<8x32xf32> -> vector<8x32xf32>
    %493 = arith.addf %467, %492 : vector<8x32xf32>
    %494 = vector.extract_strided_slice %361 {offsets = [8, 8], sizes = [8, 8], strides = [1, 1]} : vector<16x128xf32> to vector<8x8xf32>
    %495 = arith.truncf %494 : vector<8x8xf32> to vector<8x8xbf16>
    %496 = vector.extract_strided_slice %361 {offsets = [8, 40], sizes = [8, 8], strides = [1, 1]} : vector<16x128xf32> to vector<8x8xf32>
    %497 = arith.truncf %496 : vector<8x8xf32> to vector<8x8xbf16>
    %498 = vector.extract_strided_slice %361 {offsets = [8, 72], sizes = [8, 8], strides = [1, 1]} : vector<16x128xf32> to vector<8x8xf32>
    %499 = arith.truncf %498 : vector<8x8xf32> to vector<8x8xbf16>
    %cst_164 = arith.constant dense<0.000000e+00> : vector<8x8xf32>
    %500 = tpu.matmul %495, %497, %cst_164 {dimension_numbers = #tpu.dot_dimension_numbers<[1], [1], [0], [0], [0, 0, 1, 0], [], []>} : vector<8x8xbf16>, vector<8x8xbf16>, vector<8x8xf32> -> vector<8x8xf32>
    %cst_165 = arith.constant 0.353553385 : f32
    %501 = vector.broadcast %cst_165 : f32 to vector<8x8xf32>
    %502 = arith.mulf %500, %501 : vector<8x8xf32>
    %503 = arith.addf %502, %47 : vector<8x8xf32>
    %cst_166 = arith.constant dense<0xFF800000> : vector<8xf32>
    %504 = vector.multi_reduction <maximumf>, %503, %cst_166 [1] : vector<8x8xf32> to vector<8xf32>
    %505 = vector.shape_cast %504 : vector<8xf32> to vector<8x1xf32>
    %506 = vector.broadcast %505 : vector<8x1xf32> to vector<8x8xf32>
    %507 = arith.subf %503, %506 : vector<8x8xf32>
    %508 = math.exp %507 : vector<8x8xf32>
    %cst_167 = arith.constant dense<0.000000e+00> : vector<8xf32>
    %509 = vector.multi_reduction <add>, %508, %cst_167 [1] : vector<8x8xf32> to vector<8xf32>
    %510 = vector.shape_cast %509 : vector<8xf32> to vector<8x1xf32>
    %511 = tpu.reciprocal %510 {approx = true} : vector<8x1xf32> -> vector<8x1xf32>
    %512 = vector.broadcast %511 : vector<8x1xf32> to vector<8x8xf32>
    %513 = arith.mulf %508, %512 : vector<8x8xf32>
    %514 = arith.truncf %513 : vector<8x8xf32> to vector<8x8xbf16>
    %cst_168 = arith.constant dense<0.000000e+00> : vector<8x8xf32>
    %515 = tpu.matmul %514, %499, %cst_168 {dimension_numbers = #tpu.dot_dimension_numbers<[1], [0], [0], [1], [0, 0, 1, 1], [], []>} : vector<8x8xbf16>, vector<8x8xbf16>, vector<8x8xf32> -> vector<8x8xf32>
    %516 = arith.truncf %515 : vector<8x8xf32> to vector<8x8xbf16>
    %517 = vector.extract_strided_slice %355 {offsets = [8, 0], sizes = [8, 32], strides = [1, 1]} : vector<32x32xbf16> to vector<8x32xbf16>
    %cst_169 = arith.constant dense<0.000000e+00> : vector<8x32xf32>
    %518 = tpu.matmul %516, %517, %cst_169 {dimension_numbers = #tpu.dot_dimension_numbers<[1], [0], [0], [1], [0, 0, 1, 1], [], []>} : vector<8x8xbf16>, vector<8x32xbf16>, vector<8x32xf32> -> vector<8x32xf32>
    %519 = arith.addf %493, %518 : vector<8x32xf32>
    %520 = vector.extract_strided_slice %361 {offsets = [8, 16], sizes = [8, 8], strides = [1, 1]} : vector<16x128xf32> to vector<8x8xf32>
    %521 = arith.truncf %520 : vector<8x8xf32> to vector<8x8xbf16>
    %522 = vector.extract_strided_slice %361 {offsets = [8, 48], sizes = [8, 8], strides = [1, 1]} : vector<16x128xf32> to vector<8x8xf32>
    %523 = arith.truncf %522 : vector<8x8xf32> to vector<8x8xbf16>
    %524 = vector.extract_strided_slice %361 {offsets = [8, 80], sizes = [8, 8], strides = [1, 1]} : vector<16x128xf32> to vector<8x8xf32>
    %525 = arith.truncf %524 : vector<8x8xf32> to vector<8x8xbf16>
    %cst_170 = arith.constant dense<0.000000e+00> : vector<8x8xf32>
    %526 = tpu.matmul %521, %523, %cst_170 {dimension_numbers = #tpu.dot_dimension_numbers<[1], [1], [0], [0], [0, 0, 1, 0], [], []>} : vector<8x8xbf16>, vector<8x8xbf16>, vector<8x8xf32> -> vector<8x8xf32>
    %cst_171 = arith.constant 0.353553385 : f32
    %527 = vector.broadcast %cst_171 : f32 to vector<8x8xf32>
    %528 = arith.mulf %526, %527 : vector<8x8xf32>
    %529 = arith.addf %528, %47 : vector<8x8xf32>
    %cst_172 = arith.constant dense<0xFF800000> : vector<8xf32>
    %530 = vector.multi_reduction <maximumf>, %529, %cst_172 [1] : vector<8x8xf32> to vector<8xf32>
    %531 = vector.shape_cast %530 : vector<8xf32> to vector<8x1xf32>
    %532 = vector.broadcast %531 : vector<8x1xf32> to vector<8x8xf32>
    %533 = arith.subf %529, %532 : vector<8x8xf32>
    %534 = math.exp %533 : vector<8x8xf32>
    %cst_173 = arith.constant dense<0.000000e+00> : vector<8xf32>
    %535 = vector.multi_reduction <add>, %534, %cst_173 [1] : vector<8x8xf32> to vector<8xf32>
    %536 = vector.shape_cast %535 : vector<8xf32> to vector<8x1xf32>
    %537 = tpu.reciprocal %536 {approx = true} : vector<8x1xf32> -> vector<8x1xf32>
    %538 = vector.broadcast %537 : vector<8x1xf32> to vector<8x8xf32>
    %539 = arith.mulf %534, %538 : vector<8x8xf32>
    %540 = arith.truncf %539 : vector<8x8xf32> to vector<8x8xbf16>
    %cst_174 = arith.constant dense<0.000000e+00> : vector<8x8xf32>
    %541 = tpu.matmul %540, %525, %cst_174 {dimension_numbers = #tpu.dot_dimension_numbers<[1], [0], [0], [1], [0, 0, 1, 1], [], []>} : vector<8x8xbf16>, vector<8x8xbf16>, vector<8x8xf32> -> vector<8x8xf32>
    %542 = arith.truncf %541 : vector<8x8xf32> to vector<8x8xbf16>
    %543 = vector.extract_strided_slice %355 {offsets = [16, 0], sizes = [8, 32], strides = [1, 1]} : vector<32x32xbf16> to vector<8x32xbf16>
    %cst_175 = arith.constant dense<0.000000e+00> : vector<8x32xf32>
    %544 = tpu.matmul %542, %543, %cst_175 {dimension_numbers = #tpu.dot_dimension_numbers<[1], [0], [0], [1], [0, 0, 1, 1], [], []>} : vector<8x8xbf16>, vector<8x32xbf16>, vector<8x32xf32> -> vector<8x32xf32>
    %545 = arith.addf %519, %544 : vector<8x32xf32>
    %546 = vector.extract_strided_slice %361 {offsets = [8, 24], sizes = [8, 8], strides = [1, 1]} : vector<16x128xf32> to vector<8x8xf32>
    %547 = arith.truncf %546 : vector<8x8xf32> to vector<8x8xbf16>
    %548 = vector.extract_strided_slice %361 {offsets = [8, 56], sizes = [8, 8], strides = [1, 1]} : vector<16x128xf32> to vector<8x8xf32>
    %549 = arith.truncf %548 : vector<8x8xf32> to vector<8x8xbf16>
    %550 = vector.extract_strided_slice %361 {offsets = [8, 88], sizes = [8, 8], strides = [1, 1]} : vector<16x128xf32> to vector<8x8xf32>
    %551 = arith.truncf %550 : vector<8x8xf32> to vector<8x8xbf16>
    %cst_176 = arith.constant dense<0.000000e+00> : vector<8x8xf32>
    %552 = tpu.matmul %547, %549, %cst_176 {dimension_numbers = #tpu.dot_dimension_numbers<[1], [1], [0], [0], [0, 0, 1, 0], [], []>} : vector<8x8xbf16>, vector<8x8xbf16>, vector<8x8xf32> -> vector<8x8xf32>
    %cst_177 = arith.constant 0.353553385 : f32
    %553 = vector.broadcast %cst_177 : f32 to vector<8x8xf32>
    %554 = arith.mulf %552, %553 : vector<8x8xf32>
    %555 = arith.addf %554, %47 : vector<8x8xf32>
    %cst_178 = arith.constant dense<0xFF800000> : vector<8xf32>
    %556 = vector.multi_reduction <maximumf>, %555, %cst_178 [1] : vector<8x8xf32> to vector<8xf32>
    %557 = vector.shape_cast %556 : vector<8xf32> to vector<8x1xf32>
    %558 = vector.broadcast %557 : vector<8x1xf32> to vector<8x8xf32>
    %559 = arith.subf %555, %558 : vector<8x8xf32>
    %560 = math.exp %559 : vector<8x8xf32>
    %cst_179 = arith.constant dense<0.000000e+00> : vector<8xf32>
    %561 = vector.multi_reduction <add>, %560, %cst_179 [1] : vector<8x8xf32> to vector<8xf32>
    %562 = vector.shape_cast %561 : vector<8xf32> to vector<8x1xf32>
    %563 = tpu.reciprocal %562 {approx = true} : vector<8x1xf32> -> vector<8x1xf32>
    %564 = vector.broadcast %563 : vector<8x1xf32> to vector<8x8xf32>
    %565 = arith.mulf %560, %564 : vector<8x8xf32>
    %566 = arith.truncf %565 : vector<8x8xf32> to vector<8x8xbf16>
    %cst_180 = arith.constant dense<0.000000e+00> : vector<8x8xf32>
    %567 = tpu.matmul %566, %551, %cst_180 {dimension_numbers = #tpu.dot_dimension_numbers<[1], [0], [0], [1], [0, 0, 1, 1], [], []>} : vector<8x8xbf16>, vector<8x8xbf16>, vector<8x8xf32> -> vector<8x8xf32>
    %568 = arith.truncf %567 : vector<8x8xf32> to vector<8x8xbf16>
    %569 = vector.extract_strided_slice %355 {offsets = [24, 0], sizes = [8, 32], strides = [1, 1]} : vector<32x32xbf16> to vector<8x32xbf16>
    %cst_181 = arith.constant dense<0.000000e+00> : vector<8x32xf32>
    %570 = tpu.matmul %568, %569, %cst_181 {dimension_numbers = #tpu.dot_dimension_numbers<[1], [0], [0], [1], [0, 0, 1, 1], [], []>} : vector<8x8xbf16>, vector<8x32xbf16>, vector<8x32xf32> -> vector<8x32xf32>
    %571 = arith.addf %545, %570 : vector<8x32xf32>
    %572 = tpu.concatenate %466, %571 in 0 : vector<8x32xf32>, vector<8x32xf32> -> vector<16x32xf32>
    %c1_182 = arith.constant 1 : index
    %c0_183 = arith.constant 0 : index
    %c0_184 = arith.constant 0 : index
    %573 = vector.load %arg11[%c1_182, %c0_183, %c0_184] : memref<2x1x32xf32, #tpu.memory_space<vmem>>, vector<1x1x32xf32>
    %574 = vector.shape_cast %573 : vector<1x1x32xf32> to vector<1x32xf32>
    %575 = vector.broadcast %574 : vector<1x32xf32> to vector<16x32xf32>
    %576 = arith.addf %572, %575 : vector<16x32xf32>
    %577 = arith.addf %576, %351 : vector<16x32xf32>
    %c1_185 = arith.constant 1 : index
    %c0_186 = arith.constant 0 : index
    %c0_187 = arith.constant 0 : index
    %578 = vector.load %arg12[%c1_185, %c0_186, %c0_187] : memref<2x1x32xf32, #tpu.memory_space<vmem>>, vector<1x1x32xf32>
    %579 = vector.shape_cast %578 : vector<1x1x32xf32> to vector<1x32xf32>
    %c1_188 = arith.constant 1 : index
    %c0_189 = arith.constant 0 : index
    %c0_190 = arith.constant 0 : index
    %580 = vector.load %arg13[%c1_188, %c0_189, %c0_190] : memref<2x1x32xf32, #tpu.memory_space<vmem>>, vector<1x1x32xf32>
    %581 = vector.shape_cast %580 : vector<1x1x32xf32> to vector<1x32xf32>
    %cst_191 = arith.constant dense<0.000000e+00> : vector<16xf32>
    %582 = vector.multi_reduction <add>, %577, %cst_191 [1] : vector<16x32xf32> to vector<16xf32>
    %583 = vector.shape_cast %582 : vector<16xf32> to vector<16x1xf32>
    %cst_192 = arith.constant 3.200000e+01 : f32
    %584 = vector.broadcast %cst_192 : f32 to vector<16x1xf32>
    %585 = arith.divf %583, %584 : vector<16x1xf32>
    %586 = vector.broadcast %585 : vector<16x1xf32> to vector<16x32xf32>
    %587 = arith.subf %577, %586 : vector<16x32xf32>
    %588 = arith.mulf %587, %587 : vector<16x32xf32>
    %cst_193 = arith.constant dense<0.000000e+00> : vector<16xf32>
    %589 = vector.multi_reduction <add>, %588, %cst_193 [1] : vector<16x32xf32> to vector<16xf32>
    %590 = vector.shape_cast %589 : vector<16xf32> to vector<16x1xf32>
    %cst_194 = arith.constant 3.200000e+01 : f32
    %591 = vector.broadcast %cst_194 : f32 to vector<16x1xf32>
    %592 = arith.divf %590, %591 : vector<16x1xf32>
    %cst_195 = arith.constant 9.99999996E-13 : f32
    %593 = vector.broadcast %cst_195 : f32 to vector<16x1xf32>
    %594 = arith.addf %592, %593 : vector<16x1xf32>
    %595 = math.rsqrt %594 : vector<16x1xf32>
    %596 = vector.broadcast %595 : vector<16x1xf32> to vector<16x32xf32>
    %597 = arith.mulf %587, %596 : vector<16x32xf32>
    %598 = vector.broadcast %579 : vector<1x32xf32> to vector<16x32xf32>
    %599 = arith.mulf %597, %598 : vector<16x32xf32>
    %600 = vector.broadcast %581 : vector<1x32xf32> to vector<16x32xf32>
    %601 = arith.addf %599, %600 : vector<16x32xf32>
    %c1_196 = arith.constant 1 : index
    %c0_197 = arith.constant 0 : index
    %c0_198 = arith.constant 0 : index
    %602 = vector.load %arg14[%c1_196, %c0_197, %c0_198] : memref<2x32x64xbf16, #tpu.memory_space<vmem>>, vector<1x32x64xbf16>
    %603 = vector.shape_cast %602 : vector<1x32x64xbf16> to vector<32x64xbf16>
    %c1_199 = arith.constant 1 : index
    %c0_200 = arith.constant 0 : index
    %c0_201 = arith.constant 0 : index
    %604 = vector.load %arg15[%c1_199, %c0_200, %c0_201] : memref<2x1x64xf32, #tpu.memory_space<vmem>>, vector<1x1x64xf32>
    %605 = vector.shape_cast %604 : vector<1x1x64xf32> to vector<1x64xf32>
    %606 = arith.truncf %601 : vector<16x32xf32> to vector<16x32xbf16>
    %cst_202 = arith.constant dense<0.000000e+00> : vector<16x64xf32>
    %607 = tpu.matmul %606, %603, %cst_202 {dimension_numbers = #tpu.dot_dimension_numbers<[1], [0], [0], [1], [0, 0, 1, 1], [], []>} : vector<16x32xbf16>, vector<32x64xbf16>, vector<16x64xf32> -> vector<16x64xf32>
    %608 = vector.broadcast %605 : vector<1x64xf32> to vector<16x64xf32>
    %609 = arith.addf %607, %608 : vector<16x64xf32>
    %cst_203 = arith.constant 5.000000e-01 : f32
    %610 = vector.broadcast %cst_203 : f32 to vector<16x64xf32>
    %611 = arith.mulf %610, %609 : vector<16x64xf32>
    %cst_204 = arith.constant 4.471500e-02 : f32
    %612 = vector.broadcast %cst_204 : f32 to vector<16x64xf32>
    %613 = arith.mulf %612, %609 : vector<16x64xf32>
    %614 = arith.mulf %613, %609 : vector<16x64xf32>
    %615 = arith.mulf %614, %609 : vector<16x64xf32>
    %616 = arith.addf %609, %615 : vector<16x64xf32>
    %cst_205 = arith.constant 0.797884583 : f32
    %617 = vector.broadcast %cst_205 : f32 to vector<16x64xf32>
    %618 = arith.mulf %617, %616 : vector<16x64xf32>
    %619 = math.tanh %618 : vector<16x64xf32>
    %cst_206 = arith.constant 1.000000e+00 : f32
    %620 = vector.broadcast %cst_206 : f32 to vector<16x64xf32>
    %621 = arith.addf %620, %619 : vector<16x64xf32>
    %622 = arith.mulf %611, %621 : vector<16x64xf32>
    %c1_207 = arith.constant 1 : index
    %c0_208 = arith.constant 0 : index
    %c0_209 = arith.constant 0 : index
    %623 = vector.load %arg16[%c1_207, %c0_208, %c0_209] : memref<2x64x32xbf16, #tpu.memory_space<vmem>>, vector<1x64x32xbf16>
    %624 = vector.shape_cast %623 : vector<1x64x32xbf16> to vector<64x32xbf16>
    %c1_210 = arith.constant 1 : index
    %c0_211 = arith.constant 0 : index
    %c0_212 = arith.constant 0 : index
    %625 = vector.load %arg17[%c1_210, %c0_211, %c0_212] : memref<2x1x32xf32, #tpu.memory_space<vmem>>, vector<1x1x32xf32>
    %626 = vector.shape_cast %625 : vector<1x1x32xf32> to vector<1x32xf32>
    %627 = arith.truncf %622 : vector<16x64xf32> to vector<16x64xbf16>
    %cst_213 = arith.constant dense<0.000000e+00> : vector<16x32xf32>
    %628 = tpu.matmul %627, %624, %cst_213 {dimension_numbers = #tpu.dot_dimension_numbers<[1], [0], [0], [1], [0, 0, 1, 1], [], []>} : vector<16x64xbf16>, vector<64x32xbf16>, vector<16x32xf32> -> vector<16x32xf32>
    %629 = vector.broadcast %626 : vector<1x32xf32> to vector<16x32xf32>
    %630 = arith.addf %628, %629 : vector<16x32xf32>
    %631 = arith.addf %630, %601 : vector<16x32xf32>
    %c1_214 = arith.constant 1 : index
    %c0_215 = arith.constant 0 : index
    %c0_216 = arith.constant 0 : index
    %632 = vector.load %arg18[%c1_214, %c0_215, %c0_216] : memref<2x1x32xf32, #tpu.memory_space<vmem>>, vector<1x1x32xf32>
    %633 = vector.shape_cast %632 : vector<1x1x32xf32> to vector<1x32xf32>
    %c1_217 = arith.constant 1 : index
    %c0_218 = arith.constant 0 : index
    %c0_219 = arith.constant 0 : index
    %634 = vector.load %arg19[%c1_217, %c0_218, %c0_219] : memref<2x1x32xf32, #tpu.memory_space<vmem>>, vector<1x1x32xf32>
    %635 = vector.shape_cast %634 : vector<1x1x32xf32> to vector<1x32xf32>
    %cst_220 = arith.constant dense<0.000000e+00> : vector<16xf32>
    %636 = vector.multi_reduction <add>, %631, %cst_220 [1] : vector<16x32xf32> to vector<16xf32>
    %637 = vector.shape_cast %636 : vector<16xf32> to vector<16x1xf32>
    %cst_221 = arith.constant 3.200000e+01 : f32
    %638 = vector.broadcast %cst_221 : f32 to vector<16x1xf32>
    %639 = arith.divf %637, %638 : vector<16x1xf32>
    %640 = vector.broadcast %639 : vector<16x1xf32> to vector<16x32xf32>
    %641 = arith.subf %631, %640 : vector<16x32xf32>
    %642 = arith.mulf %641, %641 : vector<16x32xf32>
    %cst_222 = arith.constant dense<0.000000e+00> : vector<16xf32>
    %643 = vector.multi_reduction <add>, %642, %cst_222 [1] : vector<16x32xf32> to vector<16xf32>
    %644 = vector.shape_cast %643 : vector<16xf32> to vector<16x1xf32>
    %cst_223 = arith.constant 3.200000e+01 : f32
    %645 = vector.broadcast %cst_223 : f32 to vector<16x1xf32>
    %646 = arith.divf %644, %645 : vector<16x1xf32>
    %cst_224 = arith.constant 9.99999996E-13 : f32
    %647 = vector.broadcast %cst_224 : f32 to vector<16x1xf32>
    %648 = arith.addf %646, %647 : vector<16x1xf32>
    %649 = math.rsqrt %648 : vector<16x1xf32>
    %650 = vector.broadcast %649 : vector<16x1xf32> to vector<16x32xf32>
    %651 = arith.mulf %641, %650 : vector<16x32xf32>
    %652 = vector.broadcast %633 : vector<1x32xf32> to vector<16x32xf32>
    %653 = arith.mulf %651, %652 : vector<16x32xf32>
    %654 = vector.broadcast %635 : vector<1x32xf32> to vector<16x32xf32>
    %655 = arith.addf %653, %654 : vector<16x32xf32>
    %c0_225 = arith.constant 0 : index
    %c0_226 = arith.constant 0 : index
    %656 = vector.load %arg20[%c0_225, %c0_226] : memref<32x128xbf16, #tpu.memory_space<vmem>>, vector<32x128xbf16>
    %c0_227 = arith.constant 0 : index
    %c0_228 = arith.constant 0 : index
    %657 = vector.load %arg21[%c0_227, %c0_228] : memref<1x128xf32, #tpu.memory_space<vmem>>, vector<1x128xf32>
    %658 = arith.truncf %655 : vector<16x32xf32> to vector<16x32xbf16>
    %cst_229 = arith.constant dense<0.000000e+00> : vector<16x128xf32>
    %659 = tpu.matmul %658, %656, %cst_229 {dimension_numbers = #tpu.dot_dimension_numbers<[1], [0], [0], [1], [0, 0, 1, 1], [], []>} : vector<16x32xbf16>, vector<32x128xbf16>, vector<16x128xf32> -> vector<16x128xf32>
    %660 = vector.broadcast %657 : vector<1x128xf32> to vector<16x128xf32>
    %661 = arith.addf %659, %660 : vector<16x128xf32>
    %c0_230 = arith.constant 0 : index
    %c0_231 = arith.constant 0 : index
    %662 = vector.load %arg22[%c0_230, %c0_231] : memref<16x128xf32, #tpu.memory_space<vmem>>, vector<16x128xf32>
    tpu.vector_store %arg22[%c0_230, %c0_231], %661 {strides = array<i32>} : memref<16x128xf32, #tpu.memory_space<vmem>>, vector<16x128xf32>,
    return
  }
  func.func @transform_0(%arg0: i32) -> (i32, i32) {
    %c0_i32 = arith.constant 0 : i32
    %c0_i32_0 = arith.constant 0 : i32
    %c0_i32_1 = arith.constant 0 : i32
    return %c0_i32, %c0_i32_0 : i32, i32
  }
  func.func @transform_1(%arg0: i32) -> (i32, i32) {
    %c0_i32 = arith.constant 0 : i32
    %c0_i32_0 = arith.constant 0 : i32
    %c0_i32_1 = arith.constant 0 : i32
    return %c0_i32, %c0_i32_0 : i32, i32
  }
  func.func @transform_2(%arg0: i32) -> (i32, i32) {
    %c0_i32 = arith.constant 0 : i32
    %c0_i32_0 = arith.constant 0 : i32
    %c0_i32_1 = arith.constant 0 : i32
    return %c0_i32, %c0_i32_0 : i32, i32
  }
  func.func @transform_3(%arg0: i32) -> (i32, i32) {
    %c0_i32 = arith.constant 0 : i32
    %c0_i32_0 = arith.constant 0 : i32
    %c0_i32_1 = arith.constant 0 : i32
    return %c0_i32, %c0_i32_0 : i32, i32
  }
  func.func @transform_4(%arg0: i32) -> (i32, i32) {
    %c0_i32 = arith.constant 0 : i32
    %c0_i32_0 = arith.constant 0 : i32
    %c0_i32_1 = arith.constant 0 : i32
    return %c0_i32, %c0_i32_0 : i32, i32
  }
  func.func @transform_5(%arg0: i32) -> (i32, i32) {
    %c0_i32 = arith.constant 0 : i32
    %c0_i32_0 = arith.constant 0 : i32
    %c0_i32_1 = arith.constant 0 : i32
    return %c0_i32, %c0_i32_0 : i32, i32
  }
  func.func @transform_6(%arg0: i32) -> (i32, i32) {
    %c0_i32 = arith.constant 0 : i32
    %c0_i32_0 = arith.constant 0 : i32
    %c0_i32_1 = arith.constant 0 : i32
    return %c0_i32, %c0_i32_0 : i32, i32
  }
  func.func @transform_7(%arg0: i32) -> (i32, i32, i32) {
    %c0_i32 = arith.constant 0 : i32
    %c0_i32_0 = arith.constant 0 : i32
    %c0_i32_1 = arith.constant 0 : i32
    %c0_i32_2 = arith.constant 0 : i32
    return %c0_i32, %c0_i32_0, %c0_i32_1 : i32, i32, i32
  }
  func.func @transform_8(%arg0: i32) -> (i32, i32, i32) {
    %c0_i32 = arith.constant 0 : i32
    %c0_i32_0 = arith.constant 0 : i32
    %c0_i32_1 = arith.constant 0 : i32
    %c0_i32_2 = arith.constant 0 : i32
    return %c0_i32, %c0_i32_0, %c0_i32_1 : i32, i32, i32
  }
  func.func @transform_9(%arg0: i32) -> (i32, i32, i32) {
    %c0_i32 = arith.constant 0 : i32
    %c0_i32_0 = arith.constant 0 : i32
    %c0_i32_1 = arith.constant 0 : i32
    %c0_i32_2 = arith.constant 0 : i32
    return %c0_i32, %c0_i32_0, %c0_i32_1 : i32, i32, i32
  }
  func.func @transform_10(%arg0: i32) -> (i32, i32, i32) {
    %c0_i32 = arith.constant 0 : i32
    %c0_i32_0 = arith.constant 0 : i32
    %c0_i32_1 = arith.constant 0 : i32
    %c0_i32_2 = arith.constant 0 : i32
    return %c0_i32, %c0_i32_0, %c0_i32_1 : i32, i32, i32
  }
  func.func @transform_11(%arg0: i32) -> (i32, i32, i32) {
    %c0_i32 = arith.constant 0 : i32
    %c0_i32_0 = arith.constant 0 : i32
    %c0_i32_1 = arith.constant 0 : i32
    %c0_i32_2 = arith.constant 0 : i32
    return %c0_i32, %c0_i32_0, %c0_i32_1 : i32, i32, i32
  }
  func.func @transform_12(%arg0: i32) -> (i32, i32, i32) {
    %c0_i32 = arith.constant 0 : i32
    %c0_i32_0 = arith.constant 0 : i32
    %c0_i32_1 = arith.constant 0 : i32
    %c0_i32_2 = arith.constant 0 : i32
    return %c0_i32, %c0_i32_0, %c0_i32_1 : i32, i32, i32
  }
  func.func @transform_13(%arg0: i32) -> (i32, i32, i32) {
    %c0_i32 = arith.constant 0 : i32
    %c0_i32_0 = arith.constant 0 : i32
    %c0_i32_1 = arith.constant 0 : i32
    %c0_i32_2 = arith.constant 0 : i32
    return %c0_i32, %c0_i32_0, %c0_i32_1 : i32, i32, i32
  }
  func.func @transform_14(%arg0: i32) -> (i32, i32, i32) {
    %c0_i32 = arith.constant 0 : i32
    %c0_i32_0 = arith.constant 0 : i32
    %c0_i32_1 = arith.constant 0 : i32
    %c0_i32_2 = arith.constant 0 : i32
    return %c0_i32, %c0_i32_0, %c0_i32_1 : i32, i32, i32
  }
  func.func @transform_15(%arg0: i32) -> (i32, i32, i32) {
    %c0_i32 = arith.constant 0 : i32
    %c0_i32_0 = arith.constant 0 : i32
    %c0_i32_1 = arith.constant 0 : i32
    %c0_i32_2 = arith.constant 0 : i32
    return %c0_i32, %c0_i32_0, %c0_i32_1 : i32, i32, i32
  }
  func.func @transform_16(%arg0: i32) -> (i32, i32, i32) {
    %c0_i32 = arith.constant 0 : i32
    %c0_i32_0 = arith.constant 0 : i32
    %c0_i32_1 = arith.constant 0 : i32
    %c0_i32_2 = arith.constant 0 : i32
    return %c0_i32, %c0_i32_0, %c0_i32_1 : i32, i32, i32
  }
  func.func @transform_17(%arg0: i32) -> (i32, i32, i32) {
    %c0_i32 = arith.constant 0 : i32
    %c0_i32_0 = arith.constant 0 : i32
    %c0_i32_1 = arith.constant 0 : i32
    %c0_i32_2 = arith.constant 0 : i32
    return %c0_i32, %c0_i32_0, %c0_i32_1 : i32, i32, i32
  }
  func.func @transform_18(%arg0: i32) -> (i32, i32, i32) {
    %c0_i32 = arith.constant 0 : i32
    %c0_i32_0 = arith.constant 0 : i32
    %c0_i32_1 = arith.constant 0 : i32
    %c0_i32_2 = arith.constant 0 : i32
    return %c0_i32, %c0_i32_0, %c0_i32_1 : i32, i32, i32
  }
  func.func @transform_19(%arg0: i32) -> (i32, i32) {
    %c0_i32 = arith.constant 0 : i32
    %c0_i32_0 = arith.constant 0 : i32
    %c0_i32_1 = arith.constant 0 : i32
    return %c0_i32, %c0_i32_0 : i32, i32
  }
  func.func @transform_20(%arg0: i32) -> (i32, i32) {
    %c0_i32 = arith.constant 0 : i32
    %c0_i32_0 = arith.constant 0 : i32
    %c0_i32_1 = arith.constant 0 : i32
    return %c0_i32, %c0_i32_0 : i32, i32
  }
  func.func @transform_21(%arg0: i32) -> (i32, i32) {
    %c0_i32 = arith.constant 0 : i32
    %c0_i32_0 = arith.constant 0 : i32
    %c0_i32_1 = arith.constant 0 : i32
    return %c0_i32, %c0_i32_0 : i32, i32
  }
}

</mosaic_0001>

<llo_original>
// kernel: tpu_custom_call.1
$region0: #{tpu_custom_call.1}
  #allocation0 [shape = 'u32[]', space=smem, size = 0x4, offset = 0x4, fixed_abs, tag = 'smem constant byte address 0x4 - core index']
  #allocation1 [shape = 'u32[144,128]{1,0:T(1,128)}', space=vmem, size = 0x12000, scoped, tag = 'internal scratch']
  %s0 = inlined_call_operand.vmem [shape: s32[16,1], index: 0, kind: input, shape index: {}]
  %s1 = inlined_call_operand.vmem [shape: s32[2,8], index: 1, kind: input, shape index: {}]
  %s2 = inlined_call_operand.vmem [shape: f32[64,32], index: 2, kind: input, shape index: {}]
  %s3 = inlined_call_operand.vmem [shape: f32[16,32], index: 3, kind: input, shape index: {}]
  %s4 = inlined_call_operand.vmem [shape: f32[2,32], index: 4, kind: input, shape index: {}]
  %s5 = inlined_call_operand.vmem [shape: f32[1,32], index: 5, kind: input, shape index: {}]
  %s6 = inlined_call_operand.vmem [shape: f32[1,32], index: 6, kind: input, shape index: {}]
  %s7 = inlined_call_operand.vmem [shape: bf16[2,32,128], index: 7, kind: input, shape index: {}]
  %s8 = inlined_call_operand.vmem [shape: f32[2,1,128], index: 8, kind: input, shape index: {}]
  %s9 = inlined_call_operand.vmem [shape: bf16[2,32,32], index: 9, kind: input, shape index: {}]
  %s10 = inlined_call_operand.vmem [shape: f32[2,1,32], index: 10, kind: input, shape index: {}]
  %s11 = inlined_call_operand.vmem [shape: f32[2,1,32], index: 11, kind: input, shape index: {}]
  %s12 = inlined_call_operand.vmem [shape: f32[2,1,32], index: 12, kind: input, shape index: {}]
  %s13 = inlined_call_operand.vmem [shape: bf16[2,32,64], index: 13, kind: input, shape index: {}]
  %s14 = inlined_call_operand.vmem [shape: f32[2,1,64], index: 14, kind: input, shape index: {}]
  %s15 = inlined_call_operand.vmem [shape: bf16[2,64,32], index: 15, kind: input, shape index: {}]
  %s16 = inlined_call_operand.vmem [shape: f32[2,1,32], index: 16, kind: input, shape index: {}]
  %s17 = inlined_call_operand.vmem [shape: f32[2,1,32], index: 17, kind: input, shape index: {}]
  %s18 = inlined_call_operand.vmem [shape: f32[2,1,32], index: 18, kind: input, shape index: {}]
  %s19 = inlined_call_operand.vmem [shape: bf16[32,128], index: 19, kind: input, shape index: {}]
  %s20 = inlined_call_operand.vmem [shape: f32[1,128], index: 20, kind: input, shape index: {}]
  %s21 = inlined_call_operand.hbm [shape: f32[16,128], index: 21, kind: output, shape index: {}]
  %s22 = sld [smem:[#allocation0]]
  $region94: #{tpu_custom_call.1} parent=0
    _
  %s24 = ssub.s32 1, %s22
  %s25 = scalar_select 0, %s24, %s22
  $region1: #{tpu_custom_call.1} parent=0
    #allocation2 [shape = 'u8[8192]{0}', space=vmem, size = 0x2000, scoped, tag = 'output window, operand 0, single buffered']
    #allocation3 [shape = 's32[1]{0}', space=sflag, size = 0x4, scoped, tag = 'scoped memory for tpu_custom_call.1']
    %26 = vsyncpa [#allocation3], 0
    // Predicated region
    $region2: #{tpu_custom_call.1} parent=1 // pred_check
      _
    $region3: #{tpu_custom_call.1} parent=1 // pred_check_branch
      %28 = sbr.rel (0) target = $region5
    $region4: #{tpu_custom_call.1} parent=1 // pred_region
      _
    $region5: #{tpu_custom_call.1} parent=1 // pred_fallthru
      _
    // Predicated region
    $region6: #{tpu_custom_call.1} parent=1 // pred_check
      _
    $region7: #{tpu_custom_call.1} parent=1 // pred_check_branch
      %30 = sbr.rel (0) target = $region9
    $region8: #{tpu_custom_call.1} parent=1 // pred_region
      _
    $region9: #{tpu_custom_call.1} parent=1 // pred_fallthru
      _
    // Predicated region
    $region10: #{tpu_custom_call.1} parent=1 // pred_check
      _
    $region11: #{tpu_custom_call.1} parent=1 // pred_check_branch
      %32 = sbr.rel (0) target = $region13
    $region12: #{tpu_custom_call.1} parent=1 // pred_region
      _
    $region13: #{tpu_custom_call.1} parent=1 // pred_fallthru
      _
    // Predicated region
    $region14: #{tpu_custom_call.1} parent=1 // pred_check
      _
    $region15: #{tpu_custom_call.1} parent=1 // pred_check_branch
      %34 = sbr.rel (0) target = $region17
    $region16: #{tpu_custom_call.1} parent=1 // pred_region
      _
    $region17: #{tpu_custom_call.1} parent=1 // pred_fallthru
      _
    // Predicated region
    $region18: #{tpu_custom_call.1} parent=1 // pred_check
      _
    $region19: #{tpu_custom_call.1} parent=1 // pred_check_branch
      %36 = sbr.rel (0) target = $region21
    $region20: #{tpu_custom_call.1} parent=1 // pred_region
      _
    $region21: #{tpu_custom_call.1} parent=1 // pred_fallthru
      _
    // Predicated region
    $region22: #{tpu_custom_call.1} parent=1 // pred_check
      _
    $region23: #{tpu_custom_call.1} parent=1 // pred_check_branch
      %38 = sbr.rel (0) target = $region25
    $region24: #{tpu_custom_call.1} parent=1 // pred_region
      _
    $region25: #{tpu_custom_call.1} parent=1 // pred_fallthru
      _
    // Predicated region
    $region26: #{tpu_custom_call.1} parent=1 // pred_check
      _
    $region27: #{tpu_custom_call.1} parent=1 // pred_check_branch
      %40 = sbr.rel (0) target = $region29
    $region28: #{tpu_custom_call.1} parent=1 // pred_region
      _
    $region29: #{tpu_custom_call.1} parent=1 // pred_fallthru
      _
    // Predicated region
    $region30: #{tpu_custom_call.1} parent=1 // pred_check
      _
    $region31: #{tpu_custom_call.1} parent=1 // pred_check_branch
      %42 = sbr.rel (0) target = $region33
    $region32: #{tpu_custom_call.1} parent=1 // pred_region
      _
    $region33: #{tpu_custom_call.1} parent=1 // pred_fallthru
      _
    // Predicated region
    $region34: #{tpu_custom_call.1} parent=1 // pred_check
      _
    $region35: #{tpu_custom_call.1} parent=1 // pred_check_branch
      %44 = sbr.rel (0) target = $region37
    $region36: #{tpu_custom_call.1} parent=1 // pred_region
      _
    $region37: #{tpu_custom_call.1} parent=1 // pred_fallthru
      _
    // Predicated region
    $region38: #{tpu_custom_call.1} parent=1 // pred_check
      _
    $region39: #{tpu_custom_call.1} parent=1 // pred_check_branch
      %46 = sbr.rel (0) target = $region41
    $region40: #{tpu_custom_call.1} parent=1 // pred_region
      _
    $region41: #{tpu_custom_call.1} parent=1 // pred_fallthru
      _
    // Predicated region
    $region42: #{tpu_custom_call.1} parent=1 // pred_check
      _
    $region43: #{tpu_custom_call.1} parent=1 // pred_check_branch
      %48 = sbr.rel (0) target = $region45
    $region44: #{tpu_custom_call.1} parent=1 // pred_region
      _
    $region45: #{tpu_custom_call.1} parent=1 // pred_fallthru
      _
    // Predicated region
    $region46: #{tpu_custom_call.1} parent=1 // pred_check
      _
    $region47: #{tpu_custom_call.1} parent=1 // pred_check_branch
      %50 = sbr.rel (0) target = $region49
    $region48: #{tpu_custom_call.1} parent=1 // pred_region
      _
    $region49: #{tpu_custom_call.1} parent=1 // pred_fallthru
      _
    // Predicated region
    $region50: #{tpu_custom_call.1} parent=1 // pred_check
      _
    $region51: #{tpu_custom_call.1} parent=1 // pred_check_branch
      %52 = sbr.rel (0) target = $region53
    $region52: #{tpu_custom_call.1} parent=1 // pred_region
      _
    $region53: #{tpu_custom_call.1} parent=1 // pred_fallthru
      _
    // Predicated region
    $region54: #{tpu_custom_call.1} parent=1 // pred_check
      _
    $region55: #{tpu_custom_call.1} parent=1 // pred_check_branch
      %54 = sbr.rel (0) target = $region57
    $region56: #{tpu_custom_call.1} parent=1 // pred_region
      _
    $region57: #{tpu_custom_call.1} parent=1 // pred_fallthru
      _
    // Predicated region
    $region58: #{tpu_custom_call.1} parent=1 // pred_check
      _
    $region59: #{tpu_custom_call.1} parent=1 // pred_check_branch
      %56 = sbr.rel (0) target = $region61
    $region60: #{tpu_custom_call.1} parent=1 // pred_region
      _
    $region61: #{tpu_custom_call.1} parent=1 // pred_fallthru
      _
    // Predicated region
    $region62: #{tpu_custom_call.1} parent=1 // pred_check
      _
    $region63: #{tpu_custom_call.1} parent=1 // pred_check_branch
      %58 = sbr.rel (0) target = $region65
    $region64: #{tpu_custom_call.1} parent=1 // pred_region
      _
    $region65: #{tpu_custom_call.1} parent=1 // pred_fallthru
      _
    // Predicated region
    $region66: #{tpu_custom_call.1} parent=1 // pred_check
      _
    $region67: #{tpu_custom_call.1} parent=1 // pred_check_branch
      %60 = sbr.rel (0) target = $region69
    $region68: #{tpu_custom_call.1} parent=1 // pred_region
      _
    $region69: #{tpu_custom_call.1} parent=1 // pred_fallthru
      _
    // Predicated region
    $region70: #{tpu_custom_call.1} parent=1 // pred_check
      _
    $region71: #{tpu_custom_call.1} parent=1 // pred_check_branch
      %62 = sbr.rel (0) target = $region73
    $region72: #{tpu_custom_call.1} parent=1 // pred_region
      _
    $region73: #{tpu_custom_call.1} parent=1 // pred_fallthru
      _
    // Predicated region
    $region74: #{tpu_custom_call.1} parent=1 // pred_check
      _
    $region75: #{tpu_custom_call.1} parent=1 // pred_check_branch
      %64 = sbr.rel (0) target = $region77
    $region76: #{tpu_custom_call.1} parent=1 // pred_region
      _
    $region77: #{tpu_custom_call.1} parent=1 // pred_fallthru
      _
    // Predicated region
    $region78: #{tpu_custom_call.1} parent=1 // pred_check
      _
    $region79: #{tpu_custom_call.1} parent=1 // pred_check_branch
      %66 = sbr.rel (0) target = $region81
    $region80: #{tpu_custom_call.1} parent=1 // pred_region
      _
    $region81: #{tpu_custom_call.1} parent=1 // pred_fallthru
      _
    // Predicated region
    $region82: #{tpu_custom_call.1} parent=1 // pred_check
      _
    $region83: #{tpu_custom_call.1} parent=1 // pred_check_branch
      %68 = sbr.rel (0) target = $region85
    $region84: #{tpu_custom_call.1} parent=1 // pred_region
      _
    $region85: #{tpu_custom_call.1} parent=1 // pred_fallthru
      _
    %v70 = vld [vmem:[%s0] sm:$0xff]
    %v71 = vld [vmem:[%s0 + $0x8] sm:$0xff]
    %v72 = vlaneseq
    %v73 = vand.u32 %v72, 127
    %74 = vset.pattern.permute.xlu0 0
    %75 = vperm.xlu0 %74, %v70
    %v76 = vpop.permute.xlu0 %75
    %77 = vset.pattern.permute.xlu0 0
    %78 = vperm.xlu0 %77, %v71
    %v79 = vpop.permute.xlu0 %78
    %vm80 = vcmp.eq.s32.totalorder %v73, %v76
    %vm81 = vcmp.eq.s32.totalorder %v73, %v79
    %v82 = vsel %vm80, 1, 0
    %v83 = vsel %vm81, 1, 0
    %v84 = vcvt.s32.f32 %v82
    %v85 = vcvt.s32.f32 %v83
    %v86 = vld [vmem:[%s2] sm:$0xff]
    %v87 = vld [vmem:[%s2 + $0x8] sm:$0xff]
    %v88 = vld [vmem:[%s2 + $0x10] sm:$0xff]
    %v89 = vld [vmem:[%s2 + $0x18] sm:$0xff]
    %v90 = vld [vmem:[%s2 + $0x20] sm:$0xff]
    %v91 = vld [vmem:[%s2 + $0x28] sm:$0xff]
    %v92 = vld [vmem:[%s2 + $0x30] sm:$0xff]
    %v93 = vld [vmem:[%s2 + $0x38] sm:$0xff]
    %v94 = vld [vmem:[%s3] sm:$0xff]
    %v95 = vld [vmem:[%s4] sm:$0x1]
    %v96 = vlaneseq
    %v97 = vshrl.u32 %v96, 7
    %v98 = vsub.s32 0, %v97
    %v99 = vrot.slane %v95, %v98
    %v100 = vadd.f32 %v94, %v99
    %vm101 = vcmask 523264
    %v103 = vsel %vm101, %v84, 0
    %v106 = vsel %vm101, %v85, 0
    %108 = vmatprep.subr.mxu0 0.0
    %109 = vmatpush1.msra.mxu0 %v86
    %110 = vmatprep.subr.mxu0 0.0
    %111 = vmatpush1.msra.mxu0 %v87
    %112 = vmatprep.subr.mxu0 0.0
    %113 = vmatpush1.msra.mxu0 %v88
    %114 = vmatprep.subr.mxu0 0.0
    %115 = vmatpush1.msra.mxu0 %v89
    %116 = vmatprep.subr.mxu0 0.0
    %117 = vmatpush1.msra.mxu0 %v90
    %118 = vmatprep.subr.mxu0 0.0
    %119 = vmatpush1.msra.mxu0 %v91
    %120 = vmatprep.subr.mxu0 0.0
    %121 = vmatpush1.msra.mxu0 %v92
    %122 = vmatprep.subr.mxu0 0.0
    %123 = vmatpush1.msra.mxu0 %v93
    %124 = vmatprep.subr.mxu0 0.0
    %125 = vmatpush1.msra.mxu0 0.0
    %126 = vmatprep.subr.mxu0 0.0
    %127 = vmatpush1.msra.mxu0 0.0
    %128 = vmatprep.subr.mxu0 0.0
    %129 = vmatpush1.msra.mxu0 0.0
    %130 = vmatprep.subr.mxu0 0.0
    %131 = vmatpush1.msra.mxu0 0.0
    %132 = vmatprep.subr.mxu0 0.0
    %133 = vmatpush1.msra.mxu0 0.0
    %134 = vmatprep.subr.mxu0 0.0
    %135 = vmatpush1.msra.mxu0 0.0
    %136 = vmatprep.subr.mxu0 0.0
    %137 = vmatpush1.msra.mxu0 0.0
    %138 = vmatprep.subr.mxu0 0.0
    %139 = vmatpush1.msra.mxu0 0.0
    %140 = vmatprep.subr.mxu0 0.0
    %141 = vmatpush1.msra.mxu0 0.0
    %142 = vmatprep.subr.mxu0 0.0
    %143 = vmatpush1.msra.mxu0 0.0
    %144 = vmatprep.subr.mxu0 0.0
    %145 = vmatpush1.msra.mxu0 0.0
    %146 = vmatprep.subr.mxu0 0.0
    %147 = vmatpush1.msra.mxu0 0.0
    %148 = vmatprep.subr.mxu0 0.0
    %149 = vmatpush1.msra.mxu0 0.0
    %150 = vmatprep.subr.mxu0 0.0
    %151 = vmatpush1.msra.mxu0 0.0
    %152 = vmatprep.subr.mxu0 0.0
    %153 = vmatpush1.msra.mxu0 0.0
    %154 = vmatprep.subr.mxu0 0.0
    %155 = vmatpush1.msra.mxu0 0.0
    %156 = vmatprep.subr.mxu0 0.0
    %157 = vmatpush1.msra.mxu0 0.0
    %158 = vmatprep.subr.mxu0 0.0
    %159 = vmatpush1.msra.mxu0 0.0
    %160 = vmatprep.subr.mxu0 0.0
    %161 = vmatpush1.msra.mxu0 0.0
    %162 = vmatprep.subr.mxu0 0.0
    %163 = vmatpush1.msra.mxu0 0.0
    %164 = vmatprep.subr.mxu0 0.0
    %165 = vmatpush1.msra.mxu0 0.0
    %166 = vmatprep.subr.mxu0 0.0
    %167 = vmatpush1.msra.mxu0 0.0
    %168 = vmatprep.subr.mxu0 0.0
    %169 = vmatpush1.msra.mxu0 0.0
    %170 = vmatprep.subr.mxu0 0.0
    %171 = vmatpush1.msra.mxu0 0.0
    %172 = vmatprep.mubr.f32.mxu0 0.0
    %173 = vmatmul.mubr.f32.gmra.mrb[0].mxu0 %v103
    %v174 = vpop.f32.mrb[0].mxu0
    %v175 = vadd.f32 %v100, %v174
    %v176 = vpop.f32.mrb[0].mxu0
    %177 = vmatprep.mubr.f32.mxu0 0.0
    %178 = vmatmul.mubr.f32.gmra.mrb[0].mxu0 %v106
    %v179 = vpop.f32.mrb[0].mxu0
    %v180 = vadd.f32 %v100, %v179
    %v181 = vpop.f32.mrb[0].mxu0
    %182 = vdwg.mxu0
    %v183 = vld [vmem:[%s5] sm:$0x1]
    %v184 = vld [vmem:[%s6] sm:$0x1]
    %vm185 = vcmask 261120
    %v186 = vsel %vm185, %v175, 0.0
    %187 = vadd.xlane.f32.xlu0 %v186
    %v188 = vpop.xlane.xlu0 %187
    %v189 = vsel %vm185, %v180, 0.0
    %190 = vadd.xlane.f32.xlu0 %v189
    %v191 = vpop.xlane.xlu0 %190
    %v192 = vrcp.pop 32.0
    %v193 = vmul.f32 %v188, %v192
    %v194 = vmul.f32 %v191, %v192
    %v195 = vsub.f32 %v175, %v193
    %v196 = vsub.f32 %v180, %v194
    %v197 = vmul.f32 %v195, %v195
    %v198 = vmul.f32 %v196, %v196
    %v199 = vsel %vm185, %v197, 0.0
    %200 = vadd.xlane.f32.xlu0 %v199
    %v201 = vpop.xlane.xlu0 %200
    %v202 = vsel %vm185, %v198, 0.0
    %203 = vadd.xlane.f32.xlu0 %v202
    %v204 = vpop.xlane.xlu0 %203
    %v205 = vmul.f32 %v201, %v192
    %v206 = vmul.f32 %v204, %v192
    %v207 = vadd.f32 %v205, 1e-12
    %v208 = vadd.f32 %v206, 1e-12
    %v209 = vrsqrt.pop %v207
    %v210 = vrsqrt.pop %v208
    %v211 = vmul.f32 %v195, %v209
    %v212 = vmul.f32 %v196, %v210
    %v214 = vlaneseq
    %v215 = vshrl.u32 %v214, 7
    %v216 = vsub.s32 0, %v215
    %v217 = vrot.slane %v183, %v216
    %v219 = vmul.f32 %v211, %v217
    %v220 = vmul.f32 %v212, %v217
    %v222 = vlaneseq
    %v223 = vshrl.u32 %v222, 7
    %v224 = vsub.s32 0, %v223
    %v225 = vrot.slane %v184, %v224
    %v227 = vadd.f32 %v219, %v225
    %v228 = vadd.f32 %v220, %v225
    %v229 = vld [vmem:[%s1] sm:$0x3]
    %v230 = vcvt.s32.f32 %v229
    %v231 = vsub.f32 1.0, %v230
    %v232 = vmul.f32 %v231, -1e+09
    %v233 = vlaneseq
    %v234 = vshrl.u32 %v233, 7
    %v235 = vsub.s32 0, %v234
    %v236 = vrot.slane %v232, %v235
    %v237 = vlaneseq
    %v238 = vshrl.u32 %v237, 7
    %v239 = vsub.s32 1, %v238
    %v240 = vrot.slane %v232, %v239
    %v241 = vld [vmem:[%s7] sm:$0xf]
    %v242 = vld [vmem:[%s7 + $0x4] sm:$0xf]
    %v243 = vld [vmem:[%s7 + $0x8] sm:$0xf]
    %v244 = vld [vmem:[%s7 + $0xc] sm:$0xf]
    %v245 = vld [vmem:[%s9] sm:$0xf]
    %v246 = vld [vmem:[%s9 + $0x4] sm:$0xf]
    %v247 = vld [vmem:[%s9 + $0x8] sm:$0xf]
    %v248 = vld [vmem:[%s9 + $0xc] sm:$0xf]
    %v249 = vld [vmem:[%s8] sm:$0x1]
    %v250 = vpack.c.bf16 %v228, %v227
    %v252 = vlaneseq
    %v253 = vshrl.u32 %v252, 7
    %v254 = vsub.s32 0, %v253
    %v255 = vrot.slane %v249, %v254
    %v261 = vunpack.c.l.b16 %v241
    %v262 = vunpack.c.l.b16 %v242
    %v263 = vunpack.c.l.b16 %v243
    %v264 = vunpack.c.l.b16 %v244
    %v265 = vpack.c.b16 %v262, %v261
    %v266 = vpack.c.b16 %v264, %v263
    %v270 = vsel %vm185, %v250, 0
    %272 = vmatprep.subr.bf16.mxu0 0
    %273 = vmatpush1.bf16.msra.mxu0 %v265
    %274 = vmatprep.subr.bf16.mxu0 0
    %275 = vmatpush1.bf16.msra.mxu0 %v266
    %276 = vmatprep.subr.bf16.mxu0 0
    %277 = vmatpush1.bf16.msra.mxu0 0
    %278 = vmatprep.subr.bf16.mxu0 0
    %279 = vmatpush1.bf16.msra.mxu0 0
    %280 = vmatprep.subr.bf16.mxu0 0
    %281 = vmatpush1.bf16.msra.mxu0 0
    %282 = vmatprep.subr.bf16.mxu0 0
    %283 = vmatpush1.bf16.msra.mxu0 0
    %284 = vmatprep.subr.bf16.mxu0 0
    %285 = vmatpush1.bf16.msra.mxu0 0
    %286 = vmatprep.subr.bf16.mxu0 0
    %287 = vmatpush1.bf16.msra.mxu0 0
    %288 = vmatprep.subr.bf16.mxu0 0
    %289 = vmatpush1.bf16.msra.mxu0 0
    %290 = vmatprep.subr.bf16.mxu0 0
    %291 = vmatpush1.bf16.msra.mxu0 0
    %292 = vmatprep.subr.bf16.mxu0 0
    %293 = vmatpush1.bf16.msra.mxu0 0
    %294 = vmatprep.subr.bf16.mxu0 0
    %295 = vmatpush1.bf16.msra.mxu0 0
    %296 = vmatprep.subr.bf16.mxu0 0
    %297 = vmatpush1.bf16.msra.mxu0 0
    %298 = vmatprep.subr.bf16.mxu0 0
    %299 = vmatpush1.bf16.msra.mxu0 0
    %300 = vmatprep.subr.bf16.mxu0 0
    %301 = vmatpush1.bf16.msra.mxu0 0
    %302 = vmatprep.subr.bf16.mxu0 0
    %303 = vmatpush1.bf16.msra.mxu0 0
    %304 = vmatprep.mubr.bf16.mxu0 0
    %305 = vmatmul.mubr.bf16.gmra.mrb[0].mxu0 %v270
    %v306 = vpop.f32.mrb[0].mxu0
    %v307 = vadd.f32 %v255, %v306
    %v308 = vpop.f32.mrb[0].mxu0
    %v309 = vpop.f32.mrb[0].mxu0
    %v310 = vadd.f32 %v255, %v309
    %v311 = vpop.f32.mrb[0].mxu0
    %312 = vdwg.mxu0
    %v313 = vpack.c.bf16 %v307, %v307
    %315 = vrot.lane.b32.xlu0 %v313, 96
    %v316 = vpop.permute.xlu0 %315
    %vm317 = vcmask 64512
    %v319 = vsel %vm317, %v313, 0
    %v322 = vsel %vm317, %v316, 0
    %324 = vmatprep.subr.bf16.mxu0 0
    %325 = vmatpush1.bf16.xpose.msra.mxu0 %v322
    %326 = vmatprep.subr.bf16.mxu0 0
    %327 = vmatpush1.bf16.xpose.msra.mxu0 0
    %328 = vmatprep.subr.bf16.mxu0 0
    %329 = vmatpush1.bf16.xpose.msra.mxu0 0
    %330 = vmatprep.subr.bf16.mxu0 0
    %331 = vmatpush1.bf16.xpose.msra.mxu0 0
    %332 = vmatprep.subr.bf16.mxu0 0
    %333 = vmatpush1.bf16.xpose.msra.mxu0 0
    %334 = vmatprep.subr.bf16.mxu0 0
    %335 = vmatpush1.bf16.xpose.msra.mxu0 0
    %336 = vmatprep.subr.bf16.mxu0 0
    %337 = vmatpush1.bf16.xpose.msra.mxu0 0
    %338 = vmatprep.subr.bf16.mxu0 0
    %339 = vmatpush1.bf16.xpose.msra.mxu0 0
    %340 = vmatprep.subr.bf16.mxu0 0
    %341 = vmatpush1.bf16.xpose.msra.mxu0 0
    %342 = vmatprep.subr.bf16.mxu0 0
    %343 = vmatpush1.bf16.xpose.msra.mxu0 0
    %344 = vmatprep.subr.bf16.mxu0 0
    %345 = vmatpush1.bf16.xpose.msra.mxu0 0
    %346 = vmatprep.subr.bf16.mxu0 0
    %347 = vmatpush1.bf16.xpose.msra.mxu0 0
    %348 = vmatprep.subr.bf16.mxu0 0
    %349 = vmatpush1.bf16.xpose.msra.mxu0 0
    %350 = vmatprep.subr.bf16.mxu0 0
    %351 = vmatpush1.bf16.xpose.msra.mxu0 0
    %352 = vmatprep.subr.bf16.mxu0 0
    %353 = vmatpush1.bf16.xpose.msra.mxu0 0
    %354 = vmatprep.subr.bf16.mxu0 0
    %355 = vmatpush1.bf16.xpose.msra.mxu0 0
    %356 = vmatprep.mubr.bf16.mxu0 0
    %357 = vmatmul.mubr.bf16.gmra.mrb[0].mxu0 %v319
    %v358 = vpop.f32.mrb[0].mxu0
    %v359 = vadd.f32 0.0, %v358
    %v360 = vpop.f32.mrb[0].mxu0
    %v361 = vpop.f32.mrb[0].mxu0
    %v362 = vpop.f32.mrb[0].mxu0
    %363 = vdwg.mxu0
    %v364 = vmul.f32 %v359, 0.35355338
    %v365 = vadd.f32 %v364, %v236
    %v366 = vsel %vm317, %v365, -inf
    %367 = vmax.xlane.f32.xlu0 %v366
    %v368 = vpop.xlane.xlu0 %367
    %v369 = vsub.f32 %v365, %v368
    %v370 = vmul.f32 %v369, 1.442695
    %v371 = vpow.pop %v370
    %v372 = vsel %vm317, %v371, 0.0
    %373 = vadd.xlane.f32.xlu0 %v372
    %v374 = vpop.xlane.xlu0 %373
    %v375 = vrcp.pop %v374
    %v376 = vmul.f32 %v371, %v375
    %v377 = vpack.c.bf16 %v376, %v376
    %378 = vrot.lane.b32.xlu0 %v313, 64
    %v379 = vpop.permute.xlu0 %378
    %v381 = vsel %vm317, %v377, 0
    %vm383 = vcmask 1043456
    %v385 = vsel %vm383, %v379, 0
    %387 = vmatprep.subr.bf16.mxu0 0
    %388 = vmatpush1.bf16.msra.mxu0 %v385
    %389 = vmatprep.subr.bf16.mxu0 0
    %390 = vmatpush1.bf16.msra.mxu0 0
    %391 = vmatprep.subr.bf16.mxu0 0
    %392 = vmatpush1.bf16.msra.mxu0 0
    %393 = vmatprep.subr.bf16.mxu0 0
    %394 = vmatpush1.bf16.msra.mxu0 0
    %395 = vmatprep.subr.bf16.mxu0 0
    %396 = vmatpush1.bf16.msra.mxu0 0
    %397 = vmatprep.subr.bf16.mxu0 0
    %398 = vmatpush1.bf16.msra.mxu0 0
    %399 = vmatprep.subr.bf16.mxu0 0
    %400 = vmatpush1.bf16.msra.mxu0 0
    %401 = vmatprep.subr.bf16.mxu0 0
    %402 = vmatpush1.bf16.msra.mxu0 0
    %403 = vmatprep.subr.bf16.mxu0 0
    %404 = vmatpush1.bf16.msra.mxu0 0
    %405 = vmatprep.subr.bf16.mxu0 0
    %406 = vmatpush1.bf16.msra.mxu0 0
    %407 = vmatprep.subr.bf16.mxu0 0
    %408 = vmatpush1.bf16.msra.mxu0 0
    %409 = vmatprep.subr.bf16.mxu0 0
    %410 = vmatpush1.bf16.msra.mxu0 0
    %411 = vmatprep.subr.bf16.mxu0 0
    %412 = vmatpush1.bf16.msra.mxu0 0
    %413 = vmatprep.subr.bf16.mxu0 0
    %414 = vmatpush1.bf16.msra.mxu0 0
    %415 = vmatprep.subr.bf16.mxu0 0
    %416 = vmatpush1.bf16.msra.mxu0 0
    %417 = vmatprep.subr.bf16.mxu0 0
    %418 = vmatpush1.bf16.msra.mxu0 0
    %419 = vmatprep.mubr.bf16.mxu0 0
    %420 = vmatmul.mubr.bf16.gmra.mrb[0].mxu0 %v381
    %v421 = vpop.f32.mrb[0].mxu0
    %v422 = vadd.f32 0.0, %v421
    %v423 = vpop.f32.mrb[0].mxu0
    %v424 = vpop.f32.mrb[0].mxu0
    %v425 = vpop.f32.mrb[0].mxu0
    %426 = vdwg.mxu0
    %v427 = vpack.c.bf16 %v422, %v422
    %428 = vrot.lane.b32.xlu0 %v313, 120
    %v429 = vpop.permute.xlu0 %428
    %430 = vrot.lane.b32.xlu0 %v313, 88
    %v431 = vpop.permute.xlu0 %430
    %v433 = vsel %vm317, %v429, 0
    %v436 = vsel %vm317, %v431, 0
    %438 = vmatprep.subr.bf16.mxu0 0
    %439 = vmatpush1.bf16.xpose.msra.mxu0 %v436
    %440 = vmatprep.subr.bf16.mxu0 0
    %441 = vmatpush1.bf16.xpose.msra.mxu0 0
    %442 = vmatprep.subr.bf16.mxu0 0
    %443 = vmatpush1.bf16.xpose.msra.mxu0 0
    %444 = vmatprep.subr.bf16.mxu0 0
    %445 = vmatpush1.bf16.xpose.msra.mxu0 0
    %446 = vmatprep.subr.bf16.mxu0 0
    %447 = vmatpush1.bf16.xpose.msra.mxu0 0
    %448 = vmatprep.subr.bf16.mxu0 0
    %449 = vmatpush1.bf16.xpose.msra.mxu0 0
    %450 = vmatprep.subr.bf16.mxu0 0
    %451 = vmatpush1.bf16.xpose.msra.mxu0 0
    %452 = vmatprep.subr.bf16.mxu0 0
    %453 = vmatpush1.bf16.xpose.msra.mxu0 0
    %454 = vmatprep.subr.bf16.mxu0 0
    %455 = vmatpush1.bf16.xpose.msra.mxu0 0
    %456 = vmatprep.subr.bf16.mxu0 0
    %457 = vmatpush1.bf16.xpose.msra.mxu0 0
    %458 = vmatprep.subr.bf16.mxu0 0
    %459 = vmatpush1.bf16.xpose.msra.mxu0 0
    %460 = vmatprep.subr.bf16.mxu0 0
    %461 = vmatpush1.bf16.xpose.msra.mxu0 0
    %462 = vmatprep.subr.bf16.mxu0 0
    %463 = vmatpush1.bf16.xpose.msra.mxu0 0
    %464 = vmatprep.subr.bf16.mxu0 0
    %465 = vmatpush1.bf16.xpose.msra.mxu0 0
    %466 = vmatprep.subr.bf16.mxu0 0
    %467 = vmatpush1.bf16.xpose.msra.mxu0 0
    %468 = vmatprep.subr.bf16.mxu0 0
    %469 = vmatpush1.bf16.xpose.msra.mxu0 0
    %470 = vmatprep.mubr.bf16.mxu0 0
    %471 = vmatmul.mubr.bf16.gmra.mrb[0].mxu0 %v433
    %v472 = vpop.f32.mrb[0].mxu0
    %v473 = vadd.f32 0.0, %v472
    %v474 = vpop.f32.mrb[0].mxu0
    %v475 = vpop.f32.mrb[0].mxu0
    %v476 = vpop.f32.mrb[0].mxu0
    %477 = vdwg.mxu0
    %v478 = vmul.f32 %v473, 0.35355338
    %v479 = vadd.f32 %v478, %v236
    %v480 = vsel %vm317, %v479, -inf
    %481 = vmax.xlane.f32.xlu0 %v480
    %v482 = vpop.xlane.xlu0 %481
    %v483 = vsub.f32 %v479, %v482
    %v484 = vmul.f32 %v483, 1.442695
    %v485 = vpow.pop %v484
    %v486 = vsel %vm317, %v485, 0.0
    %487 = vadd.xlane.f32.xlu0 %v486
    %v488 = vpop.xlane.xlu0 %487
    %v489 = vrcp.pop %v488
    %v490 = vmul.f32 %v485, %v489
    %v491 = vpack.c.bf16 %v490, %v490
    %492 = vrot.lane.b32.xlu0 %v313, 56
    %v493 = vpop.permute.xlu0 %492
    %v495 = vsel %vm317, %v491, 0
    %v498 = vsel %vm383, %v493, 0
    %500 = vmatprep.subr.bf16.mxu0 0
    %501 = vmatpush1.bf16.msra.mxu0 %v498
    %502 = vmatprep.subr.bf16.mxu0 0
    %503 = vmatpush1.bf16.msra.mxu0 0
    %504 = vmatprep.subr.bf16.mxu0 0
    %505 = vmatpush1.bf16.msra.mxu0 0
    %506 = vmatprep.subr.bf16.mxu0 0
    %507 = vmatpush1.bf16.msra.mxu0 0
    %508 = vmatprep.subr.bf16.mxu0 0
    %509 = vmatpush1.bf16.msra.mxu0 0
    %510 = vmatprep.subr.bf16.mxu0 0
    %511 = vmatpush1.bf16.msra.mxu0 0
    %512 = vmatprep.subr.bf16.mxu0 0
    %513 = vmatpush1.bf16.msra.mxu0 0
    %514 = vmatprep.subr.bf16.mxu0 0
    %515 = vmatpush1.bf16.msra.mxu0 0
    %516 = vmatprep.subr.bf16.mxu0 0
    %517 = vmatpush1.bf16.msra.mxu0 0
    %518 = vmatprep.subr.bf16.mxu0 0
    %519 = vmatpush1.bf16.msra.mxu0 0
    %520 = vmatprep.subr.bf16.mxu0 0
    %521 = vmatpush1.bf16.msra.mxu0 0
    %522 = vmatprep.subr.bf16.mxu0 0
    %523 = vmatpush1.bf16.msra.mxu0 0
    %524 = vmatprep.subr.bf16.mxu0 0
    %525 = vmatpush1.bf16.msra.mxu0 0
    %526 = vmatprep.subr.bf16.mxu0 0
    %527 = vmatpush1.bf16.msra.mxu0 0
    %528 = vmatprep.subr.bf16.mxu0 0
    %529 = vmatpush1.bf16.msra.mxu0 0
    %530 = vmatprep.subr.bf16.mxu0 0
    %531 = vmatpush1.bf16.msra.mxu0 0
    %532 = vmatprep.mubr.bf16.mxu0 0
    %533 = vmatmul.mubr.bf16.gmra.mrb[0].mxu0 %v495
    %v534 = vpop.f32.mrb[0].mxu0
    %v535 = vadd.f32 0.0, %v534
    %v536 = vpop.f32.mrb[0].mxu0
    %v537 = vpop.f32.mrb[0].mxu0
    %v538 = vpop.f32.mrb[0].mxu0
    %539 = vdwg.mxu0
    %v540 = vpack.c.bf16 %v535, %v535
    %v542 = vsel %vm317, %v540, 0
    %v545 = vsel %vm383, %v246, 0
    %547 = vmatprep.subr.bf16.mxu0 0
    %548 = vmatpush1.bf16.msra.mxu0 %v545
    %549 = vmatprep.subr.bf16.mxu0 0
    %550 = vmatpush1.bf16.msra.mxu0 0
    %551 = vmatprep.subr.bf16.mxu0 0
    %552 = vmatpush1.bf16.msra.mxu0 0
    %553 = vmatprep.subr.bf16.mxu0 0
    %554 = vmatpush1.bf16.msra.mxu0 0
    %555 = vmatprep.subr.bf16.mxu0 0
    %556 = vmatpush1.bf16.msra.mxu0 0
    %557 = vmatprep.subr.bf16.mxu0 0
    %558 = vmatpush1.bf16.msra.mxu0 0
    %559 = vmatprep.subr.bf16.mxu0 0
    %560 = vmatpush1.bf16.msra.mxu0 0
    %561 = vmatprep.subr.bf16.mxu0 0
    %562 = vmatpush1.bf16.msra.mxu0 0
    %563 = vmatprep.subr.bf16.mxu0 0
    %564 = vmatpush1.bf16.msra.mxu0 0
    %565 = vmatprep.subr.bf16.mxu0 0
    %566 = vmatpush1.bf16.msra.mxu0 0
    %567 = vmatprep.subr.bf16.mxu0 0
    %568 = vmatpush1.bf16.msra.mxu0 0
    %569 = vmatprep.subr.bf16.mxu0 0
    %570 = vmatpush1.bf16.msra.mxu0 0
    %571 = vmatprep.subr.bf16.mxu0 0
    %572 = vmatpush1.bf16.msra.mxu0 0
    %573 = vmatprep.subr.bf16.mxu0 0
    %574 = vmatpush1.bf16.msra.mxu0 0
    %575 = vmatprep.subr.bf16.mxu0 0
    %576 = vmatpush1.bf16.msra.mxu0 0
    %577 = vmatprep.subr.bf16.mxu0 0
    %578 = vmatpush1.bf16.msra.mxu0 0
    %579 = vmatprep.mubr.bf16.mxu0 0
    %580 = vmatmul.mubr.bf16.gmra.mrb[0].mxu0 %v542
    %v581 = vpop.f32.mrb[0].mxu0
    %v582 = vadd.f32 0.0, %v581
    %v583 = vpop.f32.mrb[0].mxu0
    %v584 = vpop.f32.mrb[0].mxu0
    %v585 = vpop.f32.mrb[0].mxu0
    %586 = vdwg.mxu0
    %v588 = vsel %vm317, %v427, 0
    %v591 = vsel %vm383, %v245, 0
    %593 = vmatprep.subr.bf16.mxu0 0
    %594 = vmatpush1.bf16.msra.mxu0 %v591
    %595 = vmatprep.subr.bf16.mxu0 0
    %596 = vmatpush1.bf16.msra.mxu0 0
    %597 = vmatprep.subr.bf16.mxu0 0
    %598 = vmatpush1.bf16.msra.mxu0 0
    %599 = vmatprep.subr.bf16.mxu0 0
    %600 = vmatpush1.bf16.msra.mxu0 0
    %601 = vmatprep.subr.bf16.mxu0 0
    %602 = vmatpush1.bf16.msra.mxu0 0
    %603 = vmatprep.subr.bf16.mxu0 0
    %604 = vmatpush1.bf16.msra.mxu0 0
    %605 = vmatprep.subr.bf16.mxu0 0
    %606 = vmatpush1.bf16.msra.mxu0 0
    %607 = vmatprep.subr.bf16.mxu0 0
    %608 = vmatpush1.bf16.msra.mxu0 0
    %609 = vmatprep.subr.bf16.mxu0 0
    %610 = vmatpush1.bf16.msra.mxu0 0
    %611 = vmatprep.subr.bf16.mxu0 0
    %612 = vmatpush1.bf16.msra.mxu0 0
    %613 = vmatprep.subr.bf16.mxu0 0
    %614 = vmatpush1.bf16.msra.mxu0 0
    %615 = vmatprep.subr.bf16.mxu0 0
    %616 = vmatpush1.bf16.msra.mxu0 0
    %617 = vmatprep.subr.bf16.mxu0 0
    %618 = vmatpush1.bf16.msra.mxu0 0
    %619 = vmatprep.subr.bf16.mxu0 0
    %620 = vmatpush1.bf16.msra.mxu0 0
    %621 = vmatprep.subr.bf16.mxu0 0
    %622 = vmatpush1.bf16.msra.mxu0 0
    %623 = vmatprep.subr.bf16.mxu0 0
    %624 = vmatpush1.bf16.msra.mxu0 0
    %625 = vmatprep.mubr.bf16.mxu0 0
    %626 = vmatmul.mubr.bf16.gmra.mrb[0].mxu0 %v588
    %v627 = vpop.f32.mrb[0].mxu0
    %v628 = vadd.f32 %v582, %v627
    %v629 = vpop.f32.mrb[0].mxu0
    %v630 = vpop.f32.mrb[0].mxu0
    %v631 = vpop.f32.mrb[0].mxu0
    %632 = vdwg.mxu0
    %633 = vrot.lane.b32.xlu0 %v313, 112
    %v634 = vpop.permute.xlu0 %633
    %635 = vrot.lane.b32.xlu0 %v313, 80
    %v636 = vpop.permute.xlu0 %635
    %v638 = vsel %vm317, %v634, 0
    %v641 = vsel %vm317, %v636, 0
    %643 = vmatprep.subr.bf16.mxu0 0
    %644 = vmatpush1.bf16.xpose.msra.mxu0 %v641
    %645 = vmatprep.subr.bf16.mxu0 0
    %646 = vmatpush1.bf16.xpose.msra.mxu0 0
    %647 = vmatprep.subr.bf16.mxu0 0
    %648 = vmatpush1.bf16.xpose.msra.mxu0 0
    %649 = vmatprep.subr.bf16.mxu0 0
    %650 = vmatpush1.bf16.xpose.msra.mxu0 0
    %651 = vmatprep.subr.bf16.mxu0 0
    %652 = vmatpush1.bf16.xpose.msra.mxu0 0
    %653 = vmatprep.subr.bf16.mxu0 0
    %654 = vmatpush1.bf16.xpose.msra.mxu0 0
    %655 = vmatprep.subr.bf16.mxu0 0
    %656 = vmatpush1.bf16.xpose.msra.mxu0 0
    %657 = vmatprep.subr.bf16.mxu0 0
    %658 = vmatpush1.bf16.xpose.msra.mxu0 0
    %659 = vmatprep.subr.bf16.mxu0 0
    %660 = vmatpush1.bf16.xpose.msra.mxu0 0
    %661 = vmatprep.subr.bf16.mxu0 0
    %662 = vmatpush1.bf16.xpose.msra.mxu0 0
    %663 = vmatprep.subr.bf16.mxu0 0
    %664 = vmatpush1.bf16.xpose.msra.mxu0 0
    %665 = vmatprep.subr.bf16.mxu0 0
    %666 = vmatpush1.bf16.xpose.msra.mxu0 0
    %667 = vmatprep.subr.bf16.mxu0 0
    %668 = vmatpush1.bf16.xpose.msra.mxu0 0
    %669 = vmatprep.subr.bf16.mxu0 0
    %670 = vmatpush1.bf16.xpose.msra.mxu0 0
    %671 = vmatprep.subr.bf16.mxu0 0
    %672 = vmatpush1.bf16.xpose.msra.mxu0 0
    %673 = vmatprep.subr.bf16.mxu0 0
    %674 = vmatpush1.bf16.xpose.msra.mxu0 0
    %675 = vmatprep.mubr.bf16.mxu0 0
    %676 = vmatmul.mubr.bf16.gmra.mrb[0].mxu0 %v638
    %v677 = vpop.f32.mrb[0].mxu0
    %v678 = vadd.f32 0.0, %v677
    %v679 = vpop.f32.mrb[0].mxu0
    %v680 = vpop.f32.mrb[0].mxu0
    %v681 = vpop.f32.mrb[0].mxu0
    %682 = vdwg.mxu0
    %v683 = vmul.f32 %v678, 0.35355338
    %v684 = vadd.f32 %v683, %v236
    %v685 = vsel %vm317, %v684, -inf
    %686 = vmax.xlane.f32.xlu0 %v685
    %v687 = vpop.xlane.xlu0 %686
    %v688 = vsub.f32 %v684, %v687
    %v689 = vmul.f32 %v688, 1.442695
    %v690 = vpow.pop %v689
    %v691 = vsel %vm317, %v690, 0.0
    %692 = vadd.xlane.f32.xlu0 %v691
    %v693 = vpop.xlane.xlu0 %692
    %v694 = vrcp.pop %v693
    %v695 = vmul.f32 %v690, %v694
    %v696 = vpack.c.bf16 %v695, %v695
    %697 = vrot.lane.b32.xlu0 %v313, 48
    %v698 = vpop.permute.xlu0 %697
    %v700 = vsel %vm317, %v696, 0
    %v703 = vsel %vm383, %v698, 0
    %705 = vmatprep.subr.bf16.mxu0 0
    %706 = vmatpush1.bf16.msra.mxu0 %v703
    %707 = vmatprep.subr.bf16.mxu0 0
    %708 = vmatpush1.bf16.msra.mxu0 0
    %709 = vmatprep.subr.bf16.mxu0 0
    %710 = vmatpush1.bf16.msra.mxu0 0
    %711 = vmatprep.subr.bf16.mxu0 0
    %712 = vmatpush1.bf16.msra.mxu0 0
    %713 = vmatprep.subr.bf16.mxu0 0
    %714 = vmatpush1.bf16.msra.mxu0 0
    %715 = vmatprep.subr.bf16.mxu0 0
    %716 = vmatpush1.bf16.msra.mxu0 0
    %717 = vmatprep.subr.bf16.mxu0 0
    %718 = vmatpush1.bf16.msra.mxu0 0
    %719 = vmatprep.subr.bf16.mxu0 0
    %720 = vmatpush1.bf16.msra.mxu0 0
    %721 = vmatprep.subr.bf16.mxu0 0
    %722 = vmatpush1.bf16.msra.mxu0 0
    %723 = vmatprep.subr.bf16.mxu0 0
    %724 = vmatpush1.bf16.msra.mxu0 0
    %725 = vmatprep.subr.bf16.mxu0 0
    %726 = vmatpush1.bf16.msra.mxu0 0
    %727 = vmatprep.subr.bf16.mxu0 0
    %728 = vmatpush1.bf16.msra.mxu0 0
    %729 = vmatprep.subr.bf16.mxu0 0
    %730 = vmatpush1.bf16.msra.mxu0 0
    %731 = vmatprep.subr.bf16.mxu0 0
    %732 = vmatpush1.bf16.msra.mxu0 0
    %733 = vmatprep.subr.bf16.mxu0 0
    %734 = vmatpush1.bf16.msra.mxu0 0
    %735 = vmatprep.subr.bf16.mxu0 0
    %736 = vmatpush1.bf16.msra.mxu0 0
    %737 = vmatprep.mubr.bf16.mxu0 0
    %738 = vmatmul.mubr.bf16.gmra.mrb[0].mxu0 %v700
    %v739 = vpop.f32.mrb[0].mxu0
    %v740 = vadd.f32 0.0, %v739
    %v741 = vpop.f32.mrb[0].mxu0
    %v742 = vpop.f32.mrb[0].mxu0
    %v743 = vpop.f32.mrb[0].mxu0
    %744 = vdwg.mxu0
    %v745 = vpack.c.bf16 %v740, %v740
    %v747 = vsel %vm317, %v745, 0
    %v750 = vsel %vm383, %v247, 0
    %752 = vmatprep.subr.bf16.mxu0 0
    %753 = vmatpush1.bf16.msra.mxu0 %v750
    %754 = vmatprep.subr.bf16.mxu0 0
    %755 = vmatpush1.bf16.msra.mxu0 0
    %756 = vmatprep.subr.bf16.mxu0 0
    %757 = vmatpush1.bf16.msra.mxu0 0
    %758 = vmatprep.subr.bf16.mxu0 0
    %759 = vmatpush1.bf16.msra.mxu0 0
    %760 = vmatprep.subr.bf16.mxu0 0
    %761 = vmatpush1.bf16.msra.mxu0 0
    %762 = vmatprep.subr.bf16.mxu0 0
    %763 = vmatpush1.bf16.msra.mxu0 0
    %764 = vmatprep.subr.bf16.mxu0 0
    %765 = vmatpush1.bf16.msra.mxu0 0
    %766 = vmatprep.subr.bf16.mxu0 0
    %767 = vmatpush1.bf16.msra.mxu0 0
    %768 = vmatprep.subr.bf16.mxu0 0
    %769 = vmatpush1.bf16.msra.mxu0 0
    %770 = vmatprep.subr.bf16.mxu0 0
    %771 = vmatpush1.bf16.msra.mxu0 0
    %772 = vmatprep.subr.bf16.mxu0 0
    %773 = vmatpush1.bf16.msra.mxu0 0
    %774 = vmatprep.subr.bf16.mxu0 0
    %775 = vmatpush1.bf16.msra.mxu0 0
    %776 = vmatprep.subr.bf16.mxu0 0
    %777 = vmatpush1.bf16.msra.mxu0 0
    %778 = vmatprep.subr.bf16.mxu0 0
    %779 = vmatpush1.bf16.msra.mxu0 0
    %780 = vmatprep.subr.bf16.mxu0 0
    %781 = vmatpush1.bf16.msra.mxu0 0
    %782 = vmatprep.subr.bf16.mxu0 0
    %783 = vmatpush1.bf16.msra.mxu0 0
    %784 = vmatprep.mubr.bf16.mxu0 0
    %785 = vmatmul.mubr.bf16.gmra.mrb[0].mxu0 %v747
    %v786 = vpop.f32.mrb[0].mxu0
    %v787 = vadd.f32 0.0, %v786
    %v788 = vpop.f32.mrb[0].mxu0
    %v789 = vpop.f32.mrb[0].mxu0
    %v790 = vpop.f32.mrb[0].mxu0
    %791 = vdwg.mxu0
    %v792 = vadd.f32 %v628, %v787
    %793 = vrot.lane.b32.xlu0 %v313, 104
    %v794 = vpop.permute.xlu0 %793
    %795 = vrot.lane.b32.xlu0 %v313, 72
    %v796 = vpop.permute.xlu0 %795
    %v798 = vsel %vm317, %v794, 0
    %v801 = vsel %vm317, %v796, 0
    %803 = vmatprep.subr.bf16.mxu0 0
    %804 = vmatpush1.bf16.xpose.msra.mxu0 %v801
    %805 = vmatprep.subr.bf16.mxu0 0
    %806 = vmatpush1.bf16.xpose.msra.mxu0 0
    %807 = vmatprep.subr.bf16.mxu0 0
    %808 = vmatpush1.bf16.xpose.msra.mxu0 0
    %809 = vmatprep.subr.bf16.mxu0 0
    %810 = vmatpush1.bf16.xpose.msra.mxu0 0
    %811 = vmatprep.subr.bf16.mxu0 0
    %812 = vmatpush1.bf16.xpose.msra.mxu0 0
    %813 = vmatprep.subr.bf16.mxu0 0
    %814 = vmatpush1.bf16.xpose.msra.mxu0 0
    %815 = vmatprep.subr.bf16.mxu0 0
    %816 = vmatpush1.bf16.xpose.msra.mxu0 0
    %817 = vmatprep.subr.bf16.mxu0 0
    %818 = vmatpush1.bf16.xpose.msra.mxu0 0
    %819 = vmatprep.subr.bf16.mxu0 0
    %820 = vmatpush1.bf16.xpose.msra.mxu0 0
    %821 = vmatprep.subr.bf16.mxu0 0
    %822 = vmatpush1.bf16.xpose.msra.mxu0 0
    %823 = vmatprep.subr.bf16.mxu0 0
    %824 = vmatpush1.bf16.xpose.msra.mxu0 0
    %825 = vmatprep.subr.bf16.mxu0 0
    %826 = vmatpush1.bf16.xpose.msra.mxu0 0
    %827 = vmatprep.subr.bf16.mxu0 0
    %828 = vmatpush1.bf16.xpose.msra.mxu0 0
    %829 = vmatprep.subr.bf16.mxu0 0
    %830 = vmatpush1.bf16.xpose.msra.mxu0 0
    %831 = vmatprep.subr.bf16.mxu0 0
    %832 = vmatpush1.bf16.xpose.msra.mxu0 0
    %833 = vmatprep.subr.bf16.mxu0 0
    %834 = vmatpush1.bf16.xpose.msra.mxu0 0
    %835 = vmatprep.mubr.bf16.mxu0 0
    %836 = vmatmul.mubr.bf16.gmra.mrb[0].mxu0 %v798
    %v837 = vpop.f32.mrb[0].mxu0
    %v838 = vadd.f32 0.0, %v837
    %v839 = vpop.f32.mrb[0].mxu0
    %v840 = vpop.f32.mrb[0].mxu0
    %v841 = vpop.f32.mrb[0].mxu0
    %842 = vdwg.mxu0
    %v843 = vmul.f32 %v838, 0.35355338
    %v844 = vadd.f32 %v843, %v236
    %v845 = vsel %vm317, %v844, -inf
    %846 = vmax.xlane.f32.xlu0 %v845
    %v847 = vpop.xlane.xlu0 %846
    %v848 = vsub.f32 %v844, %v847
    %v849 = vmul.f32 %v848, 1.442695
    %v850 = vpow.pop %v849
    %v851 = vsel %vm317, %v850, 0.0
    %852 = vadd.xlane.f32.xlu0 %v851
    %v853 = vpop.xlane.xlu0 %852
    %v854 = vrcp.pop %v853
    %v855 = vmul.f32 %v850, %v854
    %v856 = vpack.c.bf16 %v855, %v855
    %857 = vrot.lane.b32.xlu0 %v313, 40
    %v858 = vpop.permute.xlu0 %857
    %v860 = vsel %vm317, %v856, 0
    %v863 = vsel %vm383, %v858, 0
    %865 = vmatprep.subr.bf16.mxu0 0
    %866 = vmatpush1.bf16.msra.mxu0 %v863
    %867 = vmatprep.subr.bf16.mxu0 0
    %868 = vmatpush1.bf16.msra.mxu0 0
    %869 = vmatprep.subr.bf16.mxu0 0
    %870 = vmatpush1.bf16.msra.mxu0 0
    %871 = vmatprep.subr.bf16.mxu0 0
    %872 = vmatpush1.bf16.msra.mxu0 0
    %873 = vmatprep.subr.bf16.mxu0 0
    %874 = vmatpush1.bf16.msra.mxu0 0
    %875 = vmatprep.subr.bf16.mxu0 0
    %876 = vmatpush1.bf16.msra.mxu0 0
    %877 = vmatprep.subr.bf16.mxu0 0
    %878 = vmatpush1.bf16.msra.mxu0 0
    %879 = vmatprep.subr.bf16.mxu0 0
    %880 = vmatpush1.bf16.msra.mxu0 0
    %881 = vmatprep.subr.bf16.mxu0 0
    %882 = vmatpush1.bf16.msra.mxu0 0
    %883 = vmatprep.subr.bf16.mxu0 0
    %884 = vmatpush1.bf16.msra.mxu0 0
    %885 = vmatprep.subr.bf16.mxu0 0
    %886 = vmatpush1.bf16.msra.mxu0 0
    %887 = vmatprep.subr.bf16.mxu0 0
    %888 = vmatpush1.bf16.msra.mxu0 0
    %889 = vmatprep.subr.bf16.mxu0 0
    %890 = vmatpush1.bf16.msra.mxu0 0
    %891 = vmatprep.subr.bf16.mxu0 0
    %892 = vmatpush1.bf16.msra.mxu0 0
    %893 = vmatprep.subr.bf16.mxu0 0
    %894 = vmatpush1.bf16.msra.mxu0 0
    %895 = vmatprep.subr.bf16.mxu0 0
    %896 = vmatpush1.bf16.msra.mxu0 0
    %897 = vmatprep.mubr.bf16.mxu0 0
    %898 = vmatmul.mubr.bf16.gmra.mrb[0].mxu0 %v860
    %v899 = vpop.f32.mrb[0].mxu0
    %v900 = vadd.f32 0.0, %v899
    %v901 = vpop.f32.mrb[0].mxu0
    %v902 = vpop.f32.mrb[0].mxu0
    %v903 = vpop.f32.mrb[0].mxu0
    %904 = vdwg.mxu0
    %v905 = vpack.c.bf16 %v900, %v900
    %v907 = vsel %vm317, %v905, 0
    %v910 = vsel %vm383, %v248, 0
    %912 = vmatprep.subr.bf16.mxu0 0
    %913 = vmatpush1.bf16.msra.mxu0 %v910
    %914 = vmatprep.subr.bf16.mxu0 0
    %915 = vmatpush1.bf16.msra.mxu0 0
    %916 = vmatprep.subr.bf16.mxu0 0
    %917 = vmatpush1.bf16.msra.mxu0 0
    %918 = vmatprep.subr.bf16.mxu0 0
    %919 = vmatpush1.bf16.msra.mxu0 0
    %920 = vmatprep.subr.bf16.mxu0 0
    %921 = vmatpush1.bf16.msra.mxu0 0
    %922 = vmatprep.subr.bf16.mxu0 0
    %923 = vmatpush1.bf16.msra.mxu0 0
    %924 = vmatprep.subr.bf16.mxu0 0
    %925 = vmatpush1.bf16.msra.mxu0 0
    %926 = vmatprep.subr.bf16.mxu0 0
    %927 = vmatpush1.bf16.msra.mxu0 0
    %928 = vmatprep.subr.bf16.mxu0 0
    %929 = vmatpush1.bf16.msra.mxu0 0
    %930 = vmatprep.subr.bf16.mxu0 0
    %931 = vmatpush1.bf16.msra.mxu0 0
    %932 = vmatprep.subr.bf16.mxu0 0
    %933 = vmatpush1.bf16.msra.mxu0 0
    %934 = vmatprep.subr.bf16.mxu0 0
    %935 = vmatpush1.bf16.msra.mxu0 0
    %936 = vmatprep.subr.bf16.mxu0 0
    %937 = vmatpush1.bf16.msra.mxu0 0
    %938 = vmatprep.subr.bf16.mxu0 0
    %939 = vmatpush1.bf16.msra.mxu0 0
    %940 = vmatprep.subr.bf16.mxu0 0
    %941 = vmatpush1.bf16.msra.mxu0 0
    %942 = vmatprep.subr.bf16.mxu0 0
    %943 = vmatpush1.bf16.msra.mxu0 0
    %944 = vmatprep.mubr.bf16.mxu0 0
    %945 = vmatmul.mubr.bf16.gmra.mrb[0].mxu0 %v907
    %v946 = vpop.f32.mrb[0].mxu0
    %v947 = vadd.f32 0.0, %v946
    %v948 = vpop.f32.mrb[0].mxu0
    %v949 = vpop.f32.mrb[0].mxu0
    %v950 = vpop.f32.mrb[0].mxu0
    %951 = vdwg.mxu0
    %v952 = vadd.f32 %v792, %v947
    %v953 = vpack.c.bf16 %v310, %v310
    %955 = vrot.lane.b32.xlu0 %v953, 96
    %v956 = vpop.permute.xlu0 %955
    %v958 = vsel %vm317, %v953, 0
    %v961 = vsel %vm317, %v956, 0
    %963 = vmatprep.subr.bf16.mxu0 0
    %964 = vmatpush1.bf16.xpose.msra.mxu0 %v961
    %965 = vmatprep.subr.bf16.mxu0 0
    %966 = vmatpush1.bf16.xpose.msra.mxu0 0
    %967 = vmatprep.subr.bf16.mxu0 0
    %968 = vmatpush1.bf16.xpose.msra.mxu0 0
    %969 = vmatprep.subr.bf16.mxu0 0
    %970 = vmatpush1.bf16.xpose.msra.mxu0 0
    %971 = vmatprep.subr.bf16.mxu0 0
    %972 = vmatpush1.bf16.xpose.msra.mxu0 0
    %973 = vmatprep.subr.bf16.mxu0 0
    %974 = vmatpush1.bf16.xpose.msra.mxu0 0
    %975 = vmatprep.subr.bf16.mxu0 0
    %976 = vmatpush1.bf16.xpose.msra.mxu0 0
    %977 = vmatprep.subr.bf16.mxu0 0
    %978 = vmatpush1.bf16.xpose.msra.mxu0 0
    %979 = vmatprep.subr.bf16.mxu0 0
    %980 = vmatpush1.bf16.xpose.msra.mxu0 0
    %981 = vmatprep.subr.bf16.mxu0 0
    %982 = vmatpush1.bf16.xpose.msra.mxu0 0
    %983 = vmatprep.subr.bf16.mxu0 0
    %984 = vmatpush1.bf16.xpose.msra.mxu0 0
    %985 = vmatprep.subr.bf16.mxu0 0
    %986 = vmatpush1.bf16.xpose.msra.mxu0 0
    %987 = vmatprep.subr.bf16.mxu0 0
    %988 = vmatpush1.bf16.xpose.msra.mxu0 0
    %989 = vmatprep.subr.bf16.mxu0 0
    %990 = vmatpush1.bf16.xpose.msra.mxu0 0
    %991 = vmatprep.subr.bf16.mxu0 0
    %992 = vmatpush1.bf16.xpose.msra.mxu0 0
    %993 = vmatprep.subr.bf16.mxu0 0
    %994 = vmatpush1.bf16.xpose.msra.mxu0 0
    %995 = vmatprep.mubr.bf16.mxu0 0
    %996 = vmatmul.mubr.bf16.gmra.mrb[0].mxu0 %v958
    %v997 = vpop.f32.mrb[0].mxu0
    %v998 = vadd.f32 0.0, %v997
    %v999 = vpop.f32.mrb[0].mxu0
    %v1000 = vpop.f32.mrb[0].mxu0
    %v1001 = vpop.f32.mrb[0].mxu0
    %1002 = vdwg.mxu0
    %v1003 = vmul.f32 %v998, 0.35355338
    %v1004 = vadd.f32 %v1003, %v240
    %v1005 = vsel %vm317, %v1004, -inf
    %1006 = vmax.xlane.f32.xlu0 %v1005
    %v1007 = vpop.xlane.xlu0 %1006
    %v1008 = vsub.f32 %v1004, %v1007
    %v1009 = vmul.f32 %v1008, 1.442695
    %v1010 = vpow.pop %v1009
    %v1011 = vsel %vm317, %v1010, 0.0
    %1012 = vadd.xlane.f32.xlu0 %v1011
    %v1013 = vpop.xlane.xlu0 %1012
    %v1014 = vrcp.pop %v1013
    %v1015 = vmul.f32 %v1010, %v1014
    %v1016 = vpack.c.bf16 %v1015, %v1015
    %1017 = vrot.lane.b32.xlu0 %v953, 64
    %v1018 = vpop.permute.xlu0 %1017
    %v1020 = vsel %vm317, %v1016, 0
    %v1023 = vsel %vm383, %v1018, 0
    %1025 = vmatprep.subr.bf16.mxu0 0
    %1026 = vmatpush1.bf16.msra.mxu0 %v1023
    %1027 = vmatprep.subr.bf16.mxu0 0
    %1028 = vmatpush1.bf16.msra.mxu0 0
    %1029 = vmatprep.subr.bf16.mxu0 0
    %1030 = vmatpush1.bf16.msra.mxu0 0
    %1031 = vmatprep.subr.bf16.mxu0 0
    %1032 = vmatpush1.bf16.msra.mxu0 0
    %1033 = vmatprep.subr.bf16.mxu0 0
    %1034 = vmatpush1.bf16.msra.mxu0 0
    %1035 = vmatprep.subr.bf16.mxu0 0
    %1036 = vmatpush1.bf16.msra.mxu0 0
    %1037 = vmatprep.subr.bf16.mxu0 0
    %1038 = vmatpush1.bf16.msra.mxu0 0
    %1039 = vmatprep.subr.bf16.mxu0 0
    %1040 = vmatpush1.bf16.msra.mxu0 0
    %1041 = vmatprep.subr.bf16.mxu0 0
    %1042 = vmatpush1.bf16.msra.mxu0 0
    %1043 = vmatprep.subr.bf16.mxu0 0
    %1044 = vmatpush1.bf16.msra.mxu0 0
    %1045 = vmatprep.subr.bf16.mxu0 0
    %1046 = vmatpush1.bf16.msra.mxu0 0
    %1047 = vmatprep.subr.bf16.mxu0 0
    %1048 = vmatpush1.bf16.msra.mxu0 0
    %1049 = vmatprep.subr.bf16.mxu0 0
    %1050 = vmatpush1.bf16.msra.mxu0 0
    %1051 = vmatprep.subr.bf16.mxu0 0
    %1052 = vmatpush1.bf16.msra.mxu0 0
    %1053 = vmatprep.subr.bf16.mxu0 0
    %1054 = vmatpush1.bf16.msra.mxu0 0
    %1055 = vmatprep.subr.bf16.mxu0 0
    %1056 = vmatpush1.bf16.msra.mxu0 0
    %1057 = vmatprep.mubr.bf16.mxu0 0
    %1058 = vmatmul.mubr.bf16.gmra.mrb[0].mxu0 %v1020
    %v1059 = vpop.f32.mrb[0].mxu0
    %v1060 = vadd.f32 0.0, %v1059
    %v1061 = vpop.f32.mrb[0].mxu0
    %v1062 = vpop.f32.mrb[0].mxu0
    %v1063 = vpop.f32.mrb[0].mxu0
    %1064 = vdwg.mxu0
    %v1065 = vpack.c.bf16 %v1060, %v1060
    %1066 = vrot.lane.b32.xlu0 %v953, 120
    %v1067 = vpop.permute.xlu0 %1066
    %1068 = vrot.lane.b32.xlu0 %v953, 88
    %v1069 = vpop.permute.xlu0 %1068
    %v1071 = vsel %vm317, %v1067, 0
    %v1074 = vsel %vm317, %v1069, 0
    %1076 = vmatprep.subr.bf16.mxu0 0
    %1077 = vmatpush1.bf16.xpose.msra.mxu0 %v1074
    %1078 = vmatprep.subr.bf16.mxu0 0
    %1079 = vmatpush1.bf16.xpose.msra.mxu0 0
    %1080 = vmatprep.subr.bf16.mxu0 0
    %1081 = vmatpush1.bf16.xpose.msra.mxu0 0
    %1082 = vmatprep.subr.bf16.mxu0 0
    %1083 = vmatpush1.bf16.xpose.msra.mxu0 0
    %1084 = vmatprep.subr.bf16.mxu0 0
    %1085 = vmatpush1.bf16.xpose.msra.mxu0 0
    %1086 = vmatprep.subr.bf16.mxu0 0
    %1087 = vmatpush1.bf16.xpose.msra.mxu0 0
    %1088 = vmatprep.subr.bf16.mxu0 0
    %1089 = vmatpush1.bf16.xpose.msra.mxu0 0
    %1090 = vmatprep.subr.bf16.mxu0 0
    %1091 = vmatpush1.bf16.xpose.msra.mxu0 0
    %1092 = vmatprep.subr.bf16.mxu0 0
    %1093 = vmatpush1.bf16.xpose.msra.mxu0 0
    %1094 = vmatprep.subr.bf16.mxu0 0
    %1095 = vmatpush1.bf16.xpose.msra.mxu0 0
    %1096 = vmatprep.subr.bf16.mxu0 0
    %1097 = vmatpush1.bf16.xpose.msra.mxu0 0
    %1098 = vmatprep.subr.bf16.mxu0 0
    %1099 = vmatpush1.bf16.xpose.msra.mxu0 0
    %1100 = vmatprep.subr.bf16.mxu0 0
    %1101 = vmatpush1.bf16.xpose.msra.mxu0 0
    %1102 = vmatprep.subr.bf16.mxu0 0
    %1103 = vmatpush1.bf16.xpose.msra.mxu0 0
    %1104 = vmatprep.subr.bf16.mxu0 0
    %1105 = vmatpush1.bf16.xpose.msra.mxu0 0
    %1106 = vmatprep.subr.bf16.mxu0 0
    %1107 = vmatpush1.bf16.xpose.msra.mxu0 0
    %1108 = vmatprep.mubr.bf16.mxu0 0
    %1109 = vmatmul.mubr.bf16.gmra.mrb[0].mxu0 %v1071
    %v1110 = vpop.f32.mrb[0].mxu0
    %v1111 = vadd.f32 0.0, %v1110
    %v1112 = vpop.f32.mrb[0].mxu0
    %v1113 = vpop.f32.mrb[0].mxu0
    %v1114 = vpop.f32.mrb[0].mxu0
    %1115 = vdwg.mxu0
    %v1116 = vmul.f32 %v1111, 0.35355338
    %v1117 = vadd.f32 %v1116, %v240
    %v1118 = vsel %vm317, %v1117, -inf
    %1119 = vmax.xlane.f32.xlu0 %v1118
    %v1120 = vpop.xlane.xlu0 %1119
    %v1121 = vsub.f32 %v1117, %v1120
    %v1122 = vmul.f32 %v1121, 1.442695
    %v1123 = vpow.pop %v1122
    %v1124 = vsel %vm317, %v1123, 0.0
    %1125 = vadd.xlane.f32.xlu0 %v1124
    %v1126 = vpop.xlane.xlu0 %1125
    %v1127 = vrcp.pop %v1126
    %v1128 = vmul.f32 %v1123, %v1127
    %v1129 = vpack.c.bf16 %v1128, %v1128
    %1130 = vrot.lane.b32.xlu0 %v953, 56
    %v1131 = vpop.permute.xlu0 %1130
    %v1133 = vsel %vm317, %v1129, 0
    %v1136 = vsel %vm383, %v1131, 0
    %1138 = vmatprep.subr.bf16.mxu0 0
    %1139 = vmatpush1.bf16.msra.mxu0 %v1136
    %1140 = vmatprep.subr.bf16.mxu0 0
    %1141 = vmatpush1.bf16.msra.mxu0 0
    %1142 = vmatprep.subr.bf16.mxu0 0
    %1143 = vmatpush1.bf16.msra.mxu0 0
    %1144 = vmatprep.subr.bf16.mxu0 0
    %1145 = vmatpush1.bf16.msra.mxu0 0
    %1146 = vmatprep.subr.bf16.mxu0 0
    %1147 = vmatpush1.bf16.msra.mxu0 0
    %1148 = vmatprep.subr.bf16.mxu0 0
    %1149 = vmatpush1.bf16.msra.mxu0 0
    %1150 = vmatprep.subr.bf16.mxu0 0
    %1151 = vmatpush1.bf16.msra.mxu0 0
    %1152 = vmatprep.subr.bf16.mxu0 0
    %1153 = vmatpush1.bf16.msra.mxu0 0
    %1154 = vmatprep.subr.bf16.mxu0 0
    %1155 = vmatpush1.bf16.msra.mxu0 0
    %1156 = vmatprep.subr.bf16.mxu0 0
    %1157 = vmatpush1.bf16.msra.mxu0 0
    %1158 = vmatprep.subr.bf16.mxu0 0
    %1159 = vmatpush1.bf16.msra.mxu0 0
    %1160 = vmatprep.subr.bf16.mxu0 0
    %1161 = vmatpush1.bf16.msra.mxu0 0
    %1162 = vmatprep.subr.bf16.mxu0 0
    %1163 = vmatpush1.bf16.msra.mxu0 0
    %1164 = vmatprep.subr.bf16.mxu0 0
    %1165 = vmatpush1.bf16.msra.mxu0 0
    %1166 = vmatprep.subr.bf16.mxu0 0
    %1167 = vmatpush1.bf16.msra.mxu0 0
    %1168 = vmatprep.subr.bf16.mxu0 0
    %1169 = vmatpush1.bf16.msra.mxu0 0
    %1170 = vmatprep.mubr.bf16.mxu0 0
    %1171 = vmatmul.mubr.bf16.gmra.mrb[0].mxu0 %v1133
    %v1172 = vpop.f32.mrb[0].mxu0
    %v1173 = vadd.f32 0.0, %v1172
    %v1174 = vpop.f32.mrb[0].mxu0
    %v1175 = vpop.f32.mrb[0].mxu0
    %v1176 = vpop.f32.mrb[0].mxu0
    %1177 = vdwg.mxu0
    %v1178 = vpack.c.bf16 %v1173, %v1173
    %v1180 = vsel %vm317, %v1178, 0
    %1182 = vmatprep.subr.bf16.mxu0 0
    %1183 = vmatpush1.bf16.msra.mxu0 %v545
    %1184 = vmatprep.subr.bf16.mxu0 0
    %1185 = vmatpush1.bf16.msra.mxu0 0
    %1186 = vmatprep.subr.bf16.mxu0 0
    %1187 = vmatpush1.bf16.msra.mxu0 0
    %1188 = vmatprep.subr.bf16.mxu0 0
    %1189 = vmatpush1.bf16.msra.mxu0 0
    %1190 = vmatprep.subr.bf16.mxu0 0
    %1191 = vmatpush1.bf16.msra.mxu0 0
    %1192 = vmatprep.subr.bf16.mxu0 0
    %1193 = vmatpush1.bf16.msra.mxu0 0
    %1194 = vmatprep.subr.bf16.mxu0 0
    %1195 = vmatpush1.bf16.msra.mxu0 0
    %1196 = vmatprep.subr.bf16.mxu0 0
    %1197 = vmatpush1.bf16.msra.mxu0 0
    %1198 = vmatprep.subr.bf16.mxu0 0
    %1199 = vmatpush1.bf16.msra.mxu0 0
    %1200 = vmatprep.subr.bf16.mxu0 0
    %1201 = vmatpush1.bf16.msra.mxu0 0
    %1202 = vmatprep.subr.bf16.mxu0 0
    %1203 = vmatpush1.bf16.msra.mxu0 0
    %1204 = vmatprep.subr.bf16.mxu0 0
    %1205 = vmatpush1.bf16.msra.mxu0 0
    %1206 = vmatprep.subr.bf16.mxu0 0
    %1207 = vmatpush1.bf16.msra.mxu0 0
    %1208 = vmatprep.subr.bf16.mxu0 0
    %1209 = vmatpush1.bf16.msra.mxu0 0
    %1210 = vmatprep.subr.bf16.mxu0 0
    %1211 = vmatpush1.bf16.msra.mxu0 0
    %1212 = vmatprep.subr.bf16.mxu0 0
    %1213 = vmatpush1.bf16.msra.mxu0 0
    %1214 = vmatprep.mubr.bf16.mxu0 0
    %1215 = vmatmul.mubr.bf16.gmra.mrb[0].mxu0 %v1180
    %v1216 = vpop.f32.mrb[0].mxu0
    %v1217 = vadd.f32 0.0, %v1216
    %v1218 = vpop.f32.mrb[0].mxu0
    %v1219 = vpop.f32.mrb[0].mxu0
    %v1220 = vpop.f32.mrb[0].mxu0
    %1221 = vdwg.mxu0
    %v1223 = vsel %vm317, %v1065, 0
    %1225 = vmatprep.subr.bf16.mxu0 0
    %1226 = vmatpush1.bf16.msra.mxu0 %v591
    %1227 = vmatprep.subr.bf16.mxu0 0
    %1228 = vmatpush1.bf16.msra.mxu0 0
    %1229 = vmatprep.subr.bf16.mxu0 0
    %1230 = vmatpush1.bf16.msra.mxu0 0
    %1231 = vmatprep.subr.bf16.mxu0 0
    %1232 = vmatpush1.bf16.msra.mxu0 0
    %1233 = vmatprep.subr.bf16.mxu0 0
    %1234 = vmatpush1.bf16.msra.mxu0 0
    %1235 = vmatprep.subr.bf16.mxu0 0
    %1236 = vmatpush1.bf16.msra.mxu0 0
    %1237 = vmatprep.subr.bf16.mxu0 0
    %1238 = vmatpush1.bf16.msra.mxu0 0
    %1239 = vmatprep.subr.bf16.mxu0 0
    %1240 = vmatpush1.bf16.msra.mxu0 0
    %1241 = vmatprep.subr.bf16.mxu0 0
    %1242 = vmatpush1.bf16.msra.mxu0 0
    %1243 = vmatprep.subr.bf16.mxu0 0
    %1244 = vmatpush1.bf16.msra.mxu0 0
    %1245 = vmatprep.subr.bf16.mxu0 0
    %1246 = vmatpush1.bf16.msra.mxu0 0
    %1247 = vmatprep.subr.bf16.mxu0 0
    %1248 = vmatpush1.bf16.msra.mxu0 0
    %1249 = vmatprep.subr.bf16.mxu0 0
    %1250 = vmatpush1.bf16.msra.mxu0 0
    %1251 = vmatprep.subr.bf16.mxu0 0
    %1252 = vmatpush1.bf16.msra.mxu0 0
    %1253 = vmatprep.subr.bf16.mxu0 0
    %1254 = vmatpush1.bf16.msra.mxu0 0
    %1255 = vmatprep.subr.bf16.mxu0 0
    %1256 = vmatpush1.bf16.msra.mxu0 0
    %1257 = vmatprep.mubr.bf16.mxu0 0
    %1258 = vmatmul.mubr.bf16.gmra.mrb[0].mxu0 %v1223
    %v1259 = vpop.f32.mrb[0].mxu0
    %v1260 = vadd.f32 %v1217, %v1259
    %v1261 = vpop.f32.mrb[0].mxu0
    %v1262 = vpop.f32.mrb[0].mxu0
    %v1263 = vpop.f32.mrb[0].mxu0
    %1264 = vdwg.mxu0
    %1265 = vrot.lane.b32.xlu0 %v953, 112
    %v1266 = vpop.permute.xlu0 %1265
    %1267 = vrot.lane.b32.xlu0 %v953, 80
    %v1268 = vpop.permute.xlu0 %1267
    %v1270 = vsel %vm317, %v1266, 0
    %v1273 = vsel %vm317, %v1268, 0
    %1275 = vmatprep.subr.bf16.mxu0 0
    %1276 = vmatpush1.bf16.xpose.msra.mxu0 %v1273
    %1277 = vmatprep.subr.bf16.mxu0 0
    %1278 = vmatpush1.bf16.xpose.msra.mxu0 0
    %1279 = vmatprep.subr.bf16.mxu0 0
    %1280 = vmatpush1.bf16.xpose.msra.mxu0 0
    %1281 = vmatprep.subr.bf16.mxu0 0
    %1282 = vmatpush1.bf16.xpose.msra.mxu0 0
    %1283 = vmatprep.subr.bf16.mxu0 0
    %1284 = vmatpush1.bf16.xpose.msra.mxu0 0
    %1285 = vmatprep.subr.bf16.mxu0 0
    %1286 = vmatpush1.bf16.xpose.msra.mxu0 0
    %1287 = vmatprep.subr.bf16.mxu0 0
    %1288 = vmatpush1.bf16.xpose.msra.mxu0 0
    %1289 = vmatprep.subr.bf16.mxu0 0
    %1290 = vmatpush1.bf16.xpose.msra.mxu0 0
    %1291 = vmatprep.subr.bf16.mxu0 0
    %1292 = vmatpush1.bf16.xpose.msra.mxu0 0
    %1293 = vmatprep.subr.bf16.mxu0 0
    %1294 = vmatpush1.bf16.xpose.msra.mxu0 0
    %1295 = vmatprep.subr.bf16.mxu0 0
    %1296 = vmatpush1.bf16.xpose.msra.mxu0 0
    %1297 = vmatprep.subr.bf16.mxu0 0
    %1298 = vmatpush1.bf16.xpose.msra.mxu0 0
    %1299 = vmatprep.subr.bf16.mxu0 0
    %1300 = vmatpush1.bf16.xpose.msra.mxu0 0
    %1301 = vmatprep.subr.bf16.mxu0 0
    %1302 = vmatpush1.bf16.xpose.msra.mxu0 0
    %1303 = vmatprep.subr.bf16.mxu0 0
    %1304 = vmatpush1.bf16.xpose.msra.mxu0 0
    %1305 = vmatprep.subr.bf16.mxu0 0
    %1306 = vmatpush1.bf16.xpose.msra.mxu0 0
    %1307 = vmatprep.mubr.bf16.mxu0 0
    %1308 = vmatmul.mubr.bf16.gmra.mrb[0].mxu0 %v1270
    %v1309 = vpop.f32.mrb[0].mxu0
    %v1310 = vadd.f32 0.0, %v1309
    %v1311 = vpop.f32.mrb[0].mxu0
    %v1312 = vpop.f32.mrb[0].mxu0
    %v1313 = vpop.f32.mrb[0].mxu0
    %1314 = vdwg.mxu0
    %v1315 = vmul.f32 %v1310, 0.35355338
    %v1316 = vadd.f32 %v1315, %v240
    %v1317 = vsel %vm317, %v1316, -inf
    %1318 = vmax.xlane.f32.xlu0 %v1317
    %v1319 = vpop.xlane.xlu0 %1318
    %v1320 = vsub.f32 %v1316, %v1319
    %v1321 = vmul.f32 %v1320, 1.442695
    %v1322 = vpow.pop %v1321
    %v1323 = vsel %vm317, %v1322, 0.0
    %1324 = vadd.xlane.f32.xlu0 %v1323
    %v1325 = vpop.xlane.xlu0 %1324
    %v1326 = vrcp.pop %v1325
    %v1327 = vmul.f32 %v1322, %v1326
    %v1328 = vpack.c.bf16 %v1327, %v1327
    %1329 = vrot.lane.b32.xlu0 %v953, 48
    %v1330 = vpop.permute.xlu0 %1329
    %v1332 = vsel %vm317, %v1328, 0
    %v1335 = vsel %vm383, %v1330, 0
    %1337 = vmatprep.subr.bf16.mxu0 0
    %1338 = vmatpush1.bf16.msra.mxu0 %v1335
    %1339 = vmatprep.subr.bf16.mxu0 0
    %1340 = vmatpush1.bf16.msra.mxu0 0
    %1341 = vmatprep.subr.bf16.mxu0 0
    %1342 = vmatpush1.bf16.msra.mxu0 0
    %1343 = vmatprep.subr.bf16.mxu0 0
    %1344 = vmatpush1.bf16.msra.mxu0 0
    %1345 = vmatprep.subr.bf16.mxu0 0
    %1346 = vmatpush1.bf16.msra.mxu0 0
    %1347 = vmatprep.subr.bf16.mxu0 0
    %1348 = vmatpush1.bf16.msra.mxu0 0
    %1349 = vmatprep.subr.bf16.mxu0 0
    %1350 = vmatpush1.bf16.msra.mxu0 0
    %1351 = vmatprep.subr.bf16.mxu0 0
    %1352 = vmatpush1.bf16.msra.mxu0 0
    %1353 = vmatprep.subr.bf16.mxu0 0
    %1354 = vmatpush1.bf16.msra.mxu0 0
    %1355 = vmatprep.subr.bf16.mxu0 0
    %1356 = vmatpush1.bf16.msra.mxu0 0
    %1357 = vmatprep.subr.bf16.mxu0 0
    %1358 = vmatpush1.bf16.msra.mxu0 0
    %1359 = vmatprep.subr.bf16.mxu0 0
    %1360 = vmatpush1.bf16.msra.mxu0 0
    %1361 = vmatprep.subr.bf16.mxu0 0
    %1362 = vmatpush1.bf16.msra.mxu0 0
    %1363 = vmatprep.subr.bf16.mxu0 0
    %1364 = vmatpush1.bf16.msra.mxu0 0
    %1365 = vmatprep.subr.bf16.mxu0 0
    %1366 = vmatpush1.bf16.msra.mxu0 0
    %1367 = vmatprep.subr.bf16.mxu0 0
    %1368 = vmatpush1.bf16.msra.mxu0 0
    %1369 = vmatprep.mubr.bf16.mxu0 0
    %1370 = vmatmul.mubr.bf16.gmra.mrb[0].mxu0 %v1332
    %v1371 = vpop.f32.mrb[0].mxu0
    %v1372 = vadd.f32 0.0, %v1371
    %v1373 = vpop.f32.mrb[0].mxu0
    %v1374 = vpop.f32.mrb[0].mxu0
    %v1375 = vpop.f32.mrb[0].mxu0
    %1376 = vdwg.mxu0
    %v1377 = vpack.c.bf16 %v1372, %v1372
    %v1379 = vsel %vm317, %v1377, 0
    %1381 = vmatprep.subr.bf16.mxu0 0
    %1382 = vmatpush1.bf16.msra.mxu0 %v750
    %1383 = vmatprep.subr.bf16.mxu0 0
    %1384 = vmatpush1.bf16.msra.mxu0 0
    %1385 = vmatprep.subr.bf16.mxu0 0
    %1386 = vmatpush1.bf16.msra.mxu0 0
    %1387 = vmatprep.subr.bf16.mxu0 0
    %1388 = vmatpush1.bf16.msra.mxu0 0
    %1389 = vmatprep.subr.bf16.mxu0 0
    %1390 = vmatpush1.bf16.msra.mxu0 0
    %1391 = vmatprep.subr.bf16.mxu0 0
    %1392 = vmatpush1.bf16.msra.mxu0 0
    %1393 = vmatprep.subr.bf16.mxu0 0
    %1394 = vmatpush1.bf16.msra.mxu0 0
    %1395 = vmatprep.subr.bf16.mxu0 0
    %1396 = vmatpush1.bf16.msra.mxu0 0
    %1397 = vmatprep.subr.bf16.mxu0 0
    %1398 = vmatpush1.bf16.msra.mxu0 0
    %1399 = vmatprep.subr.bf16.mxu0 0
    %1400 = vmatpush1.bf16.msra.mxu0 0
    %1401 = vmatprep.subr.bf16.mxu0 0
    %1402 = vmatpush1.bf16.msra.mxu0 0
    %1403 = vmatprep.subr.bf16.mxu0 0
    %1404 = vmatpush1.bf16.msra.mxu0 0
    %1405 = vmatprep.subr.bf16.mxu0 0
    %1406 = vmatpush1.bf16.msra.mxu0 0
    %1407 = vmatprep.subr.bf16.mxu0 0
    %1408 = vmatpush1.bf16.msra.mxu0 0
    %1409 = vmatprep.subr.bf16.mxu0 0
    %1410 = vmatpush1.bf16.msra.mxu0 0
    %1411 = vmatprep.subr.bf16.mxu0 0
    %1412 = vmatpush1.bf16.msra.mxu0 0
    %1413 = vmatprep.mubr.bf16.mxu0 0
    %1414 = vmatmul.mubr.bf16.gmra.mrb[0].mxu0 %v1379
    %v1415 = vpop.f32.mrb[0].mxu0
    %v1416 = vadd.f32 0.0, %v1415
    %v1417 = vpop.f32.mrb[0].mxu0
    %v1418 = vpop.f32.mrb[0].mxu0
    %v1419 = vpop.f32.mrb[0].mxu0
    %1420 = vdwg.mxu0
    %v1421 = vadd.f32 %v1260, %v1416
    %1422 = vrot.lane.b32.xlu0 %v953, 104
    %v1423 = vpop.permute.xlu0 %1422
    %1424 = vrot.lane.b32.xlu0 %v953, 72
    %v1425 = vpop.permute.xlu0 %1424
    %v1427 = vsel %vm317, %v1423, 0
    %v1430 = vsel %vm317, %v1425, 0
    %1432 = vmatprep.subr.bf16.mxu0 0
    %1433 = vmatpush1.bf16.xpose.msra.mxu0 %v1430
    %1434 = vmatprep.subr.bf16.mxu0 0
    %1435 = vmatpush1.bf16.xpose.msra.mxu0 0
    %1436 = vmatprep.subr.bf16.mxu0 0
    %1437 = vmatpush1.bf16.xpose.msra.mxu0 0
    %1438 = vmatprep.subr.bf16.mxu0 0
    %1439 = vmatpush1.bf16.xpose.msra.mxu0 0
    %1440 = vmatprep.subr.bf16.mxu0 0
    %1441 = vmatpush1.bf16.xpose.msra.mxu0 0
    %1442 = vmatprep.subr.bf16.mxu0 0
    %1443 = vmatpush1.bf16.xpose.msra.mxu0 0
    %1444 = vmatprep.subr.bf16.mxu0 0
    %1445 = vmatpush1.bf16.xpose.msra.mxu0 0
    %1446 = vmatprep.subr.bf16.mxu0 0
    %1447 = vmatpush1.bf16.xpose.msra.mxu0 0
    %1448 = vmatprep.subr.bf16.mxu0 0
    %1449 = vmatpush1.bf16.xpose.msra.mxu0 0
    %1450 = vmatprep.subr.bf16.mxu0 0
    %1451 = vmatpush1.bf16.xpose.msra.mxu0 0
    %1452 = vmatprep.subr.bf16.mxu0 0
    %1453 = vmatpush1.bf16.xpose.msra.mxu0 0
    %1454 = vmatprep.subr.bf16.mxu0 0
    %1455 = vmatpush1.bf16.xpose.msra.mxu0 0
    %1456 = vmatprep.subr.bf16.mxu0 0
    %1457 = vmatpush1.bf16.xpose.msra.mxu0 0
    %1458 = vmatprep.subr.bf16.mxu0 0
    %1459 = vmatpush1.bf16.xpose.msra.mxu0 0
    %1460 = vmatprep.subr.bf16.mxu0 0
    %1461 = vmatpush1.bf16.xpose.msra.mxu0 0
    %1462 = vmatprep.subr.bf16.mxu0 0
    %1463 = vmatpush1.bf16.xpose.msra.mxu0 0
    %1464 = vmatprep.mubr.bf16.mxu0 0
    %1465 = vmatmul.mubr.bf16.gmra.mrb[0].mxu0 %v1427
    %v1466 = vpop.f32.mrb[0].mxu0
    %v1467 = vadd.f32 0.0, %v1466
    %v1468 = vpop.f32.mrb[0].mxu0
    %v1469 = vpop.f32.mrb[0].mxu0
    %v1470 = vpop.f32.mrb[0].mxu0
    %1471 = vdwg.mxu0
    %v1472 = vmul.f32 %v1467, 0.35355338
    %v1473 = vadd.f32 %v1472, %v240
    %v1474 = vsel %vm317, %v1473, -inf
    %1475 = vmax.xlane.f32.xlu0 %v1474
    %v1476 = vpop.xlane.xlu0 %1475
    %v1477 = vsub.f32 %v1473, %v1476
    %v1478 = vmul.f32 %v1477, 1.442695
    %v1479 = vpow.pop %v1478
    %v1480 = vsel %vm317, %v1479, 0.0
    %1481 = vadd.xlane.f32.xlu0 %v1480
    %v1482 = vpop.xlane.xlu0 %1481
    %v1483 = vrcp.pop %v1482
    %v1484 = vmul.f32 %v1479, %v1483
    %v1485 = vpack.c.bf16 %v1484, %v1484
    %1486 = vrot.lane.b32.xlu0 %v953, 40
    %v1487 = vpop.permute.xlu0 %1486
    %v1489 = vsel %vm317, %v1485, 0
    %v1492 = vsel %vm383, %v1487, 0
    %1494 = vmatprep.subr.bf16.mxu0 0
    %1495 = vmatpush1.bf16.msra.mxu0 %v1492
    %1496 = vmatprep.subr.bf16.mxu0 0
    %1497 = vmatpush1.bf16.msra.mxu0 0
    %1498 = vmatprep.subr.bf16.mxu0 0
    %1499 = vmatpush1.bf16.msra.mxu0 0
    %1500 = vmatprep.subr.bf16.mxu0 0
    %1501 = vmatpush1.bf16.msra.mxu0 0
    %1502 = vmatprep.subr.bf16.mxu0 0
    %1503 = vmatpush1.bf16.msra.mxu0 0
    %1504 = vmatprep.subr.bf16.mxu0 0
    %1505 = vmatpush1.bf16.msra.mxu0 0
    %1506 = vmatprep.subr.bf16.mxu0 0
    %1507 = vmatpush1.bf16.msra.mxu0 0
    %1508 = vmatprep.subr.bf16.mxu0 0
    %1509 = vmatpush1.bf16.msra.mxu0 0
    %1510 = vmatprep.subr.bf16.mxu0 0
    %1511 = vmatpush1.bf16.msra.mxu0 0
    %1512 = vmatprep.subr.bf16.mxu0 0
    %1513 = vmatpush1.bf16.msra.mxu0 0
    %1514 = vmatprep.subr.bf16.mxu0 0
    %1515 = vmatpush1.bf16.msra.mxu0 0
    %1516 = vmatprep.subr.bf16.mxu0 0
    %1517 = vmatpush1.bf16.msra.mxu0 0
    %1518 = vmatprep.subr.bf16.mxu0 0
    %1519 = vmatpush1.bf16.msra.mxu0 0
    %1520 = vmatprep.subr.bf16.mxu0 0
    %1521 = vmatpush1.bf16.msra.mxu0 0
    %1522 = vmatprep.subr.bf16.mxu0 0
    %1523 = vmatpush1.bf16.msra.mxu0 0
    %1524 = vmatprep.subr.bf16.mxu0 0
    %1525 = vmatpush1.bf16.msra.mxu0 0
    %1526 = vmatprep.mubr.bf16.mxu0 0
    %1527 = vmatmul.mubr.bf16.gmra.mrb[0].mxu0 %v1489
    %v1528 = vpop.f32.mrb[0].mxu0
    %v1529 = vadd.f32 0.0, %v1528
    %v1530 = vpop.f32.mrb[0].mxu0
    %v1531 = vpop.f32.mrb[0].mxu0
    %v1532 = vpop.f32.mrb[0].mxu0
    %1533 = vdwg.mxu0
    %v1534 = vpack.c.bf16 %v1529, %v1529
    %v1536 = vsel %vm317, %v1534, 0
    %1538 = vmatprep.subr.bf16.mxu0 0
    %1539 = vmatpush1.bf16.msra.mxu0 %v910
    %1540 = vmatprep.subr.bf16.mxu0 0
    %1541 = vmatpush1.bf16.msra.mxu0 0
    %1542 = vmatprep.subr.bf16.mxu0 0
    %1543 = vmatpush1.bf16.msra.mxu0 0
    %1544 = vmatprep.subr.bf16.mxu0 0
    %1545 = vmatpush1.bf16.msra.mxu0 0
    %1546 = vmatprep.subr.bf16.mxu0 0
    %1547 = vmatpush1.bf16.msra.mxu0 0
    %1548 = vmatprep.subr.bf16.mxu0 0
    %1549 = vmatpush1.bf16.msra.mxu0 0
    %1550 = vmatprep.subr.bf16.mxu0 0
    %1551 = vmatpush1.bf16.msra.mxu0 0
    %1552 = vmatprep.subr.bf16.mxu0 0
    %1553 = vmatpush1.bf16.msra.mxu0 0
    %1554 = vmatprep.subr.bf16.mxu0 0
    %1555 = vmatpush1.bf16.msra.mxu0 0
    %1556 = vmatprep.subr.bf16.mxu0 0
    %1557 = vmatpush1.bf16.msra.mxu0 0
    %1558 = vmatprep.subr.bf16.mxu0 0
    %1559 = vmatpush1.bf16.msra.mxu0 0
    %1560 = vmatprep.subr.bf16.mxu0 0
    %1561 = vmatpush1.bf16.msra.mxu0 0
    %1562 = vmatprep.subr.bf16.mxu0 0
    %1563 = vmatpush1.bf16.msra.mxu0 0
    %1564 = vmatprep.subr.bf16.mxu0 0
    %1565 = vmatpush1.bf16.msra.mxu0 0
    %1566 = vmatprep.subr.bf16.mxu0 0
    %1567 = vmatpush1.bf16.msra.mxu0 0
    %1568 = vmatprep.subr.bf16.mxu0 0
    %1569 = vmatpush1.bf16.msra.mxu0 0
    %1570 = vmatprep.mubr.bf16.mxu0 0
    %1571 = vmatmul.mubr.bf16.gmra.mrb[0].mxu0 %v1536
    %v1572 = vpop.f32.mrb[0].mxu0
    %v1573 = vadd.f32 0.0, %v1572
    %v1574 = vpop.f32.mrb[0].mxu0
    %v1575 = vpop.f32.mrb[0].mxu0
    %v1576 = vpop.f32.mrb[0].mxu0
    %1577 = vdwg.mxu0
    %v1578 = vadd.f32 %v1421, %v1573
    %v1579 = vld [vmem:[%s10] sm:$0x1]
    %v1581 = vlaneseq
    %v1582 = vshrl.u32 %v1581, 7
    %v1583 = vsub.s32 0, %v1582
    %v1584 = vrot.slane %v1579, %v1583
    %v1586 = vadd.f32 %v952, %v1584
    %v1587 = vadd.f32 %v1578, %v1584
    %v1588 = vadd.f32 %v1586, %v227
    %v1589 = vadd.f32 %v1587, %v228
    %v1590 = vld [vmem:[%s11] sm:$0x1]
    %v1591 = vld [vmem:[%s12] sm:$0x1]
    %v1592 = vsel %vm185, %v1588, 0.0
    %1593 = vadd.xlane.f32.xlu0 %v1592
    %v1594 = vpop.xlane.xlu0 %1593
    %v1595 = vsel %vm185, %v1589, 0.0
    %1596 = vadd.xlane.f32.xlu0 %v1595
    %v1597 = vpop.xlane.xlu0 %1596
    %v1598 = vmul.f32 %v1594, %v192
    %v1599 = vmul.f32 %v1597, %v192
    %v1600 = vsub.f32 %v1588, %v1598
    %v1601 = vsub.f32 %v1589, %v1599
    %v1602 = vmul.f32 %v1600, %v1600
    %v1603 = vmul.f32 %v1601, %v1601
    %v1604 = vsel %vm185, %v1602, 0.0
    %1605 = vadd.xlane.f32.xlu0 %v1604
    %v1606 = vpop.xlane.xlu0 %1605
    %v1607 = vsel %vm185, %v1603, 0.0
    %1608 = vadd.xlane.f32.xlu0 %v1607
    %v1609 = vpop.xlane.xlu0 %1608
    %v1610 = vmul.f32 %v1606, %v192
    %v1611 = vmul.f32 %v1609, %v192
    %v1612 = vadd.f32 %v1610, 1e-12
    %v1613 = vadd.f32 %v1611, 1e-12
    %v1614 = vrsqrt.pop %v1612
    %v1615 = vrsqrt.pop %v1613
    %v1616 = vmul.f32 %v1600, %v1614
    %v1617 = vmul.f32 %v1601, %v1615
    %v1619 = vlaneseq
    %v1620 = vshrl.u32 %v1619, 7
    %v1621 = vsub.s32 0, %v1620
    %v1622 = vrot.slane %v1590, %v1621
    %v1624 = vmul.f32 %v1616, %v1622
    %v1625 = vmul.f32 %v1617, %v1622
    %v1627 = vlaneseq
    %v1628 = vshrl.u32 %v1627, 7
    %v1629 = vsub.s32 0, %v1628
    %v1630 = vrot.slane %v1591, %v1629
    %v1632 = vadd.f32 %v1624, %v1630
    %v1633 = vadd.f32 %v1625, %v1630
    %v1634 = vld [vmem:[%s13] sm:$0xf]
    %v1635 = vld [vmem:[%s13 + $0x4] sm:$0xf]
    %v1636 = vld [vmem:[%s13 + $0x8] sm:$0xf]
    %v1637 = vld [vmem:[%s13 + $0xc] sm:$0xf]
    %v1638 = vld [vmem:[%s14] sm:$0x1]
    %v1639 = vpack.c.bf16 %v1633, %v1632
    %v1641 = vlaneseq
    %v1642 = vshrl.u32 %v1641, 7
    %v1643 = vsub.s32 0, %v1642
    %v1644 = vrot.slane %v1638, %v1643
    %v1650 = vunpack.c.l.b16 %v1634
    %v1651 = vunpack.c.l.b16 %v1635
    %v1652 = vunpack.c.l.b16 %v1636
    %v1653 = vunpack.c.l.b16 %v1637
    %v1654 = vpack.c.b16 %v1651, %v1650
    %v1655 = vpack.c.b16 %v1653, %v1652
    %v1659 = vsel %vm185, %v1639, 0
    %1661 = vmatprep.subr.bf16.mxu0 0
    %1662 = vmatpush1.bf16.msra.mxu0 %v1654
    %1663 = vmatprep.subr.bf16.mxu0 0
    %1664 = vmatpush1.bf16.msra.mxu0 %v1655
    %1665 = vmatprep.subr.bf16.mxu0 0
    %1666 = vmatpush1.bf16.msra.mxu0 0
    %1667 = vmatprep.subr.bf16.mxu0 0
    %1668 = vmatpush1.bf16.msra.mxu0 0
    %1669 = vmatprep.subr.bf16.mxu0 0
    %1670 = vmatpush1.bf16.msra.mxu0 0
    %1671 = vmatprep.subr.bf16.mxu0 0
    %1672 = vmatpush1.bf16.msra.mxu0 0
    %1673 = vmatprep.subr.bf16.mxu0 0
    %1674 = vmatpush1.bf16.msra.mxu0 0
    %1675 = vmatprep.subr.bf16.mxu0 0
    %1676 = vmatpush1.bf16.msra.mxu0 0
    %1677 = vmatprep.subr.bf16.mxu0 0
    %1678 = vmatpush1.bf16.msra.mxu0 0
    %1679 = vmatprep.subr.bf16.mxu0 0
    %1680 = vmatpush1.bf16.msra.mxu0 0
    %1681 = vmatprep.subr.bf16.mxu0 0
    %1682 = vmatpush1.bf16.msra.mxu0 0
    %1683 = vmatprep.subr.bf16.mxu0 0
    %1684 = vmatpush1.bf16.msra.mxu0 0
    %1685 = vmatprep.subr.bf16.mxu0 0
    %1686 = vmatpush1.bf16.msra.mxu0 0
    %1687 = vmatprep.subr.bf16.mxu0 0
    %1688 = vmatpush1.bf16.msra.mxu0 0
    %1689 = vmatprep.subr.bf16.mxu0 0
    %1690 = vmatpush1.bf16.msra.mxu0 0
    %1691 = vmatprep.subr.bf16.mxu0 0
    %1692 = vmatpush1.bf16.msra.mxu0 0
    %1693 = vmatprep.mubr.bf16.mxu0 0
    %1694 = vmatmul.mubr.bf16.gmra.mrb[0].mxu0 %v1659
    %v1695 = vpop.f32.mrb[0].mxu0
    %v1696 = vadd.f32 %v1644, %v1695
    %v1697 = vpop.f32.mrb[0].mxu0
    %v1698 = vpop.f32.mrb[0].mxu0
    %v1699 = vadd.f32 %v1644, %v1698
    %v1700 = vpop.f32.mrb[0].mxu0
    %1701 = vdwg.mxu0
    %v1702 = vmul.f32 %v1696, 0.5
    %v1703 = vmul.f32 %v1699, 0.5
    %v1704 = vmul.f32 %v1696, 0.044715
    %v1705 = vmul.f32 %v1699, 0.044715
    %v1706 = vmul.f32 %v1704, %v1696
    %v1707 = vmul.f32 %v1705, %v1699
    %v1708 = vmul.f32 %v1706, %v1696
    %v1709 = vmul.f32 %v1707, %v1699
    %v1710 = vadd.f32 %v1696, %v1708
    %v1711 = vadd.f32 %v1699, %v1709
    %v1712 = vmul.f32 %v1710, 0.7978846
    %v1713 = vmul.f32 %v1711, 0.7978846
    %v1714 = vtanh.pop %v1712
    %v1715 = vtanh.pop %v1713
    %v1716 = vadd.f32 %v1714, 1.0
    %v1717 = vadd.f32 %v1715, 1.0
    %v1718 = vmul.f32 %v1702, %v1716
    %v1719 = vmul.f32 %v1703, %v1717
    %v1720 = vld [vmem:[%s15] sm:$0xf]
    %v1721 = vld [vmem:[%s15 + $0x4] sm:$0xf]
    %v1722 = vld [vmem:[%s15 + $0x8] sm:$0xf]
    %v1723 = vld [vmem:[%s15 + $0xc] sm:$0xf]
    %v1724 = vld [vmem:[%s15 + $0x10] sm:$0xf]
    %v1725 = vld [vmem:[%s15 + $0x14] sm:$0xf]
    %v1726 = vld [vmem:[%s15 + $0x18] sm:$0xf]
    %v1727 = vld [vmem:[%s15 + $0x1c] sm:$0xf]
    %v1728 = vld [vmem:[%s16] sm:$0x1]
    %v1729 = vpack.c.bf16 %v1719, %v1718
    %v1731 = vlaneseq
    %v1732 = vshrl.u32 %v1731, 7
    %v1733 = vsub.s32 0, %v1732
    %v1734 = vrot.slane %v1728, %v1733
    %v1744 = vunpack.c.l.b16 %v1720
    %v1745 = vunpack.c.l.b16 %v1721
    %v1746 = vunpack.c.l.b16 %v1722
    %v1747 = vunpack.c.l.b16 %v1723
    %v1748 = vunpack.c.l.b16 %v1724
    %v1749 = vunpack.c.l.b16 %v1725
    %v1750 = vunpack.c.l.b16 %v1726
    %v1751 = vunpack.c.l.b16 %v1727
    %v1752 = vpack.c.b16 %v1745, %v1744
    %v1753 = vpack.c.b16 %v1747, %v1746
    %v1754 = vpack.c.b16 %v1749, %v1748
    %v1755 = vpack.c.b16 %v1751, %v1750
    %v1761 = vsel %vm101, %v1729, 0
    %1763 = vmatprep.subr.bf16.mxu0 0
    %1764 = vmatpush1.bf16.msra.mxu0 %v1752
    %1765 = vmatprep.subr.bf16.mxu0 0
    %1766 = vmatpush1.bf16.msra.mxu0 %v1753
    %1767 = vmatprep.subr.bf16.mxu0 0
    %1768 = vmatpush1.bf16.msra.mxu0 %v1754
    %1769 = vmatprep.subr.bf16.mxu0 0
    %1770 = vmatpush1.bf16.msra.mxu0 %v1755
    %1771 = vmatprep.subr.bf16.mxu0 0
    %1772 = vmatpush1.bf16.msra.mxu0 0
    %1773 = vmatprep.subr.bf16.mxu0 0
    %1774 = vmatpush1.bf16.msra.mxu0 0
    %1775 = vmatprep.subr.bf16.mxu0 0
    %1776 = vmatpush1.bf16.msra.mxu0 0
    %1777 = vmatprep.subr.bf16.mxu0 0
    %1778 = vmatpush1.bf16.msra.mxu0 0
    %1779 = vmatprep.subr.bf16.mxu0 0
    %1780 = vmatpush1.bf16.msra.mxu0 0
    %1781 = vmatprep.subr.bf16.mxu0 0
    %1782 = vmatpush1.bf16.msra.mxu0 0
    %1783 = vmatprep.subr.bf16.mxu0 0
    %1784 = vmatpush1.bf16.msra.mxu0 0
    %1785 = vmatprep.subr.bf16.mxu0 0
    %1786 = vmatpush1.bf16.msra.mxu0 0
    %1787 = vmatprep.subr.bf16.mxu0 0
    %1788 = vmatpush1.bf16.msra.mxu0 0
    %1789 = vmatprep.subr.bf16.mxu0 0
    %1790 = vmatpush1.bf16.msra.mxu0 0
    %1791 = vmatprep.subr.bf16.mxu0 0
    %1792 = vmatpush1.bf16.msra.mxu0 0
    %1793 = vmatprep.subr.bf16.mxu0 0
    %1794 = vmatpush1.bf16.msra.mxu0 0
    %1795 = vmatprep.mubr.bf16.mxu0 0
    %1796 = vmatmul.mubr.bf16.gmra.mrb[0].mxu0 %v1761
    %v1797 = vpop.f32.mrb[0].mxu0
    %v1798 = vadd.f32 %v1734, %v1797
    %v1799 = vpop.f32.mrb[0].mxu0
    %v1800 = vpop.f32.mrb[0].mxu0
    %v1801 = vadd.f32 %v1734, %v1800
    %v1802 = vpop.f32.mrb[0].mxu0
    %1803 = vdwg.mxu0
    %v1804 = vadd.f32 %v1798, %v1632
    %v1805 = vadd.f32 %v1801, %v1633
    %v1806 = vld [vmem:[%s17] sm:$0x1]
    %v1807 = vld [vmem:[%s18] sm:$0x1]
    %v1808 = vsel %vm185, %v1804, 0.0
    %1809 = vadd.xlane.f32.xlu0 %v1808
    %v1810 = vpop.xlane.xlu0 %1809
    %v1811 = vsel %vm185, %v1805, 0.0
    %1812 = vadd.xlane.f32.xlu0 %v1811
    %v1813 = vpop.xlane.xlu0 %1812
    %v1814 = vmul.f32 %v1810, %v192
    %v1815 = vmul.f32 %v1813, %v192
    %v1816 = vsub.f32 %v1804, %v1814
    %v1817 = vsub.f32 %v1805, %v1815
    %v1818 = vmul.f32 %v1816, %v1816
    %v1819 = vmul.f32 %v1817, %v1817
    %v1820 = vsel %vm185, %v1818, 0.0
    %1821 = vadd.xlane.f32.xlu0 %v1820
    %v1822 = vpop.xlane.xlu0 %1821
    %v1823 = vsel %vm185, %v1819, 0.0
    %1824 = vadd.xlane.f32.xlu0 %v1823
    %v1825 = vpop.xlane.xlu0 %1824
    %v1826 = vmul.f32 %v1822, %v192
    %v1827 = vmul.f32 %v1825, %v192
    %v1828 = vadd.f32 %v1826, 1e-12
    %v1829 = vadd.f32 %v1827, 1e-12
    %v1830 = vrsqrt.pop %v1828
    %v1831 = vrsqrt.pop %v1829
    %v1832 = vmul.f32 %v1816, %v1830
    %v1833 = vmul.f32 %v1817, %v1831
    %v1835 = vlaneseq
    %v1836 = vshrl.u32 %v1835, 7
    %v1837 = vsub.s32 0, %v1836
    %v1838 = vrot.slane %v1806, %v1837
    %v1840 = vmul.f32 %v1832, %v1838
    %v1841 = vmul.f32 %v1833, %v1838
    %v1843 = vlaneseq
    %v1844 = vshrl.u32 %v1843, 7
    %v1845 = vsub.s32 0, %v1844
    %v1846 = vrot.slane %v1807, %v1845
    %v1848 = vadd.f32 %v1840, %v1846
    %v1849 = vadd.f32 %v1841, %v1846
    %s1850 = scalar_lea.vmem %s7, 16
    %v1851 = vld [vmem:[%s1850] sm:$0xf]
    %v1852 = vld [vmem:[%s1850 + $0x4] sm:$0xf]
    %v1853 = vld [vmem:[%s1850 + $0x8] sm:$0xf]
    %v1854 = vld [vmem:[%s1850 + $0xc] sm:$0xf]
    %s1855 = scalar_lea.vmem %s9, 16
    %v1856 = vld [vmem:[%s1855] sm:$0xf]
    %v1857 = vld [vmem:[%s1855 + $0x4] sm:$0xf]
    %v1858 = vld [vmem:[%s1855 + $0x8] sm:$0xf]
    %v1859 = vld [vmem:[%s1855 + $0xc] sm:$0xf]
    %s1860 = scalar_lea.vmem %s8, 1
    %v1861 = vld [vmem:[%s1860] sm:$0x1]
    %v1862 = vpack.c.bf16 %v1849, %v1848
    %v1864 = vlaneseq
    %v1865 = vshrl.u32 %v1864, 7
    %v1866 = vsub.s32 0, %v1865
    %v1867 = vrot.slane %v1861, %v1866
    %v1873 = vunpack.c.l.b16 %v1851
    %v1874 = vunpack.c.l.b16 %v1852
    %v1875 = vunpack.c.l.b16 %v1853
    %v1876 = vunpack.c.l.b16 %v1854
    %v1877 = vpack.c.b16 %v1874, %v1873
    %v1878 = vpack.c.b16 %v1876, %v1875
    %v1882 = vsel %vm185, %v1862, 0
    %1884 = vmatprep.subr.bf16.mxu0 0
    %1885 = vmatpush1.bf16.msra.mxu0 %v1877
    %1886 = vmatprep.subr.bf16.mxu0 0
    %1887 = vmatpush1.bf16.msra.mxu0 %v1878
    %1888 = vmatprep.subr.bf16.mxu0 0
    %1889 = vmatpush1.bf16.msra.mxu0 0
    %1890 = vmatprep.subr.bf16.mxu0 0
    %1891 = vmatpush1.bf16.msra.mxu0 0
    %1892 = vmatprep.subr.bf16.mxu0 0
    %1893 = vmatpush1.bf16.msra.mxu0 0
    %1894 = vmatprep.subr.bf16.mxu0 0
    %1895 = vmatpush1.bf16.msra.mxu0 0
    %1896 = vmatprep.subr.bf16.mxu0 0
    %1897 = vmatpush1.bf16.msra.mxu0 0
    %1898 = vmatprep.subr.bf16.mxu0 0
    %1899 = vmatpush1.bf16.msra.mxu0 0
    %1900 = vmatprep.subr.bf16.mxu0 0
    %1901 = vmatpush1.bf16.msra.mxu0 0
    %1902 = vmatprep.subr.bf16.mxu0 0
    %1903 = vmatpush1.bf16.msra.mxu0 0
    %1904 = vmatprep.subr.bf16.mxu0 0
    %1905 = vmatpush1.bf16.msra.mxu0 0
    %1906 = vmatprep.subr.bf16.mxu0 0
    %1907 = vmatpush1.bf16.msra.mxu0 0
    %1908 = vmatprep.subr.bf16.mxu0 0
    %1909 = vmatpush1.bf16.msra.mxu0 0
    %1910 = vmatprep.subr.bf16.mxu0 0
    %1911 = vmatpush1.bf16.msra.mxu0 0
    %1912 = vmatprep.subr.bf16.mxu0 0
    %1913 = vmatpush1.bf16.msra.mxu0 0
    %1914 = vmatprep.subr.bf16.mxu0 0
    %1915 = vmatpush1.bf16.msra.mxu0 0
    %1916 = vmatprep.mubr.bf16.mxu0 0
    %1917 = vmatmul.mubr.bf16.gmra.mrb[0].mxu0 %v1882
    %v1918 = vpop.f32.mrb[0].mxu0
    %v1919 = vadd.f32 %v1867, %v1918
    %v1920 = vpop.f32.mrb[0].mxu0
    %v1921 = vpop.f32.mrb[0].mxu0
    %v1922 = vadd.f32 %v1867, %v1921
    %v1923 = vpop.f32.mrb[0].mxu0
    %1924 = vdwg.mxu0
    %v1925 = vpack.c.bf16 %v1919, %v1919
    %1927 = vrot.lane.b32.xlu0 %v1925, 96
    %v1928 = vpop.permute.xlu0 %1927
    %v1930 = vsel %vm317, %v1925, 0
    %v1933 = vsel %vm317, %v1928, 0
    %1935 = vmatprep.subr.bf16.mxu0 0
    %1936 = vmatpush1.bf16.xpose.msra.mxu0 %v1933
    %1937 = vmatprep.subr.bf16.mxu0 0
    %1938 = vmatpush1.bf16.xpose.msra.mxu0 0
    %1939 = vmatprep.subr.bf16.mxu0 0
    %1940 = vmatpush1.bf16.xpose.msra.mxu0 0
    %1941 = vmatprep.subr.bf16.mxu0 0
    %1942 = vmatpush1.bf16.xpose.msra.mxu0 0
    %1943 = vmatprep.subr.bf16.mxu0 0
    %1944 = vmatpush1.bf16.xpose.msra.mxu0 0
    %1945 = vmatprep.subr.bf16.mxu0 0
    %1946 = vmatpush1.bf16.xpose.msra.mxu0 0
    %1947 = vmatprep.subr.bf16.mxu0 0
    %1948 = vmatpush1.bf16.xpose.msra.mxu0 0
    %1949 = vmatprep.subr.bf16.mxu0 0
    %1950 = vmatpush1.bf16.xpose.msra.mxu0 0
    %1951 = vmatprep.subr.bf16.mxu0 0
    %1952 = vmatpush1.bf16.xpose.msra.mxu0 0
    %1953 = vmatprep.subr.bf16.mxu0 0
    %1954 = vmatpush1.bf16.xpose.msra.mxu0 0
    %1955 = vmatprep.subr.bf16.mxu0 0
    %1956 = vmatpush1.bf16.xpose.msra.mxu0 0
    %1957 = vmatprep.subr.bf16.mxu0 0
    %1958 = vmatpush1.bf16.xpose.msra.mxu0 0
    %1959 = vmatprep.subr.bf16.mxu0 0
    %1960 = vmatpush1.bf16.xpose.msra.mxu0 0
    %1961 = vmatprep.subr.bf16.mxu0 0
    %1962 = vmatpush1.bf16.xpose.msra.mxu0 0
    %1963 = vmatprep.subr.bf16.mxu0 0
    %1964 = vmatpush1.bf16.xpose.msra.mxu0 0
    %1965 = vmatprep.subr.bf16.mxu0 0
    %1966 = vmatpush1.bf16.xpose.msra.mxu0 0
    %1967 = vmatprep.mubr.bf16.mxu0 0
    %1968 = vmatmul.mubr.bf16.gmra.mrb[0].mxu0 %v1930
    %v1969 = vpop.f32.mrb[0].mxu0
    %v1970 = vadd.f32 0.0, %v1969
    %v1971 = vpop.f32.mrb[0].mxu0
    %v1972 = vpop.f32.mrb[0].mxu0
    %v1973 = vpop.f32.mrb[0].mxu0
    %1974 = vdwg.mxu0
    %v1975 = vmul.f32 %v1970, 0.35355338
    %v1976 = vadd.f32 %v1975, %v236
    %v1977 = vsel %vm317, %v1976, -inf
    %1978 = vmax.xlane.f32.xlu0 %v1977
    %v1979 = vpop.xlane.xlu0 %1978
    %v1980 = vsub.f32 %v1976, %v1979
    %v1981 = vmul.f32 %v1980, 1.442695
    %v1982 = vpow.pop %v1981
    %v1983 = vsel %vm317, %v1982, 0.0
    %1984 = vadd.xlane.f32.xlu0 %v1983
    %v1985 = vpop.xlane.xlu0 %1984
    %v1986 = vrcp.pop %v1985
    %v1987 = vmul.f32 %v1982, %v1986
    %v1988 = vpack.c.bf16 %v1987, %v1987
    %1989 = vrot.lane.b32.xlu0 %v1925, 64
    %v1990 = vpop.permute.xlu0 %1989
    %v1992 = vsel %vm317, %v1988, 0
    %v1995 = vsel %vm383, %v1990, 0
    %1997 = vmatprep.subr.bf16.mxu0 0
    %1998 = vmatpush1.bf16.msra.mxu0 %v1995
    %1999 = vmatprep.subr.bf16.mxu0 0
    %2000 = vmatpush1.bf16.msra.mxu0 0
    %2001 = vmatprep.subr.bf16.mxu0 0
    %2002 = vmatpush1.bf16.msra.mxu0 0
    %2003 = vmatprep.subr.bf16.mxu0 0
    %2004 = vmatpush1.bf16.msra.mxu0 0
    %2005 = vmatprep.subr.bf16.mxu0 0
    %2006 = vmatpush1.bf16.msra.mxu0 0
    %2007 = vmatprep.subr.bf16.mxu0 0
    %2008 = vmatpush1.bf16.msra.mxu0 0
    %2009 = vmatprep.subr.bf16.mxu0 0
    %2010 = vmatpush1.bf16.msra.mxu0 0
    %2011 = vmatprep.subr.bf16.mxu0 0
    %2012 = vmatpush1.bf16.msra.mxu0 0
    %2013 = vmatprep.subr.bf16.mxu0 0
    %2014 = vmatpush1.bf16.msra.mxu0 0
    %2015 = vmatprep.subr.bf16.mxu0 0
    %2016 = vmatpush1.bf16.msra.mxu0 0
    %2017 = vmatprep.subr.bf16.mxu0 0
    %2018 = vmatpush1.bf16.msra.mxu0 0
    %2019 = vmatprep.subr.bf16.mxu0 0
    %2020 = vmatpush1.bf16.msra.mxu0 0
    %2021 = vmatprep.subr.bf16.mxu0 0
    %2022 = vmatpush1.bf16.msra.mxu0 0
    %2023 = vmatprep.subr.bf16.mxu0 0
    %2024 = vmatpush1.bf16.msra.mxu0 0
    %2025 = vmatprep.subr.bf16.mxu0 0
    %2026 = vmatpush1.bf16.msra.mxu0 0
    %2027 = vmatprep.subr.bf16.mxu0 0
    %2028 = vmatpush1.bf16.msra.mxu0 0
    %2029 = vmatprep.mubr.bf16.mxu0 0
    %2030 = vmatmul.mubr.bf16.gmra.mrb[0].mxu0 %v1992
    %v2031 = vpop.f32.mrb[0].mxu0
    %v2032 = vadd.f32 0.0, %v2031
    %v2033 = vpop.f32.mrb[0].mxu0
    %v2034 = vpop.f32.mrb[0].mxu0
    %v2035 = vpop.f32.mrb[0].mxu0
    %2036 = vdwg.mxu0
    %v2037 = vpack.c.bf16 %v2032, %v2032
    %2038 = vrot.lane.b32.xlu0 %v1925, 120
    %v2039 = vpop.permute.xlu0 %2038
    %2040 = vrot.lane.b32.xlu0 %v1925, 88
    %v2041 = vpop.permute.xlu0 %2040
    %v2043 = vsel %vm317, %v2039, 0
    %v2046 = vsel %vm317, %v2041, 0
    %2048 = vmatprep.subr.bf16.mxu0 0
    %2049 = vmatpush1.bf16.xpose.msra.mxu0 %v2046
    %2050 = vmatprep.subr.bf16.mxu0 0
    %2051 = vmatpush1.bf16.xpose.msra.mxu0 0
    %2052 = vmatprep.subr.bf16.mxu0 0
    %2053 = vmatpush1.bf16.xpose.msra.mxu0 0
    %2054 = vmatprep.subr.bf16.mxu0 0
    %2055 = vmatpush1.bf16.xpose.msra.mxu0 0
    %2056 = vmatprep.subr.bf16.mxu0 0
    %2057 = vmatpush1.bf16.xpose.msra.mxu0 0
    %2058 = vmatprep.subr.bf16.mxu0 0
    %2059 = vmatpush1.bf16.xpose.msra.mxu0 0
    %2060 = vmatprep.subr.bf16.mxu0 0
    %2061 = vmatpush1.bf16.xpose.msra.mxu0 0
    %2062 = vmatprep.subr.bf16.mxu0 0
    %2063 = vmatpush1.bf16.xpose.msra.mxu0 0
    %2064 = vmatprep.subr.bf16.mxu0 0
    %2065 = vmatpush1.bf16.xpose.msra.mxu0 0
    %2066 = vmatprep.subr.bf16.mxu0 0
    %2067 = vmatpush1.bf16.xpose.msra.mxu0 0
    %2068 = vmatprep.subr.bf16.mxu0 0
    %2069 = vmatpush1.bf16.xpose.msra.mxu0 0
    %2070 = vmatprep.subr.bf16.mxu0 0
    %2071 = vmatpush1.bf16.xpose.msra.mxu0 0
    %2072 = vmatprep.subr.bf16.mxu0 0
    %2073 = vmatpush1.bf16.xpose.msra.mxu0 0
    %2074 = vmatprep.subr.bf16.mxu0 0
    %2075 = vmatpush1.bf16.xpose.msra.mxu0 0
    %2076 = vmatprep.subr.bf16.mxu0 0
    %2077 = vmatpush1.bf16.xpose.msra.mxu0 0
    %2078 = vmatprep.subr.bf16.mxu0 0
    %2079 = vmatpush1.bf16.xpose.msra.mxu0 0
    %2080 = vmatprep.mubr.bf16.mxu0 0
    %2081 = vmatmul.mubr.bf16.gmra.mrb[0].mxu0 %v2043
    %v2082 = vpop.f32.mrb[0].mxu0
    %v2083 = vadd.f32 0.0, %v2082
    %v2084 = vpop.f32.mrb[0].mxu0
    %v2085 = vpop.f32.mrb[0].mxu0
    %v2086 = vpop.f32.mrb[0].mxu0
    %2087 = vdwg.mxu0
    %v2088 = vmul.f32 %v2083, 0.35355338
    %v2089 = vadd.f32 %v2088, %v236
    %v2090 = vsel %vm317, %v2089, -inf
    %2091 = vmax.xlane.f32.xlu0 %v2090
    %v2092 = vpop.xlane.xlu0 %2091
    %v2093 = vsub.f32 %v2089, %v2092
    %v2094 = vmul.f32 %v2093, 1.442695
    %v2095 = vpow.pop %v2094
    %v2096 = vsel %vm317, %v2095, 0.0
    %2097 = vadd.xlane.f32.xlu0 %v2096
    %v2098 = vpop.xlane.xlu0 %2097
    %v2099 = vrcp.pop %v2098
    %v2100 = vmul.f32 %v2095, %v2099
    %v2101 = vpack.c.bf16 %v2100, %v2100
    %2102 = vrot.lane.b32.xlu0 %v1925, 56
    %v2103 = vpop.permute.xlu0 %2102
    %v2105 = vsel %vm317, %v2101, 0
    %v2108 = vsel %vm383, %v2103, 0
    %2110 = vmatprep.subr.bf16.mxu0 0
    %2111 = vmatpush1.bf16.msra.mxu0 %v2108
    %2112 = vmatprep.subr.bf16.mxu0 0
    %2113 = vmatpush1.bf16.msra.mxu0 0
    %2114 = vmatprep.subr.bf16.mxu0 0
    %2115 = vmatpush1.bf16.msra.mxu0 0
    %2116 = vmatprep.subr.bf16.mxu0 0
    %2117 = vmatpush1.bf16.msra.mxu0 0
    %2118 = vmatprep.subr.bf16.mxu0 0
    %2119 = vmatpush1.bf16.msra.mxu0 0
    %2120 = vmatprep.subr.bf16.mxu0 0
    %2121 = vmatpush1.bf16.msra.mxu0 0
    %2122 = vmatprep.subr.bf16.mxu0 0
    %2123 = vmatpush1.bf16.msra.mxu0 0
    %2124 = vmatprep.subr.bf16.mxu0 0
    %2125 = vmatpush1.bf16.msra.mxu0 0
    %2126 = vmatprep.subr.bf16.mxu0 0
    %2127 = vmatpush1.bf16.msra.mxu0 0
    %2128 = vmatprep.subr.bf16.mxu0 0
    %2129 = vmatpush1.bf16.msra.mxu0 0
    %2130 = vmatprep.subr.bf16.mxu0 0
    %2131 = vmatpush1.bf16.msra.mxu0 0
    %2132 = vmatprep.subr.bf16.mxu0 0
    %2133 = vmatpush1.bf16.msra.mxu0 0
    %2134 = vmatprep.subr.bf16.mxu0 0
    %2135 = vmatpush1.bf16.msra.mxu0 0
    %2136 = vmatprep.subr.bf16.mxu0 0
    %2137 = vmatpush1.bf16.msra.mxu0 0
    %2138 = vmatprep.subr.bf16.mxu0 0
    %2139 = vmatpush1.bf16.msra.mxu0 0
    %2140 = vmatprep.subr.bf16.mxu0 0
    %2141 = vmatpush1.bf16.msra.mxu0 0
    %2142 = vmatprep.mubr.bf16.mxu0 0
    %2143 = vmatmul.mubr.bf16.gmra.mrb[0].mxu0 %v2105
    %v2144 = vpop.f32.mrb[0].mxu0
    %v2145 = vadd.f32 0.0, %v2144
    %v2146 = vpop.f32.mrb[0].mxu0
    %v2147 = vpop.f32.mrb[0].mxu0
    %v2148 = vpop.f32.mrb[0].mxu0
    %2149 = vdwg.mxu0
    %v2150 = vpack.c.bf16 %v2145, %v2145
    %v2152 = vsel %vm317, %v2150, 0
    %v2155 = vsel %vm383, %v1857, 0
    %2157 = vmatprep.subr.bf16.mxu0 0
    %2158 = vmatpush1.bf16.msra.mxu0 %v2155
    %2159 = vmatprep.subr.bf16.mxu0 0
    %2160 = vmatpush1.bf16.msra.mxu0 0
    %2161 = vmatprep.subr.bf16.mxu0 0
    %2162 = vmatpush1.bf16.msra.mxu0 0
    %2163 = vmatprep.subr.bf16.mxu0 0
    %2164 = vmatpush1.bf16.msra.mxu0 0
    %2165 = vmatprep.subr.bf16.mxu0 0
    %2166 = vmatpush1.bf16.msra.mxu0 0
    %2167 = vmatprep.subr.bf16.mxu0 0
    %2168 = vmatpush1.bf16.msra.mxu0 0
    %2169 = vmatprep.subr.bf16.mxu0 0
    %2170 = vmatpush1.bf16.msra.mxu0 0
    %2171 = vmatprep.subr.bf16.mxu0 0
    %2172 = vmatpush1.bf16.msra.mxu0 0
    %2173 = vmatprep.subr.bf16.mxu0 0
    %2174 = vmatpush1.bf16.msra.mxu0 0
    %2175 = vmatprep.subr.bf16.mxu0 0
    %2176 = vmatpush1.bf16.msra.mxu0 0
    %2177 = vmatprep.subr.bf16.mxu0 0
    %2178 = vmatpush1.bf16.msra.mxu0 0
    %2179 = vmatprep.subr.bf16.mxu0 0
    %2180 = vmatpush1.bf16.msra.mxu0 0
    %2181 = vmatprep.subr.bf16.mxu0 0
    %2182 = vmatpush1.bf16.msra.mxu0 0
    %2183 = vmatprep.subr.bf16.mxu0 0
    %2184 = vmatpush1.bf16.msra.mxu0 0
    %2185 = vmatprep.subr.bf16.mxu0 0
    %2186 = vmatpush1.bf16.msra.mxu0 0
    %2187 = vmatprep.subr.bf16.mxu0 0
    %2188 = vmatpush1.bf16.msra.mxu0 0
    %2189 = vmatprep.mubr.bf16.mxu0 0
    %2190 = vmatmul.mubr.bf16.gmra.mrb[0].mxu0 %v2152
    %v2191 = vpop.f32.mrb[0].mxu0
    %v2192 = vadd.f32 0.0, %v2191
    %v2193 = vpop.f32.mrb[0].mxu0
    %v2194 = vpop.f32.mrb[0].mxu0
    %v2195 = vpop.f32.mrb[0].mxu0
    %2196 = vdwg.mxu0
    %v2198 = vsel %vm317, %v2037, 0
    %v2201 = vsel %vm383, %v1856, 0
    %2203 = vmatprep.subr.bf16.mxu0 0
    %2204 = vmatpush1.bf16.msra.mxu0 %v2201
    %2205 = vmatprep.subr.bf16.mxu0 0
    %2206 = vmatpush1.bf16.msra.mxu0 0
    %2207 = vmatprep.subr.bf16.mxu0 0
    %2208 = vmatpush1.bf16.msra.mxu0 0
    %2209 = vmatprep.subr.bf16.mxu0 0
    %2210 = vmatpush1.bf16.msra.mxu0 0
    %2211 = vmatprep.subr.bf16.mxu0 0
    %2212 = vmatpush1.bf16.msra.mxu0 0
    %2213 = vmatprep.subr.bf16.mxu0 0
    %2214 = vmatpush1.bf16.msra.mxu0 0
    %2215 = vmatprep.subr.bf16.mxu0 0
    %2216 = vmatpush1.bf16.msra.mxu0 0
    %2217 = vmatprep.subr.bf16.mxu0 0
    %2218 = vmatpush1.bf16.msra.mxu0 0
    %2219 = vmatprep.subr.bf16.mxu0 0
    %2220 = vmatpush1.bf16.msra.mxu0 0
    %2221 = vmatprep.subr.bf16.mxu0 0
    %2222 = vmatpush1.bf16.msra.mxu0 0
    %2223 = vmatprep.subr.bf16.mxu0 0
    %2224 = vmatpush1.bf16.msra.mxu0 0
    %2225 = vmatprep.subr.bf16.mxu0 0
    %2226 = vmatpush1.bf16.msra.mxu0 0
    %2227 = vmatprep.subr.bf16.mxu0 0
    %2228 = vmatpush1.bf16.msra.mxu0 0
    %2229 = vmatprep.subr.bf16.mxu0 0
    %2230 = vmatpush1.bf16.msra.mxu0 0
    %2231 = vmatprep.subr.bf16.mxu0 0
    %2232 = vmatpush1.bf16.msra.mxu0 0
    %2233 = vmatprep.subr.bf16.mxu0 0
    %2234 = vmatpush1.bf16.msra.mxu0 0
    %2235 = vmatprep.mubr.bf16.mxu0 0
    %2236 = vmatmul.mubr.bf16.gmra.mrb[0].mxu0 %v2198
    %v2237 = vpop.f32.mrb[0].mxu0
    %v2238 = vadd.f32 %v2192, %v2237
    %v2239 = vpop.f32.mrb[0].mxu0
    %v2240 = vpop.f32.mrb[0].mxu0
    %v2241 = vpop.f32.mrb[0].mxu0
    %2242 = vdwg.mxu0
    %2243 = vrot.lane.b32.xlu0 %v1925, 112
    %v2244 = vpop.permute.xlu0 %2243
    %2245 = vrot.lane.b32.xlu0 %v1925, 80
    %v2246 = vpop.permute.xlu0 %2245
    %v2248 = vsel %vm317, %v2244, 0
    %v2251 = vsel %vm317, %v2246, 0
    %2253 = vmatprep.subr.bf16.mxu0 0
    %2254 = vmatpush1.bf16.xpose.msra.mxu0 %v2251
    %2255 = vmatprep.subr.bf16.mxu0 0
    %2256 = vmatpush1.bf16.xpose.msra.mxu0 0
    %2257 = vmatprep.subr.bf16.mxu0 0
    %2258 = vmatpush1.bf16.xpose.msra.mxu0 0
    %2259 = vmatprep.subr.bf16.mxu0 0
    %2260 = vmatpush1.bf16.xpose.msra.mxu0 0
    %2261 = vmatprep.subr.bf16.mxu0 0
    %2262 = vmatpush1.bf16.xpose.msra.mxu0 0
    %2263 = vmatprep.subr.bf16.mxu0 0
    %2264 = vmatpush1.bf16.xpose.msra.mxu0 0
    %2265 = vmatprep.subr.bf16.mxu0 0
    %2266 = vmatpush1.bf16.xpose.msra.mxu0 0
    %2267 = vmatprep.subr.bf16.mxu0 0
    %2268 = vmatpush1.bf16.xpose.msra.mxu0 0
    %2269 = vmatprep.subr.bf16.mxu0 0
    %2270 = vmatpush1.bf16.xpose.msra.mxu0 0
    %2271 = vmatprep.subr.bf16.mxu0 0
    %2272 = vmatpush1.bf16.xpose.msra.mxu0 0
    %2273 = vmatprep.subr.bf16.mxu0 0
    %2274 = vmatpush1.bf16.xpose.msra.mxu0 0
    %2275 = vmatprep.subr.bf16.mxu0 0
    %2276 = vmatpush1.bf16.xpose.msra.mxu0 0
    %2277 = vmatprep.subr.bf16.mxu0 0
    %2278 = vmatpush1.bf16.xpose.msra.mxu0 0
    %2279 = vmatprep.subr.bf16.mxu0 0
    %2280 = vmatpush1.bf16.xpose.msra.mxu0 0
    %2281 = vmatprep.subr.bf16.mxu0 0
    %2282 = vmatpush1.bf16.xpose.msra.mxu0 0
    %2283 = vmatprep.subr.bf16.mxu0 0
    %2284 = vmatpush1.bf16.xpose.msra.mxu0 0
    %2285 = vmatprep.mubr.bf16.mxu0 0
    %2286 = vmatmul.mubr.bf16.gmra.mrb[0].mxu0 %v2248
    %v2287 = vpop.f32.mrb[0].mxu0
    %v2288 = vadd.f32 0.0, %v2287
    %v2289 = vpop.f32.mrb[0].mxu0
    %v2290 = vpop.f32.mrb[0].mxu0
    %v2291 = vpop.f32.mrb[0].mxu0
    %2292 = vdwg.mxu0
    %v2293 = vmul.f32 %v2288, 0.35355338
    %v2294 = vadd.f32 %v2293, %v236
    %v2295 = vsel %vm317, %v2294, -inf
    %2296 = vmax.xlane.f32.xlu0 %v2295
    %v2297 = vpop.xlane.xlu0 %2296
    %v2298 = vsub.f32 %v2294, %v2297
    %v2299 = vmul.f32 %v2298, 1.442695
    %v2300 = vpow.pop %v2299
    %v2301 = vsel %vm317, %v2300, 0.0
    %2302 = vadd.xlane.f32.xlu0 %v2301
    %v2303 = vpop.xlane.xlu0 %2302
    %v2304 = vrcp.pop %v2303
    %v2305 = vmul.f32 %v2300, %v2304
    %v2306 = vpack.c.bf16 %v2305, %v2305
    %2307 = vrot.lane.b32.xlu0 %v1925, 48
    %v2308 = vpop.permute.xlu0 %2307
    %v2310 = vsel %vm317, %v2306, 0
    %v2313 = vsel %vm383, %v2308, 0
    %2315 = vmatprep.subr.bf16.mxu0 0
    %2316 = vmatpush1.bf16.msra.mxu0 %v2313
    %2317 = vmatprep.subr.bf16.mxu0 0
    %2318 = vmatpush1.bf16.msra.mxu0 0
    %2319 = vmatprep.subr.bf16.mxu0 0
    %2320 = vmatpush1.bf16.msra.mxu0 0
    %2321 = vmatprep.subr.bf16.mxu0 0
    %2322 = vmatpush1.bf16.msra.mxu0 0
    %2323 = vmatprep.subr.bf16.mxu0 0
    %2324 = vmatpush1.bf16.msra.mxu0 0
    %2325 = vmatprep.subr.bf16.mxu0 0
    %2326 = vmatpush1.bf16.msra.mxu0 0
    %2327 = vmatprep.subr.bf16.mxu0 0
    %2328 = vmatpush1.bf16.msra.mxu0 0
    %2329 = vmatprep.subr.bf16.mxu0 0
    %2330 = vmatpush1.bf16.msra.mxu0 0
    %2331 = vmatprep.subr.bf16.mxu0 0
    %2332 = vmatpush1.bf16.msra.mxu0 0
    %2333 = vmatprep.subr.bf16.mxu0 0
    %2334 = vmatpush1.bf16.msra.mxu0 0
    %2335 = vmatprep.subr.bf16.mxu0 0
    %2336 = vmatpush1.bf16.msra.mxu0 0
    %2337 = vmatprep.subr.bf16.mxu0 0
    %2338 = vmatpush1.bf16.msra.mxu0 0
    %2339 = vmatprep.subr.bf16.mxu0 0
    %2340 = vmatpush1.bf16.msra.mxu0 0
    %2341 = vmatprep.subr.bf16.mxu0 0
    %2342 = vmatpush1.bf16.msra.mxu0 0
    %2343 = vmatprep.subr.bf16.mxu0 0
    %2344 = vmatpush1.bf16.msra.mxu0 0
    %2345 = vmatprep.subr.bf16.mxu0 0
    %2346 = vmatpush1.bf16.msra.mxu0 0
    %2347 = vmatprep.mubr.bf16.mxu0 0
    %2348 = vmatmul.mubr.bf16.gmra.mrb[0].mxu0 %v2310
    %v2349 = vpop.f32.mrb[0].mxu0
    %v2350 = vadd.f32 0.0, %v2349
    %v2351 = vpop.f32.mrb[0].mxu0
    %v2352 = vpop.f32.mrb[0].mxu0
    %v2353 = vpop.f32.mrb[0].mxu0
    %2354 = vdwg.mxu0
    %v2355 = vpack.c.bf16 %v2350, %v2350
    %v2357 = vsel %vm317, %v2355, 0
    %v2360 = vsel %vm383, %v1858, 0
    %2362 = vmatprep.subr.bf16.mxu0 0
    %2363 = vmatpush1.bf16.msra.mxu0 %v2360
    %2364 = vmatprep.subr.bf16.mxu0 0
    %2365 = vmatpush1.bf16.msra.mxu0 0
    %2366 = vmatprep.subr.bf16.mxu0 0
    %2367 = vmatpush1.bf16.msra.mxu0 0
    %2368 = vmatprep.subr.bf16.mxu0 0
    %2369 = vmatpush1.bf16.msra.mxu0 0
    %2370 = vmatprep.subr.bf16.mxu0 0
    %2371 = vmatpush1.bf16.msra.mxu0 0
    %2372 = vmatprep.subr.bf16.mxu0 0
    %2373 = vmatpush1.bf16.msra.mxu0 0
    %2374 = vmatprep.subr.bf16.mxu0 0
    %2375 = vmatpush1.bf16.msra.mxu0 0
    %2376 = vmatprep.subr.bf16.mxu0 0
    %2377 = vmatpush1.bf16.msra.mxu0 0
    %2378 = vmatprep.subr.bf16.mxu0 0
    %2379 = vmatpush1.bf16.msra.mxu0 0
    %2380 = vmatprep.subr.bf16.mxu0 0
    %2381 = vmatpush1.bf16.msra.mxu0 0
    %2382 = vmatprep.subr.bf16.mxu0 0
    %2383 = vmatpush1.bf16.msra.mxu0 0
    %2384 = vmatprep.subr.bf16.mxu0 0
    %2385 = vmatpush1.bf16.msra.mxu0 0
    %2386 = vmatprep.subr.bf16.mxu0 0
    %2387 = vmatpush1.bf16.msra.mxu0 0
    %2388 = vmatprep.subr.bf16.mxu0 0
    %2389 = vmatpush1.bf16.msra.mxu0 0
    %2390 = vmatprep.subr.bf16.mxu0 0
    %2391 = vmatpush1.bf16.msra.mxu0 0
    %2392 = vmatprep.subr.bf16.mxu0 0
    %2393 = vmatpush1.bf16.msra.mxu0 0
    %2394 = vmatprep.mubr.bf16.mxu0 0
    %2395 = vmatmul.mubr.bf16.gmra.mrb[0].mxu0 %v2357
    %v2396 = vpop.f32.mrb[0].mxu0
    %v2397 = vadd.f32 0.0, %v2396
    %v2398 = vpop.f32.mrb[0].mxu0
    %v2399 = vpop.f32.mrb[0].mxu0
    %v2400 = vpop.f32.mrb[0].mxu0
    %2401 = vdwg.mxu0
    %v2402 = vadd.f32 %v2238, %v2397
    %2403 = vrot.lane.b32.xlu0 %v1925, 104
    %v2404 = vpop.permute.xlu0 %2403
    %2405 = vrot.lane.b32.xlu0 %v1925, 72
    %v2406 = vpop.permute.xlu0 %2405
    %v2408 = vsel %vm317, %v2404, 0
    %v2411 = vsel %vm317, %v2406, 0
    %2413 = vmatprep.subr.bf16.mxu0 0
    %2414 = vmatpush1.bf16.xpose.msra.mxu0 %v2411
    %2415 = vmatprep.subr.bf16.mxu0 0
    %2416 = vmatpush1.bf16.xpose.msra.mxu0 0
    %2417 = vmatprep.subr.bf16.mxu0 0
    %2418 = vmatpush1.bf16.xpose.msra.mxu0 0
    %2419 = vmatprep.subr.bf16.mxu0 0
    %2420 = vmatpush1.bf16.xpose.msra.mxu0 0
    %2421 = vmatprep.subr.bf16.mxu0 0
    %2422 = vmatpush1.bf16.xpose.msra.mxu0 0
    %2423 = vmatprep.subr.bf16.mxu0 0
    %2424 = vmatpush1.bf16.xpose.msra.mxu0 0
    %2425 = vmatprep.subr.bf16.mxu0 0
    %2426 = vmatpush1.bf16.xpose.msra.mxu0 0
    %2427 = vmatprep.subr.bf16.mxu0 0
    %2428 = vmatpush1.bf16.xpose.msra.mxu0 0
    %2429 = vmatprep.subr.bf16.mxu0 0
    %2430 = vmatpush1.bf16.xpose.msra.mxu0 0
    %2431 = vmatprep.subr.bf16.mxu0 0
    %2432 = vmatpush1.bf16.xpose.msra.mxu0 0
    %2433 = vmatprep.subr.bf16.mxu0 0
    %2434 = vmatpush1.bf16.xpose.msra.mxu0 0
    %2435 = vmatprep.subr.bf16.mxu0 0
    %2436 = vmatpush1.bf16.xpose.msra.mxu0 0
    %2437 = vmatprep.subr.bf16.mxu0 0
    %2438 = vmatpush1.bf16.xpose.msra.mxu0 0
    %2439 = vmatprep.subr.bf16.mxu0 0
    %2440 = vmatpush1.bf16.xpose.msra.mxu0 0
    %2441 = vmatprep.subr.bf16.mxu0 0
    %2442 = vmatpush1.bf16.xpose.msra.mxu0 0
    %2443 = vmatprep.subr.bf16.mxu0 0
    %2444 = vmatpush1.bf16.xpose.msra.mxu0 0
    %2445 = vmatprep.mubr.bf16.mxu0 0
    %2446 = vmatmul.mubr.bf16.gmra.mrb[0].mxu0 %v2408
    %v2447 = vpop.f32.mrb[0].mxu0
    %v2448 = vadd.f32 0.0, %v2447
    %v2449 = vpop.f32.mrb[0].mxu0
    %v2450 = vpop.f32.mrb[0].mxu0
    %v2451 = vpop.f32.mrb[0].mxu0
    %2452 = vdwg.mxu0
    %v2453 = vmul.f32 %v2448, 0.35355338
    %v2454 = vadd.f32 %v2453, %v236
    %v2455 = vsel %vm317, %v2454, -inf
    %2456 = vmax.xlane.f32.xlu0 %v2455
    %v2457 = vpop.xlane.xlu0 %2456
    %v2458 = vsub.f32 %v2454, %v2457
    %v2459 = vmul.f32 %v2458, 1.442695
    %v2460 = vpow.pop %v2459
    %v2461 = vsel %vm317, %v2460, 0.0
    %2462 = vadd.xlane.f32.xlu0 %v2461
    %v2463 = vpop.xlane.xlu0 %2462
    %v2464 = vrcp.pop %v2463
    %v2465 = vmul.f32 %v2460, %v2464
    %v2466 = vpack.c.bf16 %v2465, %v2465
    %2467 = vrot.lane.b32.xlu0 %v1925, 40
    %v2468 = vpop.permute.xlu0 %2467
    %v2470 = vsel %vm317, %v2466, 0
    %v2473 = vsel %vm383, %v2468, 0
    %2475 = vmatprep.subr.bf16.mxu0 0
    %2476 = vmatpush1.bf16.msra.mxu0 %v2473
    %2477 = vmatprep.subr.bf16.mxu0 0
    %2478 = vmatpush1.bf16.msra.mxu0 0
    %2479 = vmatprep.subr.bf16.mxu0 0
    %2480 = vmatpush1.bf16.msra.mxu0 0
    %2481 = vmatprep.subr.bf16.mxu0 0
    %2482 = vmatpush1.bf16.msra.mxu0 0
    %2483 = vmatprep.subr.bf16.mxu0 0
    %2484 = vmatpush1.bf16.msra.mxu0 0
    %2485 = vmatprep.subr.bf16.mxu0 0
    %2486 = vmatpush1.bf16.msra.mxu0 0
    %2487 = vmatprep.subr.bf16.mxu0 0
    %2488 = vmatpush1.bf16.msra.mxu0 0
    %2489 = vmatprep.subr.bf16.mxu0 0
    %2490 = vmatpush1.bf16.msra.mxu0 0
    %2491 = vmatprep.subr.bf16.mxu0 0
    %2492 = vmatpush1.bf16.msra.mxu0 0
    %2493 = vmatprep.subr.bf16.mxu0 0
    %2494 = vmatpush1.bf16.msra.mxu0 0
    %2495 = vmatprep.subr.bf16.mxu0 0
    %2496 = vmatpush1.bf16.msra.mxu0 0
    %2497 = vmatprep.subr.bf16.mxu0 0
    %2498 = vmatpush1.bf16.msra.mxu0 0
    %2499 = vmatprep.subr.bf16.mxu0 0
    %2500 = vmatpush1.bf16.msra.mxu0 0
    %2501 = vmatprep.subr.bf16.mxu0 0
    %2502 = vmatpush1.bf16.msra.mxu0 0
    %2503 = vmatprep.subr.bf16.mxu0 0
    %2504 = vmatpush1.bf16.msra.mxu0 0
    %2505 = vmatprep.subr.bf16.mxu0 0
    %2506 = vmatpush1.bf16.msra.mxu0 0
    %2507 = vmatprep.mubr.bf16.mxu0 0
    %2508 = vmatmul.mubr.bf16.gmra.mrb[0].mxu0 %v2470
    %v2509 = vpop.f32.mrb[0].mxu0
    %v2510 = vadd.f32 0.0, %v2509
    %v2511 = vpop.f32.mrb[0].mxu0
    %v2512 = vpop.f32.mrb[0].mxu0
    %v2513 = vpop.f32.mrb[0].mxu0
    %2514 = vdwg.mxu0
    %v2515 = vpack.c.bf16 %v2510, %v2510
    %v2517 = vsel %vm317, %v2515, 0
    %v2520 = vsel %vm383, %v1859, 0
    %2522 = vmatprep.subr.bf16.mxu0 0
    %2523 = vmatpush1.bf16.msra.mxu0 %v2520
    %2524 = vmatprep.subr.bf16.mxu0 0
    %2525 = vmatpush1.bf16.msra.mxu0 0
    %2526 = vmatprep.subr.bf16.mxu0 0
    %2527 = vmatpush1.bf16.msra.mxu0 0
    %2528 = vmatprep.subr.bf16.mxu0 0
    %2529 = vmatpush1.bf16.msra.mxu0 0
    %2530 = vmatprep.subr.bf16.mxu0 0
    %2531 = vmatpush1.bf16.msra.mxu0 0
    %2532 = vmatprep.subr.bf16.mxu0 0
    %2533 = vmatpush1.bf16.msra.mxu0 0
    %2534 = vmatprep.subr.bf16.mxu0 0
    %2535 = vmatpush1.bf16.msra.mxu0 0
    %2536 = vmatprep.subr.bf16.mxu0 0
    %2537 = vmatpush1.bf16.msra.mxu0 0
    %2538 = vmatprep.subr.bf16.mxu0 0
    %2539 = vmatpush1.bf16.msra.mxu0 0
    %2540 = vmatprep.subr.bf16.mxu0 0
    %2541 = vmatpush1.bf16.msra.mxu0 0
    %2542 = vmatprep.subr.bf16.mxu0 0
    %2543 = vmatpush1.bf16.msra.mxu0 0
    %2544 = vmatprep.subr.bf16.mxu0 0
    %2545 = vmatpush1.bf16.msra.mxu0 0
    %2546 = vmatprep.subr.bf16.mxu0 0
    %2547 = vmatpush1.bf16.msra.mxu0 0
    %2548 = vmatprep.subr.bf16.mxu0 0
    %2549 = vmatpush1.bf16.msra.mxu0 0
    %2550 = vmatprep.subr.bf16.mxu0 0
    %2551 = vmatpush1.bf16.msra.mxu0 0
    %2552 = vmatprep.subr.bf16.mxu0 0
    %2553 = vmatpush1.bf16.msra.mxu0 0
    %2554 = vmatprep.mubr.bf16.mxu0 0
    %2555 = vmatmul.mubr.bf16.gmra.mrb[0].mxu0 %v2517
    %v2556 = vpop.f32.mrb[0].mxu0
    %v2557 = vadd.f32 0.0, %v2556
    %v2558 = vpop.f32.mrb[0].mxu0
    %v2559 = vpop.f32.mrb[0].mxu0
    %v2560 = vpop.f32.mrb[0].mxu0
    %2561 = vdwg.mxu0
    %v2562 = vadd.f32 %v2402, %v2557
    %v2563 = vpack.c.bf16 %v1922, %v1922
    %2565 = vrot.lane.b32.xlu0 %v2563, 96
    %v2566 = vpop.permute.xlu0 %2565
    %v2568 = vsel %vm317, %v2563, 0
    %v2571 = vsel %vm317, %v2566, 0
    %2573 = vmatprep.subr.bf16.mxu0 0
    %2574 = vmatpush1.bf16.xpose.msra.mxu0 %v2571
    %2575 = vmatprep.subr.bf16.mxu0 0
    %2576 = vmatpush1.bf16.xpose.msra.mxu0 0
    %2577 = vmatprep.subr.bf16.mxu0 0
    %2578 = vmatpush1.bf16.xpose.msra.mxu0 0
    %2579 = vmatprep.subr.bf16.mxu0 0
    %2580 = vmatpush1.bf16.xpose.msra.mxu0 0
    %2581 = vmatprep.subr.bf16.mxu0 0
    %2582 = vmatpush1.bf16.xpose.msra.mxu0 0
    %2583 = vmatprep.subr.bf16.mxu0 0
    %2584 = vmatpush1.bf16.xpose.msra.mxu0 0
    %2585 = vmatprep.subr.bf16.mxu0 0
    %2586 = vmatpush1.bf16.xpose.msra.mxu0 0
    %2587 = vmatprep.subr.bf16.mxu0 0
    %2588 = vmatpush1.bf16.xpose.msra.mxu0 0
    %2589 = vmatprep.subr.bf16.mxu0 0
    %2590 = vmatpush1.bf16.xpose.msra.mxu0 0
    %2591 = vmatprep.subr.bf16.mxu0 0
    %2592 = vmatpush1.bf16.xpose.msra.mxu0 0
    %2593 = vmatprep.subr.bf16.mxu0 0
    %2594 = vmatpush1.bf16.xpose.msra.mxu0 0
    %2595 = vmatprep.subr.bf16.mxu0 0
    %2596 = vmatpush1.bf16.xpose.msra.mxu0 0
    %2597 = vmatprep.subr.bf16.mxu0 0
    %2598 = vmatpush1.bf16.xpose.msra.mxu0 0
    %2599 = vmatprep.subr.bf16.mxu0 0
    %2600 = vmatpush1.bf16.xpose.msra.mxu0 0
    %2601 = vmatprep.subr.bf16.mxu0 0
    %2602 = vmatpush1.bf16.xpose.msra.mxu0 0
    %2603 = vmatprep.subr.bf16.mxu0 0
    %2604 = vmatpush1.bf16.xpose.msra.mxu0 0
    %2605 = vmatprep.mubr.bf16.mxu0 0
    %2606 = vmatmul.mubr.bf16.gmra.mrb[0].mxu0 %v2568
    %v2607 = vpop.f32.mrb[0].mxu0
    %v2608 = vadd.f32 0.0, %v2607
    %v2609 = vpop.f32.mrb[0].mxu0
    %v2610 = vpop.f32.mrb[0].mxu0
    %v2611 = vpop.f32.mrb[0].mxu0
    %2612 = vdwg.mxu0
    %v2613 = vmul.f32 %v2608, 0.35355338
    %v2614 = vadd.f32 %v2613, %v240
    %v2615 = vsel %vm317, %v2614, -inf
    %2616 = vmax.xlane.f32.xlu0 %v2615
    %v2617 = vpop.xlane.xlu0 %2616
    %v2618 = vsub.f32 %v2614, %v2617
    %v2619 = vmul.f32 %v2618, 1.442695
    %v2620 = vpow.pop %v2619
    %v2621 = vsel %vm317, %v2620, 0.0
    %2622 = vadd.xlane.f32.xlu0 %v2621
    %v2623 = vpop.xlane.xlu0 %2622
    %v2624 = vrcp.pop %v2623
    %v2625 = vmul.f32 %v2620, %v2624
    %v2626 = vpack.c.bf16 %v2625, %v2625
    %2627 = vrot.lane.b32.xlu0 %v2563, 64
    %v2628 = vpop.permute.xlu0 %2627
    %v2630 = vsel %vm317, %v2626, 0
    %v2633 = vsel %vm383, %v2628, 0
    %2635 = vmatprep.subr.bf16.mxu0 0
    %2636 = vmatpush1.bf16.msra.mxu0 %v2633
    %2637 = vmatprep.subr.bf16.mxu0 0
    %2638 = vmatpush1.bf16.msra.mxu0 0
    %2639 = vmatprep.subr.bf16.mxu0 0
    %2640 = vmatpush1.bf16.msra.mxu0 0
    %2641 = vmatprep.subr.bf16.mxu0 0
    %2642 = vmatpush1.bf16.msra.mxu0 0
    %2643 = vmatprep.subr.bf16.mxu0 0
    %2644 = vmatpush1.bf16.msra.mxu0 0
    %2645 = vmatprep.subr.bf16.mxu0 0
    %2646 = vmatpush1.bf16.msra.mxu0 0
    %2647 = vmatprep.subr.bf16.mxu0 0
    %2648 = vmatpush1.bf16.msra.mxu0 0
    %2649 = vmatprep.subr.bf16.mxu0 0
    %2650 = vmatpush1.bf16.msra.mxu0 0
    %2651 = vmatprep.subr.bf16.mxu0 0
    %2652 = vmatpush1.bf16.msra.mxu0 0
    %2653 = vmatprep.subr.bf16.mxu0 0
    %2654 = vmatpush1.bf16.msra.mxu0 0
    %2655 = vmatprep.subr.bf16.mxu0 0
    %2656 = vmatpush1.bf16.msra.mxu0 0
    %2657 = vmatprep.subr.bf16.mxu0 0
    %2658 = vmatpush1.bf16.msra.mxu0 0
    %2659 = vmatprep.subr.bf16.mxu0 0
    %2660 = vmatpush1.bf16.msra.mxu0 0
    %2661 = vmatprep.subr.bf16.mxu0 0
    %2662 = vmatpush1.bf16.msra.mxu0 0
    %2663 = vmatprep.subr.bf16.mxu0 0
    %2664 = vmatpush1.bf16.msra.mxu0 0
    %2665 = vmatprep.subr.bf16.mxu0 0
    %2666 = vmatpush1.bf16.msra.mxu0 0
    %2667 = vmatprep.mubr.bf16.mxu0 0
    %2668 = vmatmul.mubr.bf16.gmra.mrb[0].mxu0 %v2630
    %v2669 = vpop.f32.mrb[0].mxu0
    %v2670 = vadd.f32 0.0, %v2669
    %v2671 = vpop.f32.mrb[0].mxu0
    %v2672 = vpop.f32.mrb[0].mxu0
    %v2673 = vpop.f32.mrb[0].mxu0
    %2674 = vdwg.mxu0
    %v2675 = vpack.c.bf16 %v2670, %v2670
    %2676 = vrot.lane.b32.xlu0 %v2563, 120
    %v2677 = vpop.permute.xlu0 %2676
    %2678 = vrot.lane.b32.xlu0 %v2563, 88
    %v2679 = vpop.permute.xlu0 %2678
    %v2681 = vsel %vm317, %v2677, 0
    %v2684 = vsel %vm317, %v2679, 0
    %2686 = vmatprep.subr.bf16.mxu0 0
    %2687 = vmatpush1.bf16.xpose.msra.mxu0 %v2684
    %2688 = vmatprep.subr.bf16.mxu0 0
    %2689 = vmatpush1.bf16.xpose.msra.mxu0 0
    %2690 = vmatprep.subr.bf16.mxu0 0
    %2691 = vmatpush1.bf16.xpose.msra.mxu0 0
    %2692 = vmatprep.subr.bf16.mxu0 0
    %2693 = vmatpush1.bf16.xpose.msra.mxu0 0
    %2694 = vmatprep.subr.bf16.mxu0 0
    %2695 = vmatpush1.bf16.xpose.msra.mxu0 0
    %2696 = vmatprep.subr.bf16.mxu0 0
    %2697 = vmatpush1.bf16.xpose.msra.mxu0 0
    %2698 = vmatprep.subr.bf16.mxu0 0
    %2699 = vmatpush1.bf16.xpose.msra.mxu0 0
    %2700 = vmatprep.subr.bf16.mxu0 0
    %2701 = vmatpush1.bf16.xpose.msra.mxu0 0
    %2702 = vmatprep.subr.bf16.mxu0 0
    %2703 = vmatpush1.bf16.xpose.msra.mxu0 0
    %2704 = vmatprep.subr.bf16.mxu0 0
    %2705 = vmatpush1.bf16.xpose.msra.mxu0 0
    %2706 = vmatprep.subr.bf16.mxu0 0
    %2707 = vmatpush1.bf16.xpose.msra.mxu0 0
    %2708 = vmatprep.subr.bf16.mxu0 0
    %2709 = vmatpush1.bf16.xpose.msra.mxu0 0
    %2710 = vmatprep.subr.bf16.mxu0 0
    %2711 = vmatpush1.bf16.xpose.msra.mxu0 0
    %2712 = vmatprep.subr.bf16.mxu0 0
    %2713 = vmatpush1.bf16.xpose.msra.mxu0 0
    %2714 = vmatprep.subr.bf16.mxu0 0
    %2715 = vmatpush1.bf16.xpose.msra.mxu0 0
    %2716 = vmatprep.subr.bf16.mxu0 0
    %2717 = vmatpush1.bf16.xpose.msra.mxu0 0
    %2718 = vmatprep.mubr.bf16.mxu0 0
    %2719 = vmatmul.mubr.bf16.gmra.mrb[0].mxu0 %v2681
    %v2720 = vpop.f32.mrb[0].mxu0
    %v2721 = vadd.f32 0.0, %v2720
    %v2722 = vpop.f32.mrb[0].mxu0
    %v2723 = vpop.f32.mrb[0].mxu0
    %v2724 = vpop.f32.mrb[0].mxu0
    %2725 = vdwg.mxu0
    %v2726 = vmul.f32 %v2721, 0.35355338
    %v2727 = vadd.f32 %v2726, %v240
    %v2728 = vsel %vm317, %v2727, -inf
    %2729 = vmax.xlane.f32.xlu0 %v2728
    %v2730 = vpop.xlane.xlu0 %2729
    %v2731 = vsub.f32 %v2727, %v2730
    %v2732 = vmul.f32 %v2731, 1.442695
    %v2733 = vpow.pop %v2732
    %v2734 = vsel %vm317, %v2733, 0.0
    %2735 = vadd.xlane.f32.xlu0 %v2734
    %v2736 = vpop.xlane.xlu0 %2735
    %v2737 = vrcp.pop %v2736
    %v2738 = vmul.f32 %v2733, %v2737
    %v2739 = vpack.c.bf16 %v2738, %v2738
    %2740 = vrot.lane.b32.xlu0 %v2563, 56
    %v2741 = vpop.permute.xlu0 %2740
    %v2743 = vsel %vm317, %v2739, 0
    %v2746 = vsel %vm383, %v2741, 0
    %2748 = vmatprep.subr.bf16.mxu0 0
    %2749 = vmatpush1.bf16.msra.mxu0 %v2746
    %2750 = vmatprep.subr.bf16.mxu0 0
    %2751 = vmatpush1.bf16.msra.mxu0 0
    %2752 = vmatprep.subr.bf16.mxu0 0
    %2753 = vmatpush1.bf16.msra.mxu0 0
    %2754 = vmatprep.subr.bf16.mxu0 0
    %2755 = vmatpush1.bf16.msra.mxu0 0
    %2756 = vmatprep.subr.bf16.mxu0 0
    %2757 = vmatpush1.bf16.msra.mxu0 0
    %2758 = vmatprep.subr.bf16.mxu0 0
    %2759 = vmatpush1.bf16.msra.mxu0 0
    %2760 = vmatprep.subr.bf16.mxu0 0
    %2761 = vmatpush1.bf16.msra.mxu0 0
    %2762 = vmatprep.subr.bf16.mxu0 0
    %2763 = vmatpush1.bf16.msra.mxu0 0
    %2764 = vmatprep.subr.bf16.mxu0 0
    %2765 = vmatpush1.bf16.msra.mxu0 0
    %2766 = vmatprep.subr.bf16.mxu0 0
    %2767 = vmatpush1.bf16.msra.mxu0 0
    %2768 = vmatprep.subr.bf16.mxu0 0
    %2769 = vmatpush1.bf16.msra.mxu0 0
    %2770 = vmatprep.subr.bf16.mxu0 0
    %2771 = vmatpush1.bf16.msra.mxu0 0
    %2772 = vmatprep.subr.bf16.mxu0 0
    %2773 = vmatpush1.bf16.msra.mxu0 0
    %2774 = vmatprep.subr.bf16.mxu0 0
    %2775 = vmatpush1.bf16.msra.mxu0 0
    %2776 = vmatprep.subr.bf16.mxu0 0
    %2777 = vmatpush1.bf16.msra.mxu0 0
    %2778 = vmatprep.subr.bf16.mxu0 0
    %2779 = vmatpush1.bf16.msra.mxu0 0
    %2780 = vmatprep.mubr.bf16.mxu0 0
    %2781 = vmatmul.mubr.bf16.gmra.mrb[0].mxu0 %v2743
    %v2782 = vpop.f32.mrb[0].mxu0
    %v2783 = vadd.f32 0.0, %v2782
    %v2784 = vpop.f32.mrb[0].mxu0
    %v2785 = vpop.f32.mrb[0].mxu0
    %v2786 = vpop.f32.mrb[0].mxu0
    %2787 = vdwg.mxu0
    %v2788 = vpack.c.bf16 %v2783, %v2783
    %v2790 = vsel %vm317, %v2788, 0
    %2792 = vmatprep.subr.bf16.mxu0 0
    %2793 = vmatpush1.bf16.msra.mxu0 %v2155
    %2794 = vmatprep.subr.bf16.mxu0 0
    %2795 = vmatpush1.bf16.msra.mxu0 0
    %2796 = vmatprep.subr.bf16.mxu0 0
    %2797 = vmatpush1.bf16.msra.mxu0 0
    %2798 = vmatprep.subr.bf16.mxu0 0
    %2799 = vmatpush1.bf16.msra.mxu0 0
    %2800 = vmatprep.subr.bf16.mxu0 0
    %2801 = vmatpush1.bf16.msra.mxu0 0
    %2802 = vmatprep.subr.bf16.mxu0 0
    %2803 = vmatpush1.bf16.msra.mxu0 0
    %2804 = vmatprep.subr.bf16.mxu0 0
    %2805 = vmatpush1.bf16.msra.mxu0 0
    %2806 = vmatprep.subr.bf16.mxu0 0
    %2807 = vmatpush1.bf16.msra.mxu0 0
    %2808 = vmatprep.subr.bf16.mxu0 0
    %2809 = vmatpush1.bf16.msra.mxu0 0
    %2810 = vmatprep.subr.bf16.mxu0 0
    %2811 = vmatpush1.bf16.msra.mxu0 0
    %2812 = vmatprep.subr.bf16.mxu0 0
    %2813 = vmatpush1.bf16.msra.mxu0 0
    %2814 = vmatprep.subr.bf16.mxu0 0
    %2815 = vmatpush1.bf16.msra.mxu0 0
    %2816 = vmatprep.subr.bf16.mxu0 0
    %2817 = vmatpush1.bf16.msra.mxu0 0
    %2818 = vmatprep.subr.bf16.mxu0 0
    %2819 = vmatpush1.bf16.msra.mxu0 0
    %2820 = vmatprep.subr.bf16.mxu0 0
    %2821 = vmatpush1.bf16.msra.mxu0 0
    %2822 = vmatprep.subr.bf16.mxu0 0
    %2823 = vmatpush1.bf16.msra.mxu0 0
    %2824 = vmatprep.mubr.bf16.mxu0 0
    %2825 = vmatmul.mubr.bf16.gmra.mrb[0].mxu0 %v2790
    %v2826 = vpop.f32.mrb[0].mxu0
    %v2827 = vadd.f32 0.0, %v2826
    %v2828 = vpop.f32.mrb[0].mxu0
    %v2829 = vpop.f32.mrb[0].mxu0
    %v2830 = vpop.f32.mrb[0].mxu0
    %2831 = vdwg.mxu0
    %v2833 = vsel %vm317, %v2675, 0
    %2835 = vmatprep.subr.bf16.mxu0 0
    %2836 = vmatpush1.bf16.msra.mxu0 %v2201
    %2837 = vmatprep.subr.bf16.mxu0 0
    %2838 = vmatpush1.bf16.msra.mxu0 0
    %2839 = vmatprep.subr.bf16.mxu0 0
    %2840 = vmatpush1.bf16.msra.mxu0 0
    %2841 = vmatprep.subr.bf16.mxu0 0
    %2842 = vmatpush1.bf16.msra.mxu0 0
    %2843 = vmatprep.subr.bf16.mxu0 0
    %2844 = vmatpush1.bf16.msra.mxu0 0
    %2845 = vmatprep.subr.bf16.mxu0 0
    %2846 = vmatpush1.bf16.msra.mxu0 0
    %2847 = vmatprep.subr.bf16.mxu0 0
    %2848 = vmatpush1.bf16.msra.mxu0 0
    %2849 = vmatprep.subr.bf16.mxu0 0
    %2850 = vmatpush1.bf16.msra.mxu0 0
    %2851 = vmatprep.subr.bf16.mxu0 0
    %2852 = vmatpush1.bf16.msra.mxu0 0
    %2853 = vmatprep.subr.bf16.mxu0 0
    %2854 = vmatpush1.bf16.msra.mxu0 0
    %2855 = vmatprep.subr.bf16.mxu0 0
    %2856 = vmatpush1.bf16.msra.mxu0 0
    %2857 = vmatprep.subr.bf16.mxu0 0
    %2858 = vmatpush1.bf16.msra.mxu0 0
    %2859 = vmatprep.subr.bf16.mxu0 0
    %2860 = vmatpush1.bf16.msra.mxu0 0
    %2861 = vmatprep.subr.bf16.mxu0 0
    %2862 = vmatpush1.bf16.msra.mxu0 0
    %2863 = vmatprep.subr.bf16.mxu0 0
    %2864 = vmatpush1.bf16.msra.mxu0 0
    %2865 = vmatprep.subr.bf16.mxu0 0
    %2866 = vmatpush1.bf16.msra.mxu0 0
    %2867 = vmatprep.mubr.bf16.mxu0 0
    %2868 = vmatmul.mubr.bf16.gmra.mrb[0].mxu0 %v2833
    %v2869 = vpop.f32.mrb[0].mxu0
    %v2870 = vadd.f32 %v2827, %v2869
    %v2871 = vpop.f32.mrb[0].mxu0
    %v2872 = vpop.f32.mrb[0].mxu0
    %v2873 = vpop.f32.mrb[0].mxu0
    %2874 = vdwg.mxu0
    %2875 = vrot.lane.b32.xlu0 %v2563, 112
    %v2876 = vpop.permute.xlu0 %2875
    %2877 = vrot.lane.b32.xlu0 %v2563, 80
    %v2878 = vpop.permute.xlu0 %2877
    %v2880 = vsel %vm317, %v2876, 0
    %v2883 = vsel %vm317, %v2878, 0
    %2885 = vmatprep.subr.bf16.mxu0 0
    %2886 = vmatpush1.bf16.xpose.msra.mxu0 %v2883
    %2887 = vmatprep.subr.bf16.mxu0 0
    %2888 = vmatpush1.bf16.xpose.msra.mxu0 0
    %2889 = vmatprep.subr.bf16.mxu0 0
    %2890 = vmatpush1.bf16.xpose.msra.mxu0 0
    %2891 = vmatprep.subr.bf16.mxu0 0
    %2892 = vmatpush1.bf16.xpose.msra.mxu0 0
    %2893 = vmatprep.subr.bf16.mxu0 0
    %2894 = vmatpush1.bf16.xpose.msra.mxu0 0
    %2895 = vmatprep.subr.bf16.mxu0 0
    %2896 = vmatpush1.bf16.xpose.msra.mxu0 0
    %2897 = vmatprep.subr.bf16.mxu0 0
    %2898 = vmatpush1.bf16.xpose.msra.mxu0 0
    %2899 = vmatprep.subr.bf16.mxu0 0
    %2900 = vmatpush1.bf16.xpose.msra.mxu0 0
    %2901 = vmatprep.subr.bf16.mxu0 0
    %2902 = vmatpush1.bf16.xpose.msra.mxu0 0
    %2903 = vmatprep.subr.bf16.mxu0 0
    %2904 = vmatpush1.bf16.xpose.msra.mxu0 0
    %2905 = vmatprep.subr.bf16.mxu0 0
    %2906 = vmatpush1.bf16.xpose.msra.mxu0 0
    %2907 = vmatprep.subr.bf16.mxu0 0
    %2908 = vmatpush1.bf16.xpose.msra.mxu0 0
    %2909 = vmatprep.subr.bf16.mxu0 0
    %2910 = vmatpush1.bf16.xpose.msra.mxu0 0
    %2911 = vmatprep.subr.bf16.mxu0 0
    %2912 = vmatpush1.bf16.xpose.msra.mxu0 0
    %2913 = vmatprep.subr.bf16.mxu0 0
    %2914 = vmatpush1.bf16.xpose.msra.mxu0 0
    %2915 = vmatprep.subr.bf16.mxu0 0
    %2916 = vmatpush1.bf16.xpose.msra.mxu0 0
    %2917 = vmatprep.mubr.bf16.mxu0 0
    %2918 = vmatmul.mubr.bf16.gmra.mrb[0].mxu0 %v2880
    %v2919 = vpop.f32.mrb[0].mxu0
    %v2920 = vadd.f32 0.0, %v2919
    %v2921 = vpop.f32.mrb[0].mxu0
    %v2922 = vpop.f32.mrb[0].mxu0
    %v2923 = vpop.f32.mrb[0].mxu0
    %2924 = vdwg.mxu0
    %v2925 = vmul.f32 %v2920, 0.35355338
    %v2926 = vadd.f32 %v2925, %v240
    %v2927 = vsel %vm317, %v2926, -inf
    %2928 = vmax.xlane.f32.xlu0 %v2927
    %v2929 = vpop.xlane.xlu0 %2928
    %v2930 = vsub.f32 %v2926, %v2929
    %v2931 = vmul.f32 %v2930, 1.442695
    %v2932 = vpow.pop %v2931
    %v2933 = vsel %vm317, %v2932, 0.0
    %2934 = vadd.xlane.f32.xlu0 %v2933
    %v2935 = vpop.xlane.xlu0 %2934
    %v2936 = vrcp.pop %v2935
    %v2937 = vmul.f32 %v2932, %v2936
    %v2938 = vpack.c.bf16 %v2937, %v2937
    %2939 = vrot.lane.b32.xlu0 %v2563, 48
    %v2940 = vpop.permute.xlu0 %2939
    %v2942 = vsel %vm317, %v2938, 0
    %v2945 = vsel %vm383, %v2940, 0
    %2947 = vmatprep.subr.bf16.mxu0 0
    %2948 = vmatpush1.bf16.msra.mxu0 %v2945
    %2949 = vmatprep.subr.bf16.mxu0 0
    %2950 = vmatpush1.bf16.msra.mxu0 0
    %2951 = vmatprep.subr.bf16.mxu0 0
    %2952 = vmatpush1.bf16.msra.mxu0 0
    %2953 = vmatprep.subr.bf16.mxu0 0
    %2954 = vmatpush1.bf16.msra.mxu0 0
    %2955 = vmatprep.subr.bf16.mxu0 0
    %2956 = vmatpush1.bf16.msra.mxu0 0
    %2957 = vmatprep.subr.bf16.mxu0 0
    %2958 = vmatpush1.bf16.msra.mxu0 0
    %2959 = vmatprep.subr.bf16.mxu0 0
    %2960 = vmatpush1.bf16.msra.mxu0 0
    %2961 = vmatprep.subr.bf16.mxu0 0
    %2962 = vmatpush1.bf16.msra.mxu0 0
    %2963 = vmatprep.subr.bf16.mxu0 0
    %2964 = vmatpush1.bf16.msra.mxu0 0
    %2965 = vmatprep.subr.bf16.mxu0 0
    %2966 = vmatpush1.bf16.msra.mxu0 0
    %2967 = vmatprep.subr.bf16.mxu0 0
    %2968 = vmatpush1.bf16.msra.mxu0 0
    %2969 = vmatprep.subr.bf16.mxu0 0
    %2970 = vmatpush1.bf16.msra.mxu0 0
    %2971 = vmatprep.subr.bf16.mxu0 0
    %2972 = vmatpush1.bf16.msra.mxu0 0
    %2973 = vmatprep.subr.bf16.mxu0 0
    %2974 = vmatpush1.bf16.msra.mxu0 0
    %2975 = vmatprep.subr.bf16.mxu0 0
    %2976 = vmatpush1.bf16.msra.mxu0 0
    %2977 = vmatprep.subr.bf16.mxu0 0
    %2978 = vmatpush1.bf16.msra.mxu0 0
    %2979 = vmatprep.mubr.bf16.mxu0 0
    %2980 = vmatmul.mubr.bf16.gmra.mrb[0].mxu0 %v2942
    %v2981 = vpop.f32.mrb[0].mxu0
    %v2982 = vadd.f32 0.0, %v2981
    %v2983 = vpop.f32.mrb[0].mxu0
    %v2984 = vpop.f32.mrb[0].mxu0
    %v2985 = vpop.f32.mrb[0].mxu0
    %2986 = vdwg.mxu0
    %v2987 = vpack.c.bf16 %v2982, %v2982
    %v2989 = vsel %vm317, %v2987, 0
    %2991 = vmatprep.subr.bf16.mxu0 0
    %2992 = vmatpush1.bf16.msra.mxu0 %v2360
    %2993 = vmatprep.subr.bf16.mxu0 0
    %2994 = vmatpush1.bf16.msra.mxu0 0
    %2995 = vmatprep.subr.bf16.mxu0 0
    %2996 = vmatpush1.bf16.msra.mxu0 0
    %2997 = vmatprep.subr.bf16.mxu0 0
    %2998 = vmatpush1.bf16.msra.mxu0 0
    %2999 = vmatprep.subr.bf16.mxu0 0
    %3000 = vmatpush1.bf16.msra.mxu0 0
    %3001 = vmatprep.subr.bf16.mxu0 0
    %3002 = vmatpush1.bf16.msra.mxu0 0
    %3003 = vmatprep.subr.bf16.mxu0 0
    %3004 = vmatpush1.bf16.msra.mxu0 0
    %3005 = vmatprep.subr.bf16.mxu0 0
    %3006 = vmatpush1.bf16.msra.mxu0 0
    %3007 = vmatprep.subr.bf16.mxu0 0
    %3008 = vmatpush1.bf16.msra.mxu0 0
    %3009 = vmatprep.subr.bf16.mxu0 0
    %3010 = vmatpush1.bf16.msra.mxu0 0
    %3011 = vmatprep.subr.bf16.mxu0 0
    %3012 = vmatpush1.bf16.msra.mxu0 0
    %3013 = vmatprep.subr.bf16.mxu0 0
    %3014 = vmatpush1.bf16.msra.mxu0 0
    %3015 = vmatprep.subr.bf16.mxu0 0
    %3016 = vmatpush1.bf16.msra.mxu0 0
    %3017 = vmatprep.subr.bf16.mxu0 0
    %3018 = vmatpush1.bf16.msra.mxu0 0
    %3019 = vmatprep.subr.bf16.mxu0 0
    %3020 = vmatpush1.bf16.msra.mxu0 0
    %3021 = vmatprep.subr.bf16.mxu0 0
    %3022 = vmatpush1.bf16.msra.mxu0 0
    %3023 = vmatprep.mubr.bf16.mxu0 0
    %3024 = vmatmul.mubr.bf16.gmra.mrb[0].mxu0 %v2989
    %v3025 = vpop.f32.mrb[0].mxu0
    %v3026 = vadd.f32 0.0, %v3025
    %v3027 = vpop.f32.mrb[0].mxu0
    %v3028 = vpop.f32.mrb[0].mxu0
    %v3029 = vpop.f32.mrb[0].mxu0
    %3030 = vdwg.mxu0
    %v3031 = vadd.f32 %v2870, %v3026
    %3032 = vrot.lane.b32.xlu0 %v2563, 104
    %v3033 = vpop.permute.xlu0 %3032
    %3034 = vrot.lane.b32.xlu0 %v2563, 72
    %v3035 = vpop.permute.xlu0 %3034
    %v3037 = vsel %vm317, %v3033, 0
    %v3040 = vsel %vm317, %v3035, 0
    %3042 = vmatprep.subr.bf16.mxu0 0
    %3043 = vmatpush1.bf16.xpose.msra.mxu0 %v3040
    %3044 = vmatprep.subr.bf16.mxu0 0
    %3045 = vmatpush1.bf16.xpose.msra.mxu0 0
    %3046 = vmatprep.subr.bf16.mxu0 0
    %3047 = vmatpush1.bf16.xpose.msra.mxu0 0
    %3048 = vmatprep.subr.bf16.mxu0 0
    %3049 = vmatpush1.bf16.xpose.msra.mxu0 0
    %3050 = vmatprep.subr.bf16.mxu0 0
    %3051 = vmatpush1.bf16.xpose.msra.mxu0 0
    %3052 = vmatprep.subr.bf16.mxu0 0
    %3053 = vmatpush1.bf16.xpose.msra.mxu0 0
    %3054 = vmatprep.subr.bf16.mxu0 0
    %3055 = vmatpush1.bf16.xpose.msra.mxu0 0
    %3056 = vmatprep.subr.bf16.mxu0 0
    %3057 = vmatpush1.bf16.xpose.msra.mxu0 0
    %3058 = vmatprep.subr.bf16.mxu0 0
    %3059 = vmatpush1.bf16.xpose.msra.mxu0 0
    %3060 = vmatprep.subr.bf16.mxu0 0
    %3061 = vmatpush1.bf16.xpose.msra.mxu0 0
    %3062 = vmatprep.subr.bf16.mxu0 0
    %3063 = vmatpush1.bf16.xpose.msra.mxu0 0
    %3064 = vmatprep.subr.bf16.mxu0 0
    %3065 = vmatpush1.bf16.xpose.msra.mxu0 0
    %3066 = vmatprep.subr.bf16.mxu0 0
    %3067 = vmatpush1.bf16.xpose.msra.mxu0 0
    %3068 = vmatprep.subr.bf16.mxu0 0
    %3069 = vmatpush1.bf16.xpose.msra.mxu0 0
    %3070 = vmatprep.subr.bf16.mxu0 0
    %3071 = vmatpush1.bf16.xpose.msra.mxu0 0
    %3072 = vmatprep.subr.bf16.mxu0 0
    %3073 = vmatpush1.bf16.xpose.msra.mxu0 0
    %3074 = vmatprep.mubr.bf16.mxu0 0
    %3075 = vmatmul.mubr.bf16.gmra.mrb[0].mxu0 %v3037
    %v3076 = vpop.f32.mrb[0].mxu0
    %v3077 = vadd.f32 0.0, %v3076
    %v3078 = vpop.f32.mrb[0].mxu0
    %v3079 = vpop.f32.mrb[0].mxu0
    %v3080 = vpop.f32.mrb[0].mxu0
    %3081 = vdwg.mxu0
    %v3082 = vmul.f32 %v3077, 0.35355338
    %v3083 = vadd.f32 %v3082, %v240
    %v3084 = vsel %vm317, %v3083, -inf
    %3085 = vmax.xlane.f32.xlu0 %v3084
    %v3086 = vpop.xlane.xlu0 %3085
    %v3087 = vsub.f32 %v3083, %v3086
    %v3088 = vmul.f32 %v3087, 1.442695
    %v3089 = vpow.pop %v3088
    %v3090 = vsel %vm317, %v3089, 0.0
    %3091 = vadd.xlane.f32.xlu0 %v3090
    %v3092 = vpop.xlane.xlu0 %3091
    %v3093 = vrcp.pop %v3092
    %v3094 = vmul.f32 %v3089, %v3093
    %v3095 = vpack.c.bf16 %v3094, %v3094
    %3096 = vrot.lane.b32.xlu0 %v2563, 40
    %v3097 = vpop.permute.xlu0 %3096
    %v3099 = vsel %vm317, %v3095, 0
    %v3102 = vsel %vm383, %v3097, 0
    %3104 = vmatprep.subr.bf16.mxu0 0
    %3105 = vmatpush1.bf16.msra.mxu0 %v3102
    %3106 = vmatprep.subr.bf16.mxu0 0
    %3107 = vmatpush1.bf16.msra.mxu0 0
    %3108 = vmatprep.subr.bf16.mxu0 0
    %3109 = vmatpush1.bf16.msra.mxu0 0
    %3110 = vmatprep.subr.bf16.mxu0 0
    %3111 = vmatpush1.bf16.msra.mxu0 0
    %3112 = vmatprep.subr.bf16.mxu0 0
    %3113 = vmatpush1.bf16.msra.mxu0 0
    %3114 = vmatprep.subr.bf16.mxu0 0
    %3115 = vmatpush1.bf16.msra.mxu0 0
    %3116 = vmatprep.subr.bf16.mxu0 0
    %3117 = vmatpush1.bf16.msra.mxu0 0
    %3118 = vmatprep.subr.bf16.mxu0 0
    %3119 = vmatpush1.bf16.msra.mxu0 0
    %3120 = vmatprep.subr.bf16.mxu0 0
    %3121 = vmatpush1.bf16.msra.mxu0 0
    %3122 = vmatprep.subr.bf16.mxu0 0
    %3123 = vmatpush1.bf16.msra.mxu0 0
    %3124 = vmatprep.subr.bf16.mxu0 0
    %3125 = vmatpush1.bf16.msra.mxu0 0
    %3126 = vmatprep.subr.bf16.mxu0 0
    %3127 = vmatpush1.bf16.msra.mxu0 0
    %3128 = vmatprep.subr.bf16.mxu0 0
    %3129 = vmatpush1.bf16.msra.mxu0 0
    %3130 = vmatprep.subr.bf16.mxu0 0
    %3131 = vmatpush1.bf16.msra.mxu0 0
    %3132 = vmatprep.subr.bf16.mxu0 0
    %3133 = vmatpush1.bf16.msra.mxu0 0
    %3134 = vmatprep.subr.bf16.mxu0 0
    %3135 = vmatpush1.bf16.msra.mxu0 0
    %3136 = vmatprep.mubr.bf16.mxu0 0
    %3137 = vmatmul.mubr.bf16.gmra.mrb[0].mxu0 %v3099
    %v3138 = vpop.f32.mrb[0].mxu0
    %v3139 = vadd.f32 0.0, %v3138
    %v3140 = vpop.f32.mrb[0].mxu0
    %v3141 = vpop.f32.mrb[0].mxu0
    %v3142 = vpop.f32.mrb[0].mxu0
    %3143 = vdwg.mxu0
    %v3144 = vpack.c.bf16 %v3139, %v3139
    %v3146 = vsel %vm317, %v3144, 0
    %3148 = vmatprep.subr.bf16.mxu0 0
    %3149 = vmatpush1.bf16.msra.mxu0 %v2520
    %3150 = vmatprep.subr.bf16.mxu0 0
    %3151 = vmatpush1.bf16.msra.mxu0 0
    %3152 = vmatprep.subr.bf16.mxu0 0
    %3153 = vmatpush1.bf16.msra.mxu0 0
    %3154 = vmatprep.subr.bf16.mxu0 0
    %3155 = vmatpush1.bf16.msra.mxu0 0
    %3156 = vmatprep.subr.bf16.mxu0 0
    %3157 = vmatpush1.bf16.msra.mxu0 0
    %3158 = vmatprep.subr.bf16.mxu0 0
    %3159 = vmatpush1.bf16.msra.mxu0 0
    %3160 = vmatprep.subr.bf16.mxu0 0
    %3161 = vmatpush1.bf16.msra.mxu0 0
    %3162 = vmatprep.subr.bf16.mxu0 0
    %3163 = vmatpush1.bf16.msra.mxu0 0
    %3164 = vmatprep.subr.bf16.mxu0 0
    %3165 = vmatpush1.bf16.msra.mxu0 0
    %3166 = vmatprep.subr.bf16.mxu0 0
    %3167 = vmatpush1.bf16.msra.mxu0 0
    %3168 = vmatprep.subr.bf16.mxu0 0
    %3169 = vmatpush1.bf16.msra.mxu0 0
    %3170 = vmatprep.subr.bf16.mxu0 0
    %3171 = vmatpush1.bf16.msra.mxu0 0
    %3172 = vmatprep.subr.bf16.mxu0 0
    %3173 = vmatpush1.bf16.msra.mxu0 0
    %3174 = vmatprep.subr.bf16.mxu0 0
    %3175 = vmatpush1.bf16.msra.mxu0 0
    %3176 = vmatprep.subr.bf16.mxu0 0
    %3177 = vmatpush1.bf16.msra.mxu0 0
    %3178 = vmatprep.subr.bf16.mxu0 0
    %3179 = vmatpush1.bf16.msra.mxu0 0
    %3180 = vmatprep.mubr.bf16.mxu0 0
    %3181 = vmatmul.mubr.bf16.gmra.mrb[0].mxu0 %v3146
    %v3182 = vpop.f32.mrb[0].mxu0
    %v3183 = vadd.f32 0.0, %v3182
    %v3184 = vpop.f32.mrb[0].mxu0
    %v3185 = vpop.f32.mrb[0].mxu0
    %v3186 = vpop.f32.mrb[0].mxu0
    %3187 = vdwg.mxu0
    %v3188 = vadd.f32 %v3031, %v3183
    %s3189 = scalar_lea.vmem %s10, 1
    %v3190 = vld [vmem:[%s3189] sm:$0x1]
    %v3192 = vlaneseq
    %v3193 = vshrl.u32 %v3192, 7
    %v3194 = vsub.s32 0, %v3193
    %v3195 = vrot.slane %v3190, %v3194
    %v3197 = vadd.f32 %v2562, %v3195
    %v3198 = vadd.f32 %v3188, %v3195
    %v3199 = vadd.f32 %v3197, %v1848
    %v3200 = vadd.f32 %v3198, %v1849
    %s3201 = scalar_lea.vmem %s11, 1
    %v3202 = vld [vmem:[%s3201] sm:$0x1]
    %s3203 = scalar_lea.vmem %s12, 1
    %v3204 = vld [vmem:[%s3203] sm:$0x1]
    %v3205 = vsel %vm185, %v3199, 0.0
    %3206 = vadd.xlane.f32.xlu0 %v3205
    %v3207 = vpop.xlane.xlu0 %3206
    %v3208 = vsel %vm185, %v3200, 0.0
    %3209 = vadd.xlane.f32.xlu0 %v3208
    %v3210 = vpop.xlane.xlu0 %3209
    %v3211 = vmul.f32 %v3207, %v192
    %v3212 = vmul.f32 %v3210, %v192
    %v3213 = vsub.f32 %v3199, %v3211
    %v3214 = vsub.f32 %v3200, %v3212
    %v3215 = vmul.f32 %v3213, %v3213
    %v3216 = vmul.f32 %v3214, %v3214
    %v3217 = vsel %vm185, %v3215, 0.0
    %3218 = vadd.xlane.f32.xlu0 %v3217
    %v3219 = vpop.xlane.xlu0 %3218
    %v3220 = vsel %vm185, %v3216, 0.0
    %3221 = vadd.xlane.f32.xlu0 %v3220
    %v3222 = vpop.xlane.xlu0 %3221
    %v3223 = vmul.f32 %v3219, %v192
    %v3224 = vmul.f32 %v3222, %v192
    %v3225 = vadd.f32 %v3223, 1e-12
    %v3226 = vadd.f32 %v3224, 1e-12
    %v3227 = vrsqrt.pop %v3225
    %v3228 = vrsqrt.pop %v3226
    %v3229 = vmul.f32 %v3213, %v3227
    %v3230 = vmul.f32 %v3214, %v3228
    %v3232 = vlaneseq
    %v3233 = vshrl.u32 %v3232, 7
    %v3234 = vsub.s32 0, %v3233
    %v3235 = vrot.slane %v3202, %v3234
    %v3237 = vmul.f32 %v3229, %v3235
    %v3238 = vmul.f32 %v3230, %v3235
    %v3240 = vlaneseq
    %v3241 = vshrl.u32 %v3240, 7
    %v3242 = vsub.s32 0, %v3241
    %v3243 = vrot.slane %v3204, %v3242
    %v3245 = vadd.f32 %v3237, %v3243
    %v3246 = vadd.f32 %v3238, %v3243
    %s3247 = scalar_lea.vmem %s13, 16
    %v3248 = vld [vmem:[%s3247] sm:$0xf]
    %v3249 = vld [vmem:[%s3247 + $0x4] sm:$0xf]
    %v3250 = vld [vmem:[%s3247 + $0x8] sm:$0xf]
    %v3251 = vld [vmem:[%s3247 + $0xc] sm:$0xf]
    %s3252 = scalar_lea.vmem %s14, 1
    %v3253 = vld [vmem:[%s3252] sm:$0x1]
    %v3254 = vpack.c.bf16 %v3246, %v3245
    %v3256 = vlaneseq
    %v3257 = vshrl.u32 %v3256, 7
    %v3258 = vsub.s32 0, %v3257
    %v3259 = vrot.slane %v3253, %v3258
    %v3265 = vunpack.c.l.b16 %v3248
    %v3266 = vunpack.c.l.b16 %v3249
    %v3267 = vunpack.c.l.b16 %v3250
    %v3268 = vunpack.c.l.b16 %v3251
    %v3269 = vpack.c.b16 %v3266, %v3265
    %v3270 = vpack.c.b16 %v3268, %v3267
    %v3274 = vsel %vm185, %v3254, 0
    %3276 = vmatprep.subr.bf16.mxu0 0
    %3277 = vmatpush1.bf16.msra.mxu0 %v3269
    %3278 = vmatprep.subr.bf16.mxu0 0
    %3279 = vmatpush1.bf16.msra.mxu0 %v3270
    %3280 = vmatprep.subr.bf16.mxu0 0
    %3281 = vmatpush1.bf16.msra.mxu0 0
    %3282 = vmatprep.subr.bf16.mxu0 0
    %3283 = vmatpush1.bf16.msra.mxu0 0
    %3284 = vmatprep.subr.bf16.mxu0 0
    %3285 = vmatpush1.bf16.msra.mxu0 0
    %3286 = vmatprep.subr.bf16.mxu0 0
    %3287 = vmatpush1.bf16.msra.mxu0 0
    %3288 = vmatprep.subr.bf16.mxu0 0
    %3289 = vmatpush1.bf16.msra.mxu0 0
    %3290 = vmatprep.subr.bf16.mxu0 0
    %3291 = vmatpush1.bf16.msra.mxu0 0
    %3292 = vmatprep.subr.bf16.mxu0 0
    %3293 = vmatpush1.bf16.msra.mxu0 0
    %3294 = vmatprep.subr.bf16.mxu0 0
    %3295 = vmatpush1.bf16.msra.mxu0 0
    %3296 = vmatprep.subr.bf16.mxu0 0
    %3297 = vmatpush1.bf16.msra.mxu0 0
    %3298 = vmatprep.subr.bf16.mxu0 0
    %3299 = vmatpush1.bf16.msra.mxu0 0
    %3300 = vmatprep.subr.bf16.mxu0 0
    %3301 = vmatpush1.bf16.msra.mxu0 0
    %3302 = vmatprep.subr.bf16.mxu0 0
    %3303 = vmatpush1.bf16.msra.mxu0 0
    %3304 = vmatprep.subr.bf16.mxu0 0
    %3305 = vmatpush1.bf16.msra.mxu0 0
    %3306 = vmatprep.subr.bf16.mxu0 0
    %3307 = vmatpush1.bf16.msra.mxu0 0
    %3308 = vmatprep.mubr.bf16.mxu0 0
    %3309 = vmatmul.mubr.bf16.gmra.mrb[0].mxu0 %v3274
    %v3310 = vpop.f32.mrb[0].mxu0
    %v3311 = vadd.f32 %v3259, %v3310
    %v3312 = vpop.f32.mrb[0].mxu0
    %v3313 = vpop.f32.mrb[0].mxu0
    %v3314 = vadd.f32 %v3259, %v3313
    %v3315 = vpop.f32.mrb[0].mxu0
    %3316 = vdwg.mxu0
    %v3317 = vmul.f32 %v3311, 0.5
    %v3318 = vmul.f32 %v3314, 0.5
    %v3319 = vmul.f32 %v3311, 0.044715
    %v3320 = vmul.f32 %v3314, 0.044715
    %v3321 = vmul.f32 %v3319, %v3311
    %v3322 = vmul.f32 %v3320, %v3314
    %v3323 = vmul.f32 %v3321, %v3311
    %v3324 = vmul.f32 %v3322, %v3314
    %v3325 = vadd.f32 %v3311, %v3323
    %v3326 = vadd.f32 %v3314, %v3324
    %v3327 = vmul.f32 %v3325, 0.7978846
    %v3328 = vmul.f32 %v3326, 0.7978846
    %v3329 = vtanh.pop %v3327
    %v3330 = vtanh.pop %v3328
    %v3331 = vadd.f32 %v3329, 1.0
    %v3332 = vadd.f32 %v3330, 1.0
    %v3333 = vmul.f32 %v3317, %v3331
    %v3334 = vmul.f32 %v3318, %v3332
    %s3335 = scalar_lea.vmem %s15, 32
    %v3336 = vld [vmem:[%s3335] sm:$0xf]
    %v3337 = vld [vmem:[%s3335 + $0x4] sm:$0xf]
    %v3338 = vld [vmem:[%s3335 + $0x8] sm:$0xf]
    %v3339 = vld [vmem:[%s3335 + $0xc] sm:$0xf]
    %v3340 = vld [vmem:[%s3335 + $0x10] sm:$0xf]
    %v3341 = vld [vmem:[%s3335 + $0x14] sm:$0xf]
    %v3342 = vld [vmem:[%s3335 + $0x18] sm:$0xf]
    %v3343 = vld [vmem:[%s3335 + $0x1c] sm:$0xf]
    %s3344 = scalar_lea.vmem %s16, 1
    %v3345 = vld [vmem:[%s3344] sm:$0x1]
    %v3346 = vpack.c.bf16 %v3334, %v3333
    %v3348 = vlaneseq
    %v3349 = vshrl.u32 %v3348, 7
    %v3350 = vsub.s32 0, %v3349
    %v3351 = vrot.slane %v3345, %v3350
    %v3361 = vunpack.c.l.b16 %v3336
    %v3362 = vunpack.c.l.b16 %v3337
    %v3363 = vunpack.c.l.b16 %v3338
    %v3364 = vunpack.c.l.b16 %v3339
    %v3365 = vunpack.c.l.b16 %v3340
    %v3366 = vunpack.c.l.b16 %v3341
    %v3367 = vunpack.c.l.b16 %v3342
    %v3368 = vunpack.c.l.b16 %v3343
    %v3369 = vpack.c.b16 %v3362, %v3361
    %v3370 = vpack.c.b16 %v3364, %v3363
    %v3371 = vpack.c.b16 %v3366, %v3365
    %v3372 = vpack.c.b16 %v3368, %v3367
    %v3378 = vsel %vm101, %v3346, 0
    %3380 = vmatprep.subr.bf16.mxu0 0
    %3381 = vmatpush1.bf16.msra.mxu0 %v3369
    %3382 = vmatprep.subr.bf16.mxu0 0
    %3383 = vmatpush1.bf16.msra.mxu0 %v3370
    %3384 = vmatprep.subr.bf16.mxu0 0
    %3385 = vmatpush1.bf16.msra.mxu0 %v3371
    %3386 = vmatprep.subr.bf16.mxu0 0
    %3387 = vmatpush1.bf16.msra.mxu0 %v3372
    %3388 = vmatprep.subr.bf16.mxu0 0
    %3389 = vmatpush1.bf16.msra.mxu0 0
    %3390 = vmatprep.subr.bf16.mxu0 0
    %3391 = vmatpush1.bf16.msra.mxu0 0
    %3392 = vmatprep.subr.bf16.mxu0 0
    %3393 = vmatpush1.bf16.msra.mxu0 0
    %3394 = vmatprep.subr.bf16.mxu0 0
    %3395 = vmatpush1.bf16.msra.mxu0 0
    %3396 = vmatprep.subr.bf16.mxu0 0
    %3397 = vmatpush1.bf16.msra.mxu0 0
    %3398 = vmatprep.subr.bf16.mxu0 0
    %3399 = vmatpush1.bf16.msra.mxu0 0
    %3400 = vmatprep.subr.bf16.mxu0 0
    %3401 = vmatpush1.bf16.msra.mxu0 0
    %3402 = vmatprep.subr.bf16.mxu0 0
    %3403 = vmatpush1.bf16.msra.mxu0 0
    %3404 = vmatprep.subr.bf16.mxu0 0
    %3405 = vmatpush1.bf16.msra.mxu0 0
    %3406 = vmatprep.subr.bf16.mxu0 0
    %3407 = vmatpush1.bf16.msra.mxu0 0
    %3408 = vmatprep.subr.bf16.mxu0 0
    %3409 = vmatpush1.bf16.msra.mxu0 0
    %3410 = vmatprep.subr.bf16.mxu0 0
    %3411 = vmatpush1.bf16.msra.mxu0 0
    %3412 = vmatprep.mubr.bf16.mxu0 0
    %3413 = vmatmul.mubr.bf16.gmra.mrb[0].mxu0 %v3378
    %v3414 = vpop.f32.mrb[0].mxu0
    %v3415 = vadd.f32 %v3351, %v3414
    %v3416 = vpop.f32.mrb[0].mxu0
    %v3417 = vpop.f32.mrb[0].mxu0
    %v3418 = vadd.f32 %v3351, %v3417
    %v3419 = vpop.f32.mrb[0].mxu0
    %3420 = vdwg.mxu0
    %v3421 = vadd.f32 %v3415, %v3245
    %v3422 = vadd.f32 %v3418, %v3246
    %s3423 = scalar_lea.vmem %s17, 1
    %v3424 = vld [vmem:[%s3423] sm:$0x1]
    %s3425 = scalar_lea.vmem %s18, 1
    %v3426 = vld [vmem:[%s3425] sm:$0x1]
    %v3427 = vsel %vm185, %v3421, 0.0
    %3428 = vadd.xlane.f32.xlu0 %v3427
    %v3429 = vpop.xlane.xlu0 %3428
    %v3430 = vsel %vm185, %v3422, 0.0
    %3431 = vadd.xlane.f32.xlu0 %v3430
    %v3432 = vpop.xlane.xlu0 %3431
    %v3433 = vmul.f32 %v3429, %v192
    %v3434 = vmul.f32 %v3432, %v192
    %v3435 = vsub.f32 %v3421, %v3433
    %v3436 = vsub.f32 %v3422, %v3434
    %v3437 = vmul.f32 %v3435, %v3435
    %v3438 = vmul.f32 %v3436, %v3436
    %v3439 = vsel %vm185, %v3437, 0.0
    %3440 = vadd.xlane.f32.xlu0 %v3439
    %v3441 = vpop.xlane.xlu0 %3440
    %v3442 = vsel %vm185, %v3438, 0.0
    %3443 = vadd.xlane.f32.xlu0 %v3442
    %v3444 = vpop.xlane.xlu0 %3443
    %v3445 = vmul.f32 %v3441, %v192
    %v3446 = vmul.f32 %v3444, %v192
    %v3447 = vadd.f32 %v3445, 1e-12
    %v3448 = vadd.f32 %v3446, 1e-12
    %v3449 = vrsqrt.pop %v3447
    %v3450 = vrsqrt.pop %v3448
    %v3451 = vmul.f32 %v3435, %v3449
    %v3452 = vmul.f32 %v3436, %v3450
    %v3454 = vlaneseq
    %v3455 = vshrl.u32 %v3454, 7
    %v3456 = vsub.s32 0, %v3455
    %v3457 = vrot.slane %v3424, %v3456
    %v3459 = vmul.f32 %v3451, %v3457
    %v3460 = vmul.f32 %v3452, %v3457
    %v3462 = vlaneseq
    %v3463 = vshrl.u32 %v3462, 7
    %v3464 = vsub.s32 0, %v3463
    %v3465 = vrot.slane %v3426, %v3464
    %v3467 = vadd.f32 %v3459, %v3465
    %v3468 = vadd.f32 %v3460, %v3465
    %v3469 = vld [vmem:[%s19] sm:$0xf]
    %v3470 = vld [vmem:[%s19 + $0x4] sm:$0xf]
    %v3471 = vld [vmem:[%s19 + $0x8] sm:$0xf]
    %v3472 = vld [vmem:[%s19 + $0xc] sm:$0xf]
    %v3473 = vld [vmem:[%s20] sm:$0x1]
    %v3474 = vpack.c.bf16 %v3468, %v3467
    %v3476 = vlaneseq
    %v3477 = vshrl.u32 %v3476, 7
    %v3478 = vsub.s32 0, %v3477
    %v3479 = vrot.slane %v3473, %v3478
    %v3485 = vunpack.c.l.b16 %v3469
    %v3486 = vunpack.c.l.b16 %v3470
    %v3487 = vunpack.c.l.b16 %v3471
    %v3488 = vunpack.c.l.b16 %v3472
    %v3489 = vpack.c.b16 %v3486, %v3485
    %v3490 = vpack.c.b16 %v3488, %v3487
    %v3494 = vsel %vm185, %v3474, 0
    %3496 = vmatprep.subr.bf16.mxu0 0
    %3497 = vmatpush1.bf16.msra.mxu0 %v3489
    %3498 = vmatprep.subr.bf16.mxu0 0
    %3499 = vmatpush1.bf16.msra.mxu0 %v3490
    %3500 = vmatprep.subr.bf16.mxu0 0
    %3501 = vmatpush1.bf16.msra.mxu0 0
    %3502 = vmatprep.subr.bf16.mxu0 0
    %3503 = vmatpush1.bf16.msra.mxu0 0
    %3504 = vmatprep.subr.bf16.mxu0 0
    %3505 = vmatpush1.bf16.msra.mxu0 0
    %3506 = vmatprep.subr.bf16.mxu0 0
    %3507 = vmatpush1.bf16.msra.mxu0 0
    %3508 = vmatprep.subr.bf16.mxu0 0
    %3509 = vmatpush1.bf16.msra.mxu0 0
    %3510 = vmatprep.subr.bf16.mxu0 0
    %3511 = vmatpush1.bf16.msra.mxu0 0
    %3512 = vmatprep.subr.bf16.mxu0 0
    %3513 = vmatpush1.bf16.msra.mxu0 0
    %3514 = vmatprep.subr.bf16.mxu0 0
    %3515 = vmatpush1.bf16.msra.mxu0 0
    %3516 = vmatprep.subr.bf16.mxu0 0
    %3517 = vmatpush1.bf16.msra.mxu0 0
    %3518 = vmatprep.subr.bf16.mxu0 0
    %3519 = vmatpush1.bf16.msra.mxu0 0
    %3520 = vmatprep.subr.bf16.mxu0 0
    %3521 = vmatpush1.bf16.msra.mxu0 0
    %3522 = vmatprep.subr.bf16.mxu0 0
    %3523 = vmatpush1.bf16.msra.mxu0 0
    %3524 = vmatprep.subr.bf16.mxu0 0
    %3525 = vmatpush1.bf16.msra.mxu0 0
    %3526 = vmatprep.subr.bf16.mxu0 0
    %3527 = vmatpush1.bf16.msra.mxu0 0
    %3528 = vmatprep.mubr.bf16.mxu0 0
    %3529 = vmatmul.mubr.bf16.gmra.mrb[0].mxu0 %v3494
    %v3530 = vpop.f32.mrb[0].mxu0
    %v3531 = vadd.f32 %v3479, %v3530
    %v3532 = vpop.f32.mrb[0].mxu0
    %v3533 = vpop.f32.mrb[0].mxu0
    %v3534 = vadd.f32 %v3479, %v3533
    %v3535 = vpop.f32.mrb[0].mxu0
    %3536 = vdwg.mxu0
    %3537 = vst [vmem:[#allocation2] sm:$0xff] %v3531
    %3538 = vst [vmem:[#allocation2 + $0x8] sm:$0xff] %v3534
    // Predicated region
    $region86: #{tpu_custom_call.1} parent=1 // pred_check
      _
    $region87: #{tpu_custom_call.1} parent=1 // pred_check_branch
      %3540 = sbr.rel (0) target = $region89
    $region88: #{tpu_custom_call.1} parent=1 // pred_region
      %s3542 = ssub.s32 256, 256
      %3543 = vsyncadd [#allocation3], %s3542
      %s3544 = sshll.u32 [#allocation2], 4
      %s3545 = int_to_ptr.vmem [resolvable:$true] %s3544
      %3550 = dma.vmem_to_hbm [thread:$0]  %s3545, 256, %s21, [#allocation3], 128, 128, 8
    $region89: #{tpu_custom_call.1} parent=1 // pred_fallthru
      _
    // Predicated region
    $region90: #{tpu_custom_call.1} parent=1 // pred_check
      _
    $region91: #{tpu_custom_call.1} parent=1 // pred_check_branch
      %3552 = sbr.rel (0) target = $region93
    $region92: #{tpu_custom_call.1} parent=1 // pred_region
      %3553 = dma.done [#allocation3], 256
    $region93: #{tpu_custom_call.1} parent=1 // pred_fallthru
      _
    %3554 = vsyncpa [#allocation3], 1

</llo_original>
